<compile_context>
chip_gen: v6e
topology: v6e:2x2x1
jax: 0.10.0
libtpu: 0.0.40
codegen_flags: <defaults>
</compile_context>

<pallas_src>
import jax
import jax.numpy as jnp
from jax.experimental import pallas as pl
from jax.experimental.pallas import tpu as pltpu


# -----------------------------------------------------------------------------
# Model constants
# -----------------------------------------------------------------------------
EMBED_DIM = 32          # transformer.embed_dim
NUM_HEADS = 4
HEAD_DIM = EMBED_DIM // NUM_HEADS
MLP_HIDDEN = 64
PATCH = 4
CIN = 3
PATCH_DIM = CIN * PATCH * PATCH        # 48
FEAT_SZ_S = 8                          # box_head.feat_sz
FEAT_SZ_T = 4                          # box_head.feat_sz_t
FEAT_LEN_S = FEAT_SZ_S ** 2            # 64
FEAT_LEN_T = FEAT_SZ_T ** 2            # 16
N_TOK = FEAT_LEN_T + FEAT_LEN_S        # 80
HEAD_HID = EMBED_DIM // 2              # 16 (per head-branch hidden width)
HEAD_OUT = 5                           # [score(1) | size(2) | offset(2)]
ATTN_SCALE = 1.0 / (HEAD_DIM ** 0.5)
LN_EPS = 1e-6


# -----------------------------------------------------------------------------
# Fused Pallas kernel: backbone block + CENTER head, one batch element per step
# -----------------------------------------------------------------------------
def _dgtrack_fused_kernel(
        patch_ref, pw_ref, pb_ref, pos_ref,
        ln1g_ref, ln1b_ref, wqkv_ref, bqkv_ref, wproj_ref, bproj_ref,
        ln2g_ref, ln2b_ref, wmlp1_ref, bmlp1_ref, wmlp2_ref, bmlp2_ref,
        hw1_ref, hb1_ref, hw2_ref, hb2_ref,
        tok_out_ref, head_out_ref):
    C = EMBED_DIM

    def _ln(v, g, b):
        mu = jnp.mean(v, axis=-1, keepdims=True)
        var = jnp.mean((v - mu) ** 2, axis=-1, keepdims=True)
        return (v - mu) * jax.lax.rsqrt(var + LN_EPS) * g + b

    # ---- patch embed (template & search tokens together) + positional emb ----
    tok = (jnp.dot(patch_ref[0], pw_ref[...], preferred_element_type=jnp.float32)
           + pb_ref[...] + pos_ref[...])                           # (80, 32)

    # ---- attention ----
    h = _ln(tok, ln1g_ref[...], ln1b_ref[...])
    qkv = (jnp.dot(h, wqkv_ref[...], preferred_element_type=jnp.float32)
           + bqkv_ref[...])                                        # (80, 96)
    wproj = wproj_ref[...]                                         # (32, 32)
    attn_acc = jnp.zeros_like(tok)
    for hh in range(NUM_HEADS):
        lo, hi = hh * HEAD_DIM, (hh + 1) * HEAD_DIM
        qh = qkv[:, lo:hi]                                         # (80, 8)
        kh = qkv[:, C + lo:C + hi]
        vh = qkv[:, 2 * C + lo:2 * C + hi]
        s = jnp.dot(qh, kh.T, preferred_element_type=jnp.float32) * ATTN_SCALE
        s = s - jnp.max(s, axis=-1, keepdims=True)
        p = jnp.exp(s)
        p = p * pl.reciprocal(jnp.sum(p, axis=-1, keepdims=True), approx=True)
        o_h = jnp.dot(p, vh, preferred_element_type=jnp.float32)   # (80, 8)
        # per-head slice of the output projection == concat(heads) @ Wproj
        attn_acc = attn_acc + jnp.dot(o_h, wproj[lo:hi, :],
                                      preferred_element_type=jnp.float32)
    tok = tok + attn_acc + bproj_ref[...]

    # ---- MLP ----
    h2 = _ln(tok, ln2g_ref[...], ln2b_ref[...])
    m = jnp.dot(h2, wmlp1_ref[...], preferred_element_type=jnp.float32) + bmlp1_ref[...]
    # TODO(synk): PyTorch nn.GELU default is the exact erf form; tanh approx used here.
    m = jax.nn.gelu(m)
    m = jnp.dot(m, wmlp2_ref[...], preferred_element_type=jnp.float32) + bmlp2_ref[...]
    tok = tok + m
    tok_out_ref[0] = tok                                           # backbone_feat

    # ---- CENTER head on the search tokens (last 64) ----
    xs = tok[FEAT_LEN_T:, :]                                       # (64, 32)
    hid = jnp.dot(xs, hw1_ref[...], preferred_element_type=jnp.float32) + hb1_ref[...]
    hid = jnp.maximum(hid, 0.0)
    y = jnp.dot(hid, hw2_ref[...], preferred_element_type=jnp.float32) + hb2_ref[...]
    # sigmoid on score (col 0) and size (cols 1-2); offset (cols 3-4) stays raw
    col = jax.lax.broadcasted_iota(jnp.int32, y.shape, 1)
    y = jnp.where(col < 3, jax.nn.sigmoid(y), y)
    head_out_ref[0] = y                                            # (64, 5)


def _run_fused(patches, prep):
    """patches: (B, 80, 48) flattened conv patches; prep: tuple of 2-D params."""
    B = patches.shape[0]
    C = EMBED_DIM

    in_specs = [pl.BlockSpec((1, N_TOK, PATCH_DIM), lambda b: (b, 0, 0))]
    in_specs += [pl.BlockSpec(a.shape, lambda b: (0, 0)) for a in prep]

    out_shape = (jax.ShapeDtypeStruct((B, N_TOK, C), jnp.float32),
                 jax.ShapeDtypeStruct((B, FEAT_LEN_S, HEAD_OUT), jnp.float32))
    out_specs = (pl.BlockSpec((1, N_TOK, C), lambda b: (b, 0, 0)),
                 pl.BlockSpec((1, FEAT_LEN_S, HEAD_OUT), lambda b: (b, 0, 0)))

    return pl.pallas_call(
        _dgtrack_fused_kernel,
        grid=(B,),
        out_shape=out_shape,
        in_specs=in_specs,
        out_specs=out_specs,
        compiler_params=pltpu.CompilerParams(
            dimension_semantics=("parallel",)),   # v7x: batch split across 2 TCs
    )(patches, *prep)


# -----------------------------------------------------------------------------
# Plain-JAX glue
# -----------------------------------------------------------------------------
def flatten_patches(img):
    """NCHW image -> (B, num_patches, Cin*P*P); stride-4 4x4 conv == matmul."""
    B, Cin, Hi, Wi = img.shape
    ph, pw = Hi // PATCH, Wi // PATCH
    x = img.reshape(B, Cin, ph, PATCH, pw, PATCH)
    return x.transpose(0, 2, 4, 1, 3, 5).reshape(B, ph * pw, Cin * PATCH * PATCH)


def _prepare_params(p):
    """Pack params into the 2-D layouts the fused kernel expects."""
    C = EMBED_DIM
    pos = jnp.concatenate([p['pos_z'][0], p['pos_x'][0]], axis=0)            # (80, C)
    hw1 = jnp.concatenate([p['score_w1'], p['size_w1'], p['offset_w1']], axis=1)  # (C, 48)
    hb1 = jnp.concatenate([p['score_b1'], p['size_b1'], p['offset_b1']])          # (48,)
    hw2 = jnp.zeros((3 * HEAD_HID, HEAD_OUT), jnp.float32)                   # block-diag
    hw2 = hw2.at[0:HEAD_HID, 0:1].set(p['score_w2'])
    hw2 = hw2.at[HEAD_HID:2 * HEAD_HID, 1:3].set(p['size_w2'])
    hw2 = hw2.at[2 * HEAD_HID:, 3:5].set(p['offset_w2'])
    hb2 = jnp.concatenate([p['score_b2'], p['size_b2'], p['offset_b2']])          # (5,)
    return (
        p['patch_w'], p['patch_b'].reshape(1, C), pos,
        p['ln1_g'].reshape(1, C), p['ln1_b'].reshape(1, C),
        p['w_qkv'], p['b_qkv'].reshape(1, 3 * C),
        p['w_proj'], p['b_proj'].reshape(1, C),
        p['ln2_g'].reshape(1, C), p['ln2_b'].reshape(1, C),
        p['w_mlp1'], p['b_mlp1'].reshape(1, MLP_HIDDEN),
        p['w_mlp2'], p['b_mlp2'].reshape(1, C),
        hw1, hb1.reshape(1, 3 * HEAD_HID),
        hw2, hb2.reshape(1, HEAD_OUT),
    )


def cal_bbox(score_tok, size_tok, offset_tok, feat_sz):
    """score (B,HW,1), size/offset (B,HW,2) -> bbox (B,4) = (cx,cy,w,h)."""
    idx = jnp.argmax(score_tok[:, :, 0], axis=1)
    idx_y = (idx // feat_sz).astype(jnp.float32)
    idx_x = (idx % feat_sz).astype(jnp.float32)
    size = jnp.take_along_axis(size_tok, idx[:, None, None], axis=1)[:, 0, :]
    offset = jnp.take_along_axis(offset_tok, idx[:, None, None], axis=1)[:, 0, :]
    cx = (idx_x + offset[:, 0]) / feat_sz
    cy = (idx_y + offset[:, 1]) / feat_sz
    return jnp.stack([cx, cy, size[:, 0], size[:, 1]], axis=1)


@jax.jit
def dgtrack_forward(p, template, search, template_anno, search_anno):
    """Eval-mode DGTrack.forward (head_type='CENTER')."""
    del template_anno, search_anno  # only used on the training path
    patches = jnp.concatenate(
        [flatten_patches(template), flatten_patches(search)], axis=1)   # (B, 80, 48)
    prep = _prepare_params(p)
    tok, head = _run_fused(patches, prep)

    score = head[:, :, 0:1]
    size = head[:, :, 1:3]
    offset = head[:, :, 3:5]
    bbox = cal_bbox(score, size, offset, FEAT_SZ_S)

    B = tok.shape[0]
    score_map = score.transpose(0, 2, 1).reshape(B, 1, FEAT_SZ_S, FEAT_SZ_S)
    size_map = size.transpose(0, 2, 1).reshape(B, 2, FEAT_SZ_S, FEAT_SZ_S)
    offset_map = offset.transpose(0, 2, 1).reshape(B, 2, FEAT_SZ_S, FEAT_SZ_S)

    out = {
        'pred_boxes': bbox.reshape(B, 1, 4),
        'score_map': score_map,
        'size_map': size_map,
        'offset_map': offset_map,
        'mine_loss': jnp.zeros((0,), jnp.float32),       # eval path
        'backbone_feat': tok,
        'activeness_loss': jnp.zeros((0,), jnp.float32),  # eval path
    }
    return out


# -----------------------------------------------------------------------------
# Deterministic parameter init
# -----------------------------------------------------------------------------
def init_params(key):
    keys = jax.random.split(key, 16)

    def w(k, shape, scale=0.02):
        return scale * jax.random.normal(k, shape, jnp.float32)

    p = {
        'patch_w': w(keys[0], (PATCH_DIM, EMBED_DIM)),
        'patch_b': jnp.zeros((EMBED_DIM,), jnp.float32),
        'pos_z': w(keys[1], (1, FEAT_LEN_T, EMBED_DIM)),
        'pos_x': w(keys[2], (1, FEAT_LEN_S, EMBED_DIM)),
        'ln1_g': jnp.ones((EMBED_DIM,), jnp.float32),
        'ln1_b': jnp.zeros((EMBED_DIM,), jnp.float32),
        'w_qkv': w(keys[3], (EMBED_DIM, 3 * EMBED_DIM)),
        'b_qkv': jnp.zeros((3 * EMBED_DIM,), jnp.float32),
        'w_proj': w(keys[4], (EMBED_DIM, EMBED_DIM)),
        'b_proj': jnp.zeros((EMBED_DIM,), jnp.float32),
        'ln2_g': jnp.ones((EMBED_DIM,), jnp.float32),
        'ln2_b': jnp.zeros((EMBED_DIM,), jnp.float32),
        'w_mlp1': w(keys[5], (EMBED_DIM, MLP_HIDDEN)),
        'b_mlp1': jnp.zeros((MLP_HIDDEN,), jnp.float32),
        'w_mlp2': w(keys[6], (MLP_HIDDEN, EMBED_DIM)),
        'b_mlp2': jnp.zeros((EMBED_DIM,), jnp.float32),
    }
    for name, cout, ki in (('score', 1, 7), ('size', 2, 9), ('offset', 2, 11)):
        p[f'{name}_w1'] = w(keys[ki], (EMBED_DIM, HEAD_HID))
        p[f'{name}_b1'] = jnp.zeros((HEAD_HID,), jnp.float32)
        p[f'{name}_w2'] = w(keys[ki + 1], (HEAD_HID, cout))
        p[f'{name}_b2'] = jnp.zeros((cout,), jnp.float32)
    return p


# -----------------------------------------------------------------------------
# Main
# -----------------------------------------------------------------------------
if __name__ == "__main__":
    key = jax.random.PRNGKey(0)
    k_p, k_t, k_s, k_ta, k_sa = jax.random.split(key, 5)

    params = init_params(k_p)

    B = 2
    template = jax.random.normal(k_t, (B, CIN, 16, 16), jnp.float32)   # NCHW
    search = jax.random.normal(k_s, (B, CIN, 32, 32), jnp.float32)     # NCHW
    template_anno = jax.random.uniform(k_ta, (B, 4), jnp.float32)
    search_anno = jax.random.uniform(k_sa, (B, 4), jnp.float32)

    out = dgtrack_forward(params, template, search, template_anno, search_anno)
    jax.block_until_ready(out['pred_boxes'])
    jax.block_until_ready(out['score_map'])
    jax.block_until_ready(out['backbone_feat'])

    assert out['pred_boxes'].shape == (B, 1, 4)
    assert out['score_map'].shape == (B, 1, FEAT_SZ_S, FEAT_SZ_S)
    assert out['size_map'].shape == (B, 2, FEAT_SZ_S, FEAT_SZ_S)
    assert out['offset_map'].shape == (B, 2, FEAT_SZ_S, FEAT_SZ_S)
    assert out['backbone_feat'].shape == (B, N_TOK, EMBED_DIM)
    assert out['activeness_loss'].shape == (0,)
    assert out['mine_loss'].shape == (0,)
    assert bool(jnp.all(jnp.isfinite(out['pred_boxes'])))

    print("KERNEL_OK")
</pallas_src>

<mosaic_0001>
module attributes {stable_mosaic.version = 11 : i64} {
  func.func @_dgtrack_fused_kernel(%arg0: i32, %arg1: memref<1x80x48xf32, #tpu.memory_space<vmem>>, %arg2: memref<48x32xf32, #tpu.memory_space<vmem>>, %arg3: memref<1x32xf32, #tpu.memory_space<vmem>>, %arg4: memref<80x32xf32, #tpu.memory_space<vmem>>, %arg5: memref<1x32xf32, #tpu.memory_space<vmem>>, %arg6: memref<1x32xf32, #tpu.memory_space<vmem>>, %arg7: memref<32x96xf32, #tpu.memory_space<vmem>>, %arg8: memref<1x96xf32, #tpu.memory_space<vmem>>, %arg9: memref<32x32xf32, #tpu.memory_space<vmem>>, %arg10: memref<1x32xf32, #tpu.memory_space<vmem>>, %arg11: memref<1x32xf32, #tpu.memory_space<vmem>>, %arg12: memref<1x32xf32, #tpu.memory_space<vmem>>, %arg13: memref<32x64xf32, #tpu.memory_space<vmem>>, %arg14: memref<1x64xf32, #tpu.memory_space<vmem>>, %arg15: memref<64x32xf32, #tpu.memory_space<vmem>>, %arg16: memref<1x32xf32, #tpu.memory_space<vmem>>, %arg17: memref<32x48xf32, #tpu.memory_space<vmem>>, %arg18: memref<1x48xf32, #tpu.memory_space<vmem>>, %arg19: memref<48x5xf32, #tpu.memory_space<vmem>>, %arg20: memref<1x5xf32, #tpu.memory_space<vmem>>, %arg21: memref<1x80x32xf32, #tpu.memory_space<vmem>>, %arg22: memref<1x64x5xf32, #tpu.memory_space<vmem>>) attributes {dimension_semantics = [#tpu.dimension_semantics<parallel>], iteration_bounds = array<i64: 2>, scalar_prefetch = 0 : i64, scratch_operands = 0 : i64, tpu.core_type = #tpu.core_type<tc>, window_params = [{transform_indices = @transform_0, window_bounds = array<i64: 1, 80, 48>}, {pipeline_mode = #tpu.pipeline_mode<synchronous>, transform_indices = @transform_1, window_bounds = array<i64: 48, 32>}, {pipeline_mode = #tpu.pipeline_mode<synchronous>, transform_indices = @transform_2, window_bounds = array<i64: 1, 32>}, {pipeline_mode = #tpu.pipeline_mode<synchronous>, transform_indices = @transform_3, window_bounds = array<i64: 80, 32>}, {pipeline_mode = #tpu.pipeline_mode<synchronous>, transform_indices = @transform_4, window_bounds = array<i64: 1, 32>}, {pipeline_mode = #tpu.pipeline_mode<synchronous>, transform_indices = @transform_5, window_bounds = array<i64: 1, 32>}, {pipeline_mode = #tpu.pipeline_mode<synchronous>, transform_indices = @transform_6, window_bounds = array<i64: 32, 96>}, {pipeline_mode = #tpu.pipeline_mode<synchronous>, transform_indices = @transform_7, window_bounds = array<i64: 1, 96>}, {pipeline_mode = #tpu.pipeline_mode<synchronous>, transform_indices = @transform_8, window_bounds = array<i64: 32, 32>}, {pipeline_mode = #tpu.pipeline_mode<synchronous>, transform_indices = @transform_9, window_bounds = array<i64: 1, 32>}, {pipeline_mode = #tpu.pipeline_mode<synchronous>, transform_indices = @transform_10, window_bounds = array<i64: 1, 32>}, {pipeline_mode = #tpu.pipeline_mode<synchronous>, transform_indices = @transform_11, window_bounds = array<i64: 1, 32>}, {pipeline_mode = #tpu.pipeline_mode<synchronous>, transform_indices = @transform_12, window_bounds = array<i64: 32, 64>}, {pipeline_mode = #tpu.pipeline_mode<synchronous>, transform_indices = @transform_13, window_bounds = array<i64: 1, 64>}, {pipeline_mode = #tpu.pipeline_mode<synchronous>, transform_indices = @transform_14, window_bounds = array<i64: 64, 32>}, {pipeline_mode = #tpu.pipeline_mode<synchronous>, transform_indices = @transform_15, window_bounds = array<i64: 1, 32>}, {pipeline_mode = #tpu.pipeline_mode<synchronous>, transform_indices = @transform_16, window_bounds = array<i64: 32, 48>}, {pipeline_mode = #tpu.pipeline_mode<synchronous>, transform_indices = @transform_17, window_bounds = array<i64: 1, 48>}, {pipeline_mode = #tpu.pipeline_mode<synchronous>, transform_indices = @transform_18, window_bounds = array<i64: 48, 5>}, {pipeline_mode = #tpu.pipeline_mode<synchronous>, transform_indices = @transform_19, window_bounds = array<i64: 1, 5>}, {transform_indices = @transform_20, window_bounds = array<i64: 1, 80, 32>}, {transform_indices = @transform_21, window_bounds = array<i64: 1, 64, 5>}]} {
    %c0 = arith.constant 0 : index
    %c0_0 = arith.constant 0 : index
    %c0_1 = arith.constant 0 : index
    %0 = vector.load %arg1[%c0, %c0_0, %c0_1] : memref<1x80x48xf32, #tpu.memory_space<vmem>>, vector<1x80x48xf32>
    %1 = vector.shape_cast %0 : vector<1x80x48xf32> to vector<80x48xf32>
    %c0_2 = arith.constant 0 : index
    %c0_3 = arith.constant 0 : index
    %2 = vector.load %arg2[%c0_2, %c0_3] : memref<48x32xf32, #tpu.memory_space<vmem>>, vector<48x32xf32>
    %cst = arith.constant dense<0.000000e+00> : vector<80x32xf32>
    %3 = tpu.matmul %1, %2, %cst {dimension_numbers = #tpu.dot_dimension_numbers<[1], [0], [0], [1], [0, 0, 1, 1], [], []>} : vector<80x48xf32>, vector<48x32xf32>, vector<80x32xf32> -> vector<80x32xf32>
    %c0_4 = arith.constant 0 : index
    %c0_5 = arith.constant 0 : index
    %4 = vector.load %arg3[%c0_4, %c0_5] : memref<1x32xf32, #tpu.memory_space<vmem>>, vector<1x32xf32>
    %5 = vector.broadcast %4 : vector<1x32xf32> to vector<80x32xf32>
    %6 = arith.addf %3, %5 : vector<80x32xf32>
    %c0_6 = arith.constant 0 : index
    %c0_7 = arith.constant 0 : index
    %7 = vector.load %arg4[%c0_6, %c0_7] : memref<80x32xf32, #tpu.memory_space<vmem>>, vector<80x32xf32>
    %8 = arith.addf %6, %7 : vector<80x32xf32>
    %c0_8 = arith.constant 0 : index
    %c0_9 = arith.constant 0 : index
    %9 = vector.load %arg5[%c0_8, %c0_9] : memref<1x32xf32, #tpu.memory_space<vmem>>, vector<1x32xf32>
    %c0_10 = arith.constant 0 : index
    %c0_11 = arith.constant 0 : index
    %10 = vector.load %arg6[%c0_10, %c0_11] : memref<1x32xf32, #tpu.memory_space<vmem>>, vector<1x32xf32>
    %cst_12 = arith.constant dense<0.000000e+00> : vector<80xf32>
    %11 = vector.multi_reduction <add>, %8, %cst_12 [1] : vector<80x32xf32> to vector<80xf32>
    %12 = vector.shape_cast %11 : vector<80xf32> to vector<80x1xf32>
    %cst_13 = arith.constant 3.200000e+01 : f32
    %13 = vector.broadcast %cst_13 : f32 to vector<80x1xf32>
    %14 = arith.divf %12, %13 : vector<80x1xf32>
    %15 = vector.broadcast %14 : vector<80x1xf32> to vector<80x32xf32>
    %16 = arith.subf %8, %15 : vector<80x32xf32>
    %17 = arith.mulf %16, %16 : vector<80x32xf32>
    %cst_14 = arith.constant dense<0.000000e+00> : vector<80xf32>
    %18 = vector.multi_reduction <add>, %17, %cst_14 [1] : vector<80x32xf32> to vector<80xf32>
    %19 = vector.shape_cast %18 : vector<80xf32> to vector<80x1xf32>
    %cst_15 = arith.constant 3.200000e+01 : f32
    %20 = vector.broadcast %cst_15 : f32 to vector<80x1xf32>
    %21 = arith.divf %19, %20 : vector<80x1xf32>
    %22 = vector.broadcast %14 : vector<80x1xf32> to vector<80x32xf32>
    %23 = arith.subf %8, %22 : vector<80x32xf32>
    %cst_16 = arith.constant 9.99999997E-7 : f32
    %24 = vector.broadcast %cst_16 : f32 to vector<80x1xf32>
    %25 = arith.addf %21, %24 : vector<80x1xf32>
    %26 = math.rsqrt %25 : vector<80x1xf32>
    %27 = vector.broadcast %26 : vector<80x1xf32> to vector<80x32xf32>
    %28 = arith.mulf %23, %27 : vector<80x32xf32>
    %29 = vector.broadcast %9 : vector<1x32xf32> to vector<80x32xf32>
    %30 = arith.mulf %28, %29 : vector<80x32xf32>
    %31 = vector.broadcast %10 : vector<1x32xf32> to vector<80x32xf32>
    %32 = arith.addf %30, %31 : vector<80x32xf32>
    %c0_17 = arith.constant 0 : index
    %c0_18 = arith.constant 0 : index
    %33 = vector.load %arg7[%c0_17, %c0_18] : memref<32x96xf32, #tpu.memory_space<vmem>>, vector<32x96xf32>
    %cst_19 = arith.constant dense<0.000000e+00> : vector<80x96xf32>
    %34 = tpu.matmul %32, %33, %cst_19 {dimension_numbers = #tpu.dot_dimension_numbers<[1], [0], [0], [1], [0, 0, 1, 1], [], []>} : vector<80x32xf32>, vector<32x96xf32>, vector<80x96xf32> -> vector<80x96xf32>
    %c0_20 = arith.constant 0 : index
    %c0_21 = arith.constant 0 : index
    %35 = vector.load %arg8[%c0_20, %c0_21] : memref<1x96xf32, #tpu.memory_space<vmem>>, vector<1x96xf32>
    %36 = vector.broadcast %35 : vector<1x96xf32> to vector<80x96xf32>
    %37 = arith.addf %34, %36 : vector<80x96xf32>
    %c0_22 = arith.constant 0 : index
    %c0_23 = arith.constant 0 : index
    %38 = vector.load %arg9[%c0_22, %c0_23] : memref<32x32xf32, #tpu.memory_space<vmem>>, vector<32x32xf32>
    %cst_24 = arith.constant 0.000000e+00 : f32
    %39 = vector.broadcast %cst_24 : f32 to vector<80x32xf32>
    %40 = vector.extract_strided_slice %37 {offsets = [0, 0], sizes = [80, 8], strides = [1, 1]} : vector<80x96xf32> to vector<80x8xf32>
    %41 = vector.extract_strided_slice %37 {offsets = [0, 32], sizes = [80, 8], strides = [1, 1]} : vector<80x96xf32> to vector<80x8xf32>
    %42 = vector.extract_strided_slice %37 {offsets = [0, 64], sizes = [80, 8], strides = [1, 1]} : vector<80x96xf32> to vector<80x8xf32>
    %43 = tpu.transpose %41, [1, 0] : vector<80x8xf32> -> vector<8x80xf32>
    %cst_25 = arith.constant dense<0.000000e+00> : vector<80x80xf32>
    %44 = tpu.matmul %40, %43, %cst_25 {dimension_numbers = #tpu.dot_dimension_numbers<[1], [0], [0], [1], [0, 0, 1, 1], [], []>} : vector<80x8xf32>, vector<8x80xf32>, vector<80x80xf32> -> vector<80x80xf32>
    %cst_26 = arith.constant 0.353553385 : f32
    %45 = vector.broadcast %cst_26 : f32 to vector<80x80xf32>
    %46 = arith.mulf %44, %45 : vector<80x80xf32>
    %cst_27 = arith.constant dense<0xFF800000> : vector<80xf32>
    %47 = vector.multi_reduction <maximumf>, %46, %cst_27 [1] : vector<80x80xf32> to vector<80xf32>
    %48 = vector.shape_cast %47 : vector<80xf32> to vector<80x1xf32>
    %49 = vector.broadcast %48 : vector<80x1xf32> to vector<80x80xf32>
    %50 = arith.subf %46, %49 : vector<80x80xf32>
    %51 = math.exp %50 : vector<80x80xf32>
    %cst_28 = arith.constant dense<0.000000e+00> : vector<80xf32>
    %52 = vector.multi_reduction <add>, %51, %cst_28 [1] : vector<80x80xf32> to vector<80xf32>
    %53 = vector.shape_cast %52 : vector<80xf32> to vector<80x1xf32>
    %54 = tpu.reciprocal %53 {approx = true} : vector<80x1xf32> -> vector<80x1xf32>
    %55 = vector.broadcast %54 : vector<80x1xf32> to vector<80x80xf32>
    %56 = arith.mulf %51, %55 : vector<80x80xf32>
    %cst_29 = arith.constant dense<0.000000e+00> : vector<80x8xf32>
    %57 = tpu.matmul %56, %42, %cst_29 {dimension_numbers = #tpu.dot_dimension_numbers<[1], [0], [0], [1], [0, 0, 1, 1], [], []>} : vector<80x80xf32>, vector<80x8xf32>, vector<80x8xf32> -> vector<80x8xf32>
    %58 = vector.extract_strided_slice %38 {offsets = [0, 0], sizes = [8, 32], strides = [1, 1]} : vector<32x32xf32> to vector<8x32xf32>
    %cst_30 = arith.constant dense<0.000000e+00> : vector<80x32xf32>
    %59 = tpu.matmul %57, %58, %cst_30 {dimension_numbers = #tpu.dot_dimension_numbers<[1], [0], [0], [1], [0, 0, 1, 1], [], []>} : vector<80x8xf32>, vector<8x32xf32>, vector<80x32xf32> -> vector<80x32xf32>
    %60 = arith.addf %39, %59 : vector<80x32xf32>
    %61 = vector.extract_strided_slice %37 {offsets = [0, 8], sizes = [80, 8], strides = [1, 1]} : vector<80x96xf32> to vector<80x8xf32>
    %62 = vector.extract_strided_slice %37 {offsets = [0, 40], sizes = [80, 8], strides = [1, 1]} : vector<80x96xf32> to vector<80x8xf32>
    %63 = vector.extract_strided_slice %37 {offsets = [0, 72], sizes = [80, 8], strides = [1, 1]} : vector<80x96xf32> to vector<80x8xf32>
    %64 = tpu.transpose %62, [1, 0] : vector<80x8xf32> -> vector<8x80xf32>
    %cst_31 = arith.constant dense<0.000000e+00> : vector<80x80xf32>
    %65 = tpu.matmul %61, %64, %cst_31 {dimension_numbers = #tpu.dot_dimension_numbers<[1], [0], [0], [1], [0, 0, 1, 1], [], []>} : vector<80x8xf32>, vector<8x80xf32>, vector<80x80xf32> -> vector<80x80xf32>
    %cst_32 = arith.constant 0.353553385 : f32
    %66 = vector.broadcast %cst_32 : f32 to vector<80x80xf32>
    %67 = arith.mulf %65, %66 : vector<80x80xf32>
    %cst_33 = arith.constant dense<0xFF800000> : vector<80xf32>
    %68 = vector.multi_reduction <maximumf>, %67, %cst_33 [1] : vector<80x80xf32> to vector<80xf32>
    %69 = vector.shape_cast %68 : vector<80xf32> to vector<80x1xf32>
    %70 = vector.broadcast %69 : vector<80x1xf32> to vector<80x80xf32>
    %71 = arith.subf %67, %70 : vector<80x80xf32>
    %72 = math.exp %71 : vector<80x80xf32>
    %cst_34 = arith.constant dense<0.000000e+00> : vector<80xf32>
    %73 = vector.multi_reduction <add>, %72, %cst_34 [1] : vector<80x80xf32> to vector<80xf32>
    %74 = vector.shape_cast %73 : vector<80xf32> to vector<80x1xf32>
    %75 = tpu.reciprocal %74 {approx = true} : vector<80x1xf32> -> vector<80x1xf32>
    %76 = vector.broadcast %75 : vector<80x1xf32> to vector<80x80xf32>
    %77 = arith.mulf %72, %76 : vector<80x80xf32>
    %cst_35 = arith.constant dense<0.000000e+00> : vector<80x8xf32>
    %78 = tpu.matmul %77, %63, %cst_35 {dimension_numbers = #tpu.dot_dimension_numbers<[1], [0], [0], [1], [0, 0, 1, 1], [], []>} : vector<80x80xf32>, vector<80x8xf32>, vector<80x8xf32> -> vector<80x8xf32>
    %79 = vector.extract_strided_slice %38 {offsets = [8, 0], sizes = [8, 32], strides = [1, 1]} : vector<32x32xf32> to vector<8x32xf32>
    %cst_36 = arith.constant dense<0.000000e+00> : vector<80x32xf32>
    %80 = tpu.matmul %78, %79, %cst_36 {dimension_numbers = #tpu.dot_dimension_numbers<[1], [0], [0], [1], [0, 0, 1, 1], [], []>} : vector<80x8xf32>, vector<8x32xf32>, vector<80x32xf32> -> vector<80x32xf32>
    %81 = arith.addf %60, %80 : vector<80x32xf32>
    %82 = vector.extract_strided_slice %37 {offsets = [0, 16], sizes = [80, 8], strides = [1, 1]} : vector<80x96xf32> to vector<80x8xf32>
    %83 = vector.extract_strided_slice %37 {offsets = [0, 48], sizes = [80, 8], strides = [1, 1]} : vector<80x96xf32> to vector<80x8xf32>
    %84 = vector.extract_strided_slice %37 {offsets = [0, 80], sizes = [80, 8], strides = [1, 1]} : vector<80x96xf32> to vector<80x8xf32>
    %85 = tpu.transpose %83, [1, 0] : vector<80x8xf32> -> vector<8x80xf32>
    %cst_37 = arith.constant dense<0.000000e+00> : vector<80x80xf32>
    %86 = tpu.matmul %82, %85, %cst_37 {dimension_numbers = #tpu.dot_dimension_numbers<[1], [0], [0], [1], [0, 0, 1, 1], [], []>} : vector<80x8xf32>, vector<8x80xf32>, vector<80x80xf32> -> vector<80x80xf32>
    %cst_38 = arith.constant 0.353553385 : f32
    %87 = vector.broadcast %cst_38 : f32 to vector<80x80xf32>
    %88 = arith.mulf %86, %87 : vector<80x80xf32>
    %cst_39 = arith.constant dense<0xFF800000> : vector<80xf32>
    %89 = vector.multi_reduction <maximumf>, %88, %cst_39 [1] : vector<80x80xf32> to vector<80xf32>
    %90 = vector.shape_cast %89 : vector<80xf32> to vector<80x1xf32>
    %91 = vector.broadcast %90 : vector<80x1xf32> to vector<80x80xf32>
    %92 = arith.subf %88, %91 : vector<80x80xf32>
    %93 = math.exp %92 : vector<80x80xf32>
    %cst_40 = arith.constant dense<0.000000e+00> : vector<80xf32>
    %94 = vector.multi_reduction <add>, %93, %cst_40 [1] : vector<80x80xf32> to vector<80xf32>
    %95 = vector.shape_cast %94 : vector<80xf32> to vector<80x1xf32>
    %96 = tpu.reciprocal %95 {approx = true} : vector<80x1xf32> -> vector<80x1xf32>
    %97 = vector.broadcast %96 : vector<80x1xf32> to vector<80x80xf32>
    %98 = arith.mulf %93, %97 : vector<80x80xf32>
    %cst_41 = arith.constant dense<0.000000e+00> : vector<80x8xf32>
    %99 = tpu.matmul %98, %84, %cst_41 {dimension_numbers = #tpu.dot_dimension_numbers<[1], [0], [0], [1], [0, 0, 1, 1], [], []>} : vector<80x80xf32>, vector<80x8xf32>, vector<80x8xf32> -> vector<80x8xf32>
    %100 = vector.extract_strided_slice %38 {offsets = [16, 0], sizes = [8, 32], strides = [1, 1]} : vector<32x32xf32> to vector<8x32xf32>
    %cst_42 = arith.constant dense<0.000000e+00> : vector<80x32xf32>
    %101 = tpu.matmul %99, %100, %cst_42 {dimension_numbers = #tpu.dot_dimension_numbers<[1], [0], [0], [1], [0, 0, 1, 1], [], []>} : vector<80x8xf32>, vector<8x32xf32>, vector<80x32xf32> -> vector<80x32xf32>
    %102 = arith.addf %81, %101 : vector<80x32xf32>
    %103 = vector.extract_strided_slice %37 {offsets = [0, 24], sizes = [80, 8], strides = [1, 1]} : vector<80x96xf32> to vector<80x8xf32>
    %104 = vector.extract_strided_slice %37 {offsets = [0, 56], sizes = [80, 8], strides = [1, 1]} : vector<80x96xf32> to vector<80x8xf32>
    %105 = vector.extract_strided_slice %37 {offsets = [0, 88], sizes = [80, 8], strides = [1, 1]} : vector<80x96xf32> to vector<80x8xf32>
    %106 = tpu.transpose %104, [1, 0] : vector<80x8xf32> -> vector<8x80xf32>
    %cst_43 = arith.constant dense<0.000000e+00> : vector<80x80xf32>
    %107 = tpu.matmul %103, %106, %cst_43 {dimension_numbers = #tpu.dot_dimension_numbers<[1], [0], [0], [1], [0, 0, 1, 1], [], []>} : vector<80x8xf32>, vector<8x80xf32>, vector<80x80xf32> -> vector<80x80xf32>
    %cst_44 = arith.constant 0.353553385 : f32
    %108 = vector.broadcast %cst_44 : f32 to vector<80x80xf32>
    %109 = arith.mulf %107, %108 : vector<80x80xf32>
    %cst_45 = arith.constant dense<0xFF800000> : vector<80xf32>
    %110 = vector.multi_reduction <maximumf>, %109, %cst_45 [1] : vector<80x80xf32> to vector<80xf32>
    %111 = vector.shape_cast %110 : vector<80xf32> to vector<80x1xf32>
    %112 = vector.broadcast %111 : vector<80x1xf32> to vector<80x80xf32>
    %113 = arith.subf %109, %112 : vector<80x80xf32>
    %114 = math.exp %113 : vector<80x80xf32>
    %cst_46 = arith.constant dense<0.000000e+00> : vector<80xf32>
    %115 = vector.multi_reduction <add>, %114, %cst_46 [1] : vector<80x80xf32> to vector<80xf32>
    %116 = vector.shape_cast %115 : vector<80xf32> to vector<80x1xf32>
    %117 = tpu.reciprocal %116 {approx = true} : vector<80x1xf32> -> vector<80x1xf32>
    %118 = vector.broadcast %117 : vector<80x1xf32> to vector<80x80xf32>
    %119 = arith.mulf %114, %118 : vector<80x80xf32>
    %cst_47 = arith.constant dense<0.000000e+00> : vector<80x8xf32>
    %120 = tpu.matmul %119, %105, %cst_47 {dimension_numbers = #tpu.dot_dimension_numbers<[1], [0], [0], [1], [0, 0, 1, 1], [], []>} : vector<80x80xf32>, vector<80x8xf32>, vector<80x8xf32> -> vector<80x8xf32>
    %121 = vector.extract_strided_slice %38 {offsets = [24, 0], sizes = [8, 32], strides = [1, 1]} : vector<32x32xf32> to vector<8x32xf32>
    %cst_48 = arith.constant dense<0.000000e+00> : vector<80x32xf32>
    %122 = tpu.matmul %120, %121, %cst_48 {dimension_numbers = #tpu.dot_dimension_numbers<[1], [0], [0], [1], [0, 0, 1, 1], [], []>} : vector<80x8xf32>, vector<8x32xf32>, vector<80x32xf32> -> vector<80x32xf32>
    %123 = arith.addf %102, %122 : vector<80x32xf32>
    %124 = arith.addf %8, %123 : vector<80x32xf32>
    %c0_49 = arith.constant 0 : index
    %c0_50 = arith.constant 0 : index
    %125 = vector.load %arg10[%c0_49, %c0_50] : memref<1x32xf32, #tpu.memory_space<vmem>>, vector<1x32xf32>
    %126 = vector.broadcast %125 : vector<1x32xf32> to vector<80x32xf32>
    %127 = arith.addf %124, %126 : vector<80x32xf32>
    %c0_51 = arith.constant 0 : index
    %c0_52 = arith.constant 0 : index
    %128 = vector.load %arg11[%c0_51, %c0_52] : memref<1x32xf32, #tpu.memory_space<vmem>>, vector<1x32xf32>
    %c0_53 = arith.constant 0 : index
    %c0_54 = arith.constant 0 : index
    %129 = vector.load %arg12[%c0_53, %c0_54] : memref<1x32xf32, #tpu.memory_space<vmem>>, vector<1x32xf32>
    %cst_55 = arith.constant dense<0.000000e+00> : vector<80xf32>
    %130 = vector.multi_reduction <add>, %127, %cst_55 [1] : vector<80x32xf32> to vector<80xf32>
    %131 = vector.shape_cast %130 : vector<80xf32> to vector<80x1xf32>
    %cst_56 = arith.constant 3.200000e+01 : f32
    %132 = vector.broadcast %cst_56 : f32 to vector<80x1xf32>
    %133 = arith.divf %131, %132 : vector<80x1xf32>
    %134 = vector.broadcast %133 : vector<80x1xf32> to vector<80x32xf32>
    %135 = arith.subf %127, %134 : vector<80x32xf32>
    %136 = arith.mulf %135, %135 : vector<80x32xf32>
    %cst_57 = arith.constant dense<0.000000e+00> : vector<80xf32>
    %137 = vector.multi_reduction <add>, %136, %cst_57 [1] : vector<80x32xf32> to vector<80xf32>
    %138 = vector.shape_cast %137 : vector<80xf32> to vector<80x1xf32>
    %cst_58 = arith.constant 3.200000e+01 : f32
    %139 = vector.broadcast %cst_58 : f32 to vector<80x1xf32>
    %140 = arith.divf %138, %139 : vector<80x1xf32>
    %141 = vector.broadcast %133 : vector<80x1xf32> to vector<80x32xf32>
    %142 = arith.subf %127, %141 : vector<80x32xf32>
    %cst_59 = arith.constant 9.99999997E-7 : f32
    %143 = vector.broadcast %cst_59 : f32 to vector<80x1xf32>
    %144 = arith.addf %140, %143 : vector<80x1xf32>
    %145 = math.rsqrt %144 : vector<80x1xf32>
    %146 = vector.broadcast %145 : vector<80x1xf32> to vector<80x32xf32>
    %147 = arith.mulf %142, %146 : vector<80x32xf32>
    %148 = vector.broadcast %128 : vector<1x32xf32> to vector<80x32xf32>
    %149 = arith.mulf %147, %148 : vector<80x32xf32>
    %150 = vector.broadcast %129 : vector<1x32xf32> to vector<80x32xf32>
    %151 = arith.addf %149, %150 : vector<80x32xf32>
    %c0_60 = arith.constant 0 : index
    %c0_61 = arith.constant 0 : index
    %152 = vector.load %arg13[%c0_60, %c0_61] : memref<32x64xf32, #tpu.memory_space<vmem>>, vector<32x64xf32>
    %cst_62 = arith.constant dense<0.000000e+00> : vector<80x64xf32>
    %153 = tpu.matmul %151, %152, %cst_62 {dimension_numbers = #tpu.dot_dimension_numbers<[1], [0], [0], [1], [0, 0, 1, 1], [], []>} : vector<80x32xf32>, vector<32x64xf32>, vector<80x64xf32> -> vector<80x64xf32>
    %c0_63 = arith.constant 0 : index
    %c0_64 = arith.constant 0 : index
    %154 = vector.load %arg14[%c0_63, %c0_64] : memref<1x64xf32, #tpu.memory_space<vmem>>, vector<1x64xf32>
    %155 = vector.broadcast %154 : vector<1x64xf32> to vector<80x64xf32>
    %156 = arith.addf %153, %155 : vector<80x64xf32>
    %157 = arith.mulf %156, %156 : vector<80x64xf32>
    %158 = arith.mulf %156, %157 : vector<80x64xf32>
    %cst_65 = arith.constant 4.471500e-02 : f32
    %159 = vector.broadcast %cst_65 : f32 to vector<80x64xf32>
    %160 = arith.mulf %159, %158 : vector<80x64xf32>
    %161 = arith.addf %156, %160 : vector<80x64xf32>
    %cst_66 = arith.constant 0.797884583 : f32
    %162 = vector.broadcast %cst_66 : f32 to vector<80x64xf32>
    %163 = arith.mulf %162, %161 : vector<80x64xf32>
    %164 = math.tanh %163 : vector<80x64xf32>
    %cst_67 = arith.constant 1.000000e+00 : f32
    %165 = vector.broadcast %cst_67 : f32 to vector<80x64xf32>
    %166 = arith.addf %165, %164 : vector<80x64xf32>
    %cst_68 = arith.constant 5.000000e-01 : f32
    %167 = vector.broadcast %cst_68 : f32 to vector<80x64xf32>
    %168 = arith.mulf %167, %166 : vector<80x64xf32>
    %169 = arith.mulf %156, %168 : vector<80x64xf32>
    %c0_69 = arith.constant 0 : index
    %c0_70 = arith.constant 0 : index
    %170 = vector.load %arg15[%c0_69, %c0_70] : memref<64x32xf32, #tpu.memory_space<vmem>>, vector<64x32xf32>
    %cst_71 = arith.constant dense<0.000000e+00> : vector<80x32xf32>
    %171 = tpu.matmul %169, %170, %cst_71 {dimension_numbers = #tpu.dot_dimension_numbers<[1], [0], [0], [1], [0, 0, 1, 1], [], []>} : vector<80x64xf32>, vector<64x32xf32>, vector<80x32xf32> -> vector<80x32xf32>
    %c0_72 = arith.constant 0 : index
    %c0_73 = arith.constant 0 : index
    %172 = vector.load %arg16[%c0_72, %c0_73] : memref<1x32xf32, #tpu.memory_space<vmem>>, vector<1x32xf32>
    %173 = vector.broadcast %172 : vector<1x32xf32> to vector<80x32xf32>
    %174 = arith.addf %171, %173 : vector<80x32xf32>
    %175 = arith.addf %127, %174 : vector<80x32xf32>
    %c0_74 = arith.constant 0 : index
    %c0_75 = arith.constant 0 : index
    %c0_76 = arith.constant 0 : index
    %176 = vector.load %arg21[%c0_74, %c0_75, %c0_76] : memref<1x80x32xf32, #tpu.memory_space<vmem>>, vector<1x80x32xf32>
    %177 = vector.shape_cast %176 : vector<1x80x32xf32> to vector<80x32xf32>
    %178 = vector.shape_cast %175 : vector<80x32xf32> to vector<1x80x32xf32>
    tpu.vector_store %arg21[%c0_74, %c0_75, %c0_76], %178 {strides = array<i32>} : memref<1x80x32xf32, #tpu.memory_space<vmem>>, vector<1x80x32xf32>,
    %179 = vector.extract_strided_slice %175 {offsets = [16, 0], sizes = [64, 32], strides = [1, 1]} : vector<80x32xf32> to vector<64x32xf32>
    %c0_77 = arith.constant 0 : index
    %c0_78 = arith.constant 0 : index
    %180 = vector.load %arg17[%c0_77, %c0_78] : memref<32x48xf32, #tpu.memory_space<vmem>>, vector<32x48xf32>
    %cst_79 = arith.constant dense<0.000000e+00> : vector<64x48xf32>
    %181 = tpu.matmul %179, %180, %cst_79 {dimension_numbers = #tpu.dot_dimension_numbers<[1], [0], [0], [1], [0, 0, 1, 1], [], []>} : vector<64x32xf32>, vector<32x48xf32>, vector<64x48xf32> -> vector<64x48xf32>
    %c0_80 = arith.constant 0 : index
    %c0_81 = arith.constant 0 : index
    %182 = vector.load %arg18[%c0_80, %c0_81] : memref<1x48xf32, #tpu.memory_space<vmem>>, vector<1x48xf32>
    %183 = vector.broadcast %182 : vector<1x48xf32> to vector<64x48xf32>
    %184 = arith.addf %181, %183 : vector<64x48xf32>
    %cst_82 = arith.constant 0.000000e+00 : f32
    %185 = vector.broadcast %cst_82 : f32 to vector<64x48xf32>
    %186 = arith.maximumf %184, %185 : vector<64x48xf32>
    %c0_83 = arith.constant 0 : index
    %c0_84 = arith.constant 0 : index
    %187 = vector.load %arg19[%c0_83, %c0_84] : memref<48x5xf32, #tpu.memory_space<vmem>>, vector<48x5xf32>
    %cst_85 = arith.constant dense<0.000000e+00> : vector<64x5xf32>
    %188 = tpu.matmul %186, %187, %cst_85 {dimension_numbers = #tpu.dot_dimension_numbers<[1], [0], [0], [1], [0, 0, 1, 1], [], []>} : vector<64x48xf32>, vector<48x5xf32>, vector<64x5xf32> -> vector<64x5xf32>
    %c0_86 = arith.constant 0 : index
    %c0_87 = arith.constant 0 : index
    %189 = vector.load %arg20[%c0_86, %c0_87] : memref<1x5xf32, #tpu.memory_space<vmem>>, vector<1x5xf32>
    %190 = vector.broadcast %189 : vector<1x5xf32> to vector<64x5xf32>
    %191 = arith.addf %188, %190 : vector<64x5xf32>
    %192 = tpu.iota {dimensions = array<i32: 1>} : vector<64x5xi32>
    %c3_i32 = arith.constant 3 : i32
    %193 = vector.broadcast %c3_i32 : i32 to vector<64x5xi32>
    %194 = arith.cmpi slt, %192, %193 : vector<64x5xi32>
    %195 = arith.negf %191 : vector<64x5xf32>
    %196 = math.exp %195 : vector<64x5xf32>
    %cst_88 = arith.constant 1.000000e+00 : f32
    %197 = vector.broadcast %cst_88 : f32 to vector<64x5xf32>
    %198 = arith.addf %197, %196 : vector<64x5xf32>
    %199 = arith.divf %197, %198 : vector<64x5xf32>
    %200 = arith.select %194, %199, %191 : vector<64x5xi1>, vector<64x5xf32>
    %c0_89 = arith.constant 0 : index
    %c0_90 = arith.constant 0 : index
    %c0_91 = arith.constant 0 : index
    %201 = vector.load %arg22[%c0_89, %c0_90, %c0_91] : memref<1x64x5xf32, #tpu.memory_space<vmem>>, vector<1x64x5xf32>
    %202 = vector.shape_cast %201 : vector<1x64x5xf32> to vector<64x5xf32>
    %203 = vector.shape_cast %200 : vector<64x5xf32> to vector<1x64x5xf32>
    tpu.vector_store %arg22[%c0_89, %c0_90, %c0_91], %203 {strides = array<i32>} : memref<1x64x5xf32, #tpu.memory_space<vmem>>, vector<1x64x5xf32>,
    return
  }
  func.func @transform_0(%arg0: i32) -> (i32, i32, i32) {
    %c0_i32 = arith.constant 0 : i32
    %c0_i32_0 = arith.constant 0 : i32
    %c0_i32_1 = arith.constant 0 : i32
    return %arg0, %c0_i32, %c0_i32_0 : i32, i32, i32
  }
  func.func @transform_1(%arg0: i32) -> (i32, i32) {
    %c0_i32 = arith.constant 0 : i32
    %c0_i32_0 = arith.constant 0 : i32
    %c0_i32_1 = arith.constant 0 : i32
    return %c0_i32, %c0_i32_0 : i32, i32
  }
  func.func @transform_2(%arg0: i32) -> (i32, i32) {
    %c0_i32 = arith.constant 0 : i32
    %c0_i32_0 = arith.constant 0 : i32
    %c0_i32_1 = arith.constant 0 : i32
    return %c0_i32, %c0_i32_0 : i32, i32
  }
  func.func @transform_3(%arg0: i32) -> (i32, i32) {
    %c0_i32 = arith.constant 0 : i32
    %c0_i32_0 = arith.constant 0 : i32
    %c0_i32_1 = arith.constant 0 : i32
    return %c0_i32, %c0_i32_0 : i32, i32
  }
  func.func @transform_4(%arg0: i32) -> (i32, i32) {
    %c0_i32 = arith.constant 0 : i32
    %c0_i32_0 = arith.constant 0 : i32
    %c0_i32_1 = arith.constant 0 : i32
    return %c0_i32, %c0_i32_0 : i32, i32
  }
  func.func @transform_5(%arg0: i32) -> (i32, i32) {
    %c0_i32 = arith.constant 0 : i32
    %c0_i32_0 = arith.constant 0 : i32
    %c0_i32_1 = arith.constant 0 : i32
    return %c0_i32, %c0_i32_0 : i32, i32
  }
  func.func @transform_6(%arg0: i32) -> (i32, i32) {
    %c0_i32 = arith.constant 0 : i32
    %c0_i32_0 = arith.constant 0 : i32
    %c0_i32_1 = arith.constant 0 : i32
    return %c0_i32, %c0_i32_0 : i32, i32
  }
  func.func @transform_7(%arg0: i32) -> (i32, i32) {
    %c0_i32 = arith.constant 0 : i32
    %c0_i32_0 = arith.constant 0 : i32
    %c0_i32_1 = arith.constant 0 : i32
    return %c0_i32, %c0_i32_0 : i32, i32
  }
  func.func @transform_8(%arg0: i32) -> (i32, i32) {
    %c0_i32 = arith.constant 0 : i32
    %c0_i32_0 = arith.constant 0 : i32
    %c0_i32_1 = arith.constant 0 : i32
    return %c0_i32, %c0_i32_0 : i32, i32
  }
  func.func @transform_9(%arg0: i32) -> (i32, i32) {
    %c0_i32 = arith.constant 0 : i32
    %c0_i32_0 = arith.constant 0 : i32
    %c0_i32_1 = arith.constant 0 : i32
    return %c0_i32, %c0_i32_0 : i32, i32
  }
  func.func @transform_10(%arg0: i32) -> (i32, i32) {
    %c0_i32 = arith.constant 0 : i32
    %c0_i32_0 = arith.constant 0 : i32
    %c0_i32_1 = arith.constant 0 : i32
    return %c0_i32, %c0_i32_0 : i32, i32
  }
  func.func @transform_11(%arg0: i32) -> (i32, i32) {
    %c0_i32 = arith.constant 0 : i32
    %c0_i32_0 = arith.constant 0 : i32
    %c0_i32_1 = arith.constant 0 : i32
    return %c0_i32, %c0_i32_0 : i32, i32
  }
  func.func @transform_12(%arg0: i32) -> (i32, i32) {
    %c0_i32 = arith.constant 0 : i32
    %c0_i32_0 = arith.constant 0 : i32
    %c0_i32_1 = arith.constant 0 : i32
    return %c0_i32, %c0_i32_0 : i32, i32
  }
  func.func @transform_13(%arg0: i32) -> (i32, i32) {
    %c0_i32 = arith.constant 0 : i32
    %c0_i32_0 = arith.constant 0 : i32
    %c0_i32_1 = arith.constant 0 : i32
    return %c0_i32, %c0_i32_0 : i32, i32
  }
  func.func @transform_14(%arg0: i32) -> (i32, i32) {
    %c0_i32 = arith.constant 0 : i32
    %c0_i32_0 = arith.constant 0 : i32
    %c0_i32_1 = arith.constant 0 : i32
    return %c0_i32, %c0_i32_0 : i32, i32
  }
  func.func @transform_15(%arg0: i32) -> (i32, i32) {
    %c0_i32 = arith.constant 0 : i32
    %c0_i32_0 = arith.constant 0 : i32
    %c0_i32_1 = arith.constant 0 : i32
    return %c0_i32, %c0_i32_0 : i32, i32
  }
  func.func @transform_16(%arg0: i32) -> (i32, i32) {
    %c0_i32 = arith.constant 0 : i32
    %c0_i32_0 = arith.constant 0 : i32
    %c0_i32_1 = arith.constant 0 : i32
    return %c0_i32, %c0_i32_0 : i32, i32
  }
  func.func @transform_17(%arg0: i32) -> (i32, i32) {
    %c0_i32 = arith.constant 0 : i32
    %c0_i32_0 = arith.constant 0 : i32
    %c0_i32_1 = arith.constant 0 : i32
    return %c0_i32, %c0_i32_0 : i32, i32
  }
  func.func @transform_18(%arg0: i32) -> (i32, i32) {
    %c0_i32 = arith.constant 0 : i32
    %c0_i32_0 = arith.constant 0 : i32
    %c0_i32_1 = arith.constant 0 : i32
    return %c0_i32, %c0_i32_0 : i32, i32
  }
  func.func @transform_19(%arg0: i32) -> (i32, i32) {
    %c0_i32 = arith.constant 0 : i32
    %c0_i32_0 = arith.constant 0 : i32
    %c0_i32_1 = arith.constant 0 : i32
    return %c0_i32, %c0_i32_0 : i32, i32
  }
  func.func @transform_20(%arg0: i32) -> (i32, i32, i32) {
    %c0_i32 = arith.constant 0 : i32
    %c0_i32_0 = arith.constant 0 : i32
    %c0_i32_1 = arith.constant 0 : i32
    return %arg0, %c0_i32, %c0_i32_0 : i32, i32, i32
  }
  func.func @transform_21(%arg0: i32) -> (i32, i32, i32) {
    %c0_i32 = arith.constant 0 : i32
    %c0_i32_0 = arith.constant 0 : i32
    %c0_i32_1 = arith.constant 0 : i32
    return %arg0, %c0_i32, %c0_i32_0 : i32, i32, i32
  }
}

</mosaic_0001>

<llo_original>
// kernel: dgtrack_forward.1
$region0: #{dgtrack_forward.1}
  #allocation0 [shape = 'u32[]', space=smem, size = 0x4, offset = 0x4, fixed_abs, tag = 'smem constant byte address 0x4 - core index']
  #allocation1 [shape = 'u32[144,128]{1,0:T(1,128)}', space=vmem, size = 0x12000, scoped, tag = 'internal scratch']
  %s0 = inlined_call_operand.vmem [shape: f32[2,80,48], index: 0, kind: input, shape index: {}]
  %s1 = inlined_call_operand.vmem [shape: f32[48,32], index: 1, kind: input, shape index: {}]
  %s2 = inlined_call_operand.vmem [shape: f32[1,32], index: 2, kind: input, shape index: {}]
  %s3 = inlined_call_operand.vmem [shape: f32[80,32], index: 3, kind: input, shape index: {}]
  %s4 = inlined_call_operand.vmem [shape: f32[1,32], index: 4, kind: input, shape index: {}]
  %s5 = inlined_call_operand.vmem [shape: f32[1,32], index: 5, kind: input, shape index: {}]
  %s6 = inlined_call_operand.vmem [shape: f32[32,96], index: 6, kind: input, shape index: {}]
  %s7 = inlined_call_operand.vmem [shape: f32[1,96], index: 7, kind: input, shape index: {}]
  %s8 = inlined_call_operand.vmem [shape: f32[32,32], index: 8, kind: input, shape index: {}]
  %s9 = inlined_call_operand.vmem [shape: f32[1,32], index: 9, kind: input, shape index: {}]
  %s10 = inlined_call_operand.vmem [shape: f32[1,32], index: 10, kind: input, shape index: {}]
  %s11 = inlined_call_operand.vmem [shape: f32[1,32], index: 11, kind: input, shape index: {}]
  %s12 = inlined_call_operand.vmem [shape: f32[32,64], index: 12, kind: input, shape index: {}]
  %s13 = inlined_call_operand.vmem [shape: f32[1,64], index: 13, kind: input, shape index: {}]
  %s14 = inlined_call_operand.vmem [shape: f32[64,32], index: 14, kind: input, shape index: {}]
  %s15 = inlined_call_operand.vmem [shape: f32[1,32], index: 15, kind: input, shape index: {}]
  %s16 = inlined_call_operand.vmem [shape: f32[32,48], index: 16, kind: input, shape index: {}]
  %s17 = inlined_call_operand.vmem [shape: f32[1,48], index: 17, kind: input, shape index: {}]
  %s18 = inlined_call_operand.vmem [shape: f32[48,5], index: 18, kind: input, shape index: {}]
  %s19 = inlined_call_operand.vmem [shape: f32[1,5], index: 19, kind: input, shape index: {}]
  %s20 = inlined_call_operand.vmem [shape: f32[2,80,32], index: 20, kind: output, shape index: {0}]
  %s21 = inlined_call_operand.vmem [shape: f32[2,64,5], index: 21, kind: output, shape index: {1}]
  %22 = xla_tuple %s20, %s21
  %s23 = sld [smem:[#allocation0]]
  $region121: #{dgtrack_forward.1} parent=0
    _
  %s25 = ssub.s32 1, %s23
  %s26 = scalar_select 0, %s25, %s23
  loop: start=0, step=1, limit=4
  $region2: #{dgtrack_forward.1} parent=0 // loop_pre_header
    _
  $region3: #{dgtrack_forward.1} parent=0 // loop_header
    %s28 = sphi 0, %s32
    %p29 = scmp.ge.s32.totalorder %s28, 4
    %s38 = sphi 0, %s40
    %s41 = sphi 0, %s38
    %s42 = sphi 0, %s41
    %s58 = sphi 0, %s42
    %s62 = sphi 0, %s62
    %s64 = sphi 0, %s62
    %s65 = sphi 0, %s64
    %s79 = sphi 0, %s65
    %s83 = sphi 0, %s83
    %s85 = sphi 0, %s83
    %s86 = sphi 0, %s85
    %s100 = sphi 0, %s86
    %s104 = sphi 0, %s104
    %s106 = sphi 0, %s104
    %s107 = sphi 0, %s106
    %s121 = sphi 0, %s107
    %s125 = sphi 0, %s125
    %s127 = sphi 0, %s125
    %s128 = sphi 0, %s127
    %s142 = sphi 0, %s128
    %s146 = sphi 0, %s146
    %s148 = sphi 0, %s146
    %s149 = sphi 0, %s148
    %s163 = sphi 0, %s149
    %s167 = sphi 0, %s167
    %s169 = sphi 0, %s167
    %s170 = sphi 0, %s169
    %s184 = sphi 0, %s170
    %s188 = sphi 0, %s188
    %s190 = sphi 0, %s188
    %s191 = sphi 0, %s190
    %s205 = sphi 0, %s191
    %s209 = sphi 0, %s209
    %s211 = sphi 0, %s209
    %s212 = sphi 0, %s211
    %s226 = sphi 0, %s212
    %s230 = sphi 0, %s230
    %s232 = sphi 0, %s230
    %s233 = sphi 0, %s232
    %s247 = sphi 0, %s233
    %s251 = sphi 0, %s251
    %s253 = sphi 0, %s251
    %s254 = sphi 0, %s253
    %s268 = sphi 0, %s254
    %s272 = sphi 0, %s272
    %s274 = sphi 0, %s272
    %s275 = sphi 0, %s274
    %s289 = sphi 0, %s275
    %s293 = sphi 0, %s293
    %s295 = sphi 0, %s293
    %s296 = sphi 0, %s295
    %s310 = sphi 0, %s296
    %s314 = sphi 0, %s314
    %s316 = sphi 0, %s314
    %s317 = sphi 0, %s316
    %s331 = sphi 0, %s317
    %s335 = sphi 0, %s335
    %s337 = sphi 0, %s335
    %s338 = sphi 0, %s337
    %s352 = sphi 0, %s338
    %s356 = sphi 0, %s356
    %s358 = sphi 0, %s356
    %s359 = sphi 0, %s358
    %s373 = sphi 0, %s359
    %s377 = sphi 0, %s377
    %s379 = sphi 0, %s377
    %s380 = sphi 0, %s379
    %s394 = sphi 0, %s380
    %s398 = sphi 0, %s398
    %s400 = sphi 0, %s398
    %s401 = sphi 0, %s400
    %s415 = sphi 0, %s401
    %s419 = sphi 0, %s419
    %s421 = sphi 0, %s419
    %s422 = sphi 0, %s421
    %s436 = sphi 0, %s422
    %s440 = sphi 0, %s440
    %s442 = sphi 0, %s440
    %s443 = sphi 0, %s442
    %s457 = sphi 0, %s443
    %s463 = sphi 0, %s465
    %s466 = sphi 0, %s463
    %s467 = sphi 0, %s466
    %s483 = sphi 0, %s467
    %s489 = sphi 0, %s491
    %s492 = sphi 0, %s489
    %s493 = sphi 0, %s492
    %s509 = sphi 0, %s493
  $region4: #{dgtrack_forward.1} parent=0 // loop_header_branch
    %31 = sbr.rel (%p29) target = $region8
  $region5: #{dgtrack_forward.1} parent=0 // loop_body
    %s33 = ssub.s32 %s28, 1
    %s34 = ssub.s32 %s28, 2
    %s35 = sadd.s32 %s28, 1
    %s36 = ssub.s32 %s28, %s35
    %p37 = scmp.eq.s32.totalorder %s36, 0
    %s39 = sadd.s32 %s38, 1
    %s40 = scalar_select %p37, %s38, %s39
    %p43 = pneg %p37
    %p44 = scmp.eq.s32.totalorder %s28, 1
    %p45 = por %p43, %p44
    %p46 = scmp.ne.s32.totalorder %s38, %s41
    %p47 = scmp.eq.s32.totalorder %s28, 0
    %p48 = por %p46, %p47
    %p49 = scmp.ne.s32.totalorder %s38, %s41
    %p50 = scmp.eq.s32.totalorder %s33, 1
    %p51 = por %p49, %p50
    %p52 = scmp.ne.s32.totalorder %s41, %s42
    %p53 = scmp.eq.s32.totalorder %s33, 0
    %p54 = por %p52, %p53
    %p55 = scmp.ne.s32.totalorder %s41, %s42
    %p56 = scmp.eq.s32.totalorder %s34, 1
    %p57 = por %p55, %p56
    %p59 = scmp.ne.s32.totalorder %s42, %s58
    %p60 = scmp.eq.s32.totalorder %s34, 0
    %p61 = por %p59, %p60
    %s63 = sadd.s32 %s62, 1
    %p66 = scmp.eq.s32.totalorder %s28, 1
    %p67 = scmp.ne.s32.totalorder %s62, %s64
    %p68 = scmp.eq.s32.totalorder %s28, 0
    %p69 = por %p67, %p68
    %p70 = scmp.ne.s32.totalorder %s62, %s64
    %p71 = scmp.eq.s32.totalorder %s33, 1
    %p72 = por %p70, %p71
    %p73 = scmp.ne.s32.totalorder %s64, %s65
    %p74 = scmp.eq.s32.totalorder %s33, 0
    %p75 = por %p73, %p74
    %p76 = scmp.ne.s32.totalorder %s64, %s65
    %p77 = scmp.eq.s32.totalorder %s34, 1
    %p78 = por %p76, %p77
    %p80 = scmp.ne.s32.totalorder %s65, %s79
    %p81 = scmp.eq.s32.totalorder %s34, 0
    %p82 = por %p80, %p81
    %s84 = sadd.s32 %s83, 1
    %p87 = scmp.eq.s32.totalorder %s28, 1
    %p88 = scmp.ne.s32.totalorder %s83, %s85
    %p89 = scmp.eq.s32.totalorder %s28, 0
    %p90 = por %p88, %p89
    %p91 = scmp.ne.s32.totalorder %s83, %s85
    %p92 = scmp.eq.s32.totalorder %s33, 1
    %p93 = por %p91, %p92
    %p94 = scmp.ne.s32.totalorder %s85, %s86
    %p95 = scmp.eq.s32.totalorder %s33, 0
    %p96 = por %p94, %p95
    %p97 = scmp.ne.s32.totalorder %s85, %s86
    %p98 = scmp.eq.s32.totalorder %s34, 1
    %p99 = por %p97, %p98
    %p101 = scmp.ne.s32.totalorder %s86, %s100
    %p102 = scmp.eq.s32.totalorder %s34, 0
    %p103 = por %p101, %p102
    %s105 = sadd.s32 %s104, 1
    %p108 = scmp.eq.s32.totalorder %s28, 1
    %p109 = scmp.ne.s32.totalorder %s104, %s106
    %p110 = scmp.eq.s32.totalorder %s28, 0
    %p111 = por %p109, %p110
    %p112 = scmp.ne.s32.totalorder %s104, %s106
    %p113 = scmp.eq.s32.totalorder %s33, 1
    %p114 = por %p112, %p113
    %p115 = scmp.ne.s32.totalorder %s106, %s107
    %p116 = scmp.eq.s32.totalorder %s33, 0
    %p117 = por %p115, %p116
    %p118 = scmp.ne.s32.totalorder %s106, %s107
    %p119 = scmp.eq.s32.totalorder %s34, 1
    %p120 = por %p118, %p119
    %p122 = scmp.ne.s32.totalorder %s107, %s121
    %p123 = scmp.eq.s32.totalorder %s34, 0
    %p124 = por %p122, %p123
    %s126 = sadd.s32 %s125, 1
    %p129 = scmp.eq.s32.totalorder %s28, 1
    %p130 = scmp.ne.s32.totalorder %s125, %s127
    %p131 = scmp.eq.s32.totalorder %s28, 0
    %p132 = por %p130, %p131
    %p133 = scmp.ne.s32.totalorder %s125, %s127
    %p134 = scmp.eq.s32.totalorder %s33, 1
    %p135 = por %p133, %p134
    %p136 = scmp.ne.s32.totalorder %s127, %s128
    %p137 = scmp.eq.s32.totalorder %s33, 0
    %p138 = por %p136, %p137
    %p139 = scmp.ne.s32.totalorder %s127, %s128
    %p140 = scmp.eq.s32.totalorder %s34, 1
    %p141 = por %p139, %p140
    %p143 = scmp.ne.s32.totalorder %s128, %s142
    %p144 = scmp.eq.s32.totalorder %s34, 0
    %p145 = por %p143, %p144
    %s147 = sadd.s32 %s146, 1
    %p150 = scmp.eq.s32.totalorder %s28, 1
    %p151 = scmp.ne.s32.totalorder %s146, %s148
    %p152 = scmp.eq.s32.totalorder %s28, 0
    %p153 = por %p151, %p152
    %p154 = scmp.ne.s32.totalorder %s146, %s148
    %p155 = scmp.eq.s32.totalorder %s33, 1
    %p156 = por %p154, %p155
    %p157 = scmp.ne.s32.totalorder %s148, %s149
    %p158 = scmp.eq.s32.totalorder %s33, 0
    %p159 = por %p157, %p158
    %p160 = scmp.ne.s32.totalorder %s148, %s149
    %p161 = scmp.eq.s32.totalorder %s34, 1
    %p162 = por %p160, %p161
    %p164 = scmp.ne.s32.totalorder %s149, %s163
    %p165 = scmp.eq.s32.totalorder %s34, 0
    %p166 = por %p164, %p165
    %s168 = sadd.s32 %s167, 1
    %p171 = scmp.eq.s32.totalorder %s28, 1
    %p172 = scmp.ne.s32.totalorder %s167, %s169
    %p173 = scmp.eq.s32.totalorder %s28, 0
    %p174 = por %p172, %p173
    %p175 = scmp.ne.s32.totalorder %s167, %s169
    %p176 = scmp.eq.s32.totalorder %s33, 1
    %p177 = por %p175, %p176
    %p178 = scmp.ne.s32.totalorder %s169, %s170
    %p179 = scmp.eq.s32.totalorder %s33, 0
    %p180 = por %p178, %p179
    %p181 = scmp.ne.s32.totalorder %s169, %s170
    %p182 = scmp.eq.s32.totalorder %s34, 1
    %p183 = por %p181, %p182
    %p185 = scmp.ne.s32.totalorder %s170, %s184
    %p186 = scmp.eq.s32.totalorder %s34, 0
    %p187 = por %p185, %p186
    %s189 = sadd.s32 %s188, 1
    %p192 = scmp.eq.s32.totalorder %s28, 1
    %p193 = scmp.ne.s32.totalorder %s188, %s190
    %p194 = scmp.eq.s32.totalorder %s28, 0
    %p195 = por %p193, %p194
    %p196 = scmp.ne.s32.totalorder %s188, %s190
    %p197 = scmp.eq.s32.totalorder %s33, 1
    %p198 = por %p196, %p197
    %p199 = scmp.ne.s32.totalorder %s190, %s191
    %p200 = scmp.eq.s32.totalorder %s33, 0
    %p201 = por %p199, %p200
    %p202 = scmp.ne.s32.totalorder %s190, %s191
    %p203 = scmp.eq.s32.totalorder %s34, 1
    %p204 = por %p202, %p203
    %p206 = scmp.ne.s32.totalorder %s191, %s205
    %p207 = scmp.eq.s32.totalorder %s34, 0
    %p208 = por %p206, %p207
    %s210 = sadd.s32 %s209, 1
    %p213 = scmp.eq.s32.totalorder %s28, 1
    %p214 = scmp.ne.s32.totalorder %s209, %s211
    %p215 = scmp.eq.s32.totalorder %s28, 0
    %p216 = por %p214, %p215
    %p217 = scmp.ne.s32.totalorder %s209, %s211
    %p218 = scmp.eq.s32.totalorder %s33, 1
    %p219 = por %p217, %p218
    %p220 = scmp.ne.s32.totalorder %s211, %s212
    %p221 = scmp.eq.s32.totalorder %s33, 0
    %p222 = por %p220, %p221
    %p223 = scmp.ne.s32.totalorder %s211, %s212
    %p224 = scmp.eq.s32.totalorder %s34, 1
    %p225 = por %p223, %p224
    %p227 = scmp.ne.s32.totalorder %s212, %s226
    %p228 = scmp.eq.s32.totalorder %s34, 0
    %p229 = por %p227, %p228
    %s231 = sadd.s32 %s230, 1
    %p234 = scmp.eq.s32.totalorder %s28, 1
    %p235 = scmp.ne.s32.totalorder %s230, %s232
    %p236 = scmp.eq.s32.totalorder %s28, 0
    %p237 = por %p235, %p236
    %p238 = scmp.ne.s32.totalorder %s230, %s232
    %p239 = scmp.eq.s32.totalorder %s33, 1
    %p240 = por %p238, %p239
    %p241 = scmp.ne.s32.totalorder %s232, %s233
    %p242 = scmp.eq.s32.totalorder %s33, 0
    %p243 = por %p241, %p242
    %p244 = scmp.ne.s32.totalorder %s232, %s233
    %p245 = scmp.eq.s32.totalorder %s34, 1
    %p246 = por %p244, %p245
    %p248 = scmp.ne.s32.totalorder %s233, %s247
    %p249 = scmp.eq.s32.totalorder %s34, 0
    %p250 = por %p248, %p249
    %s252 = sadd.s32 %s251, 1
    %p255 = scmp.eq.s32.totalorder %s28, 1
    %p256 = scmp.ne.s32.totalorder %s251, %s253
    %p257 = scmp.eq.s32.totalorder %s28, 0
    %p258 = por %p256, %p257
    %p259 = scmp.ne.s32.totalorder %s251, %s253
    %p260 = scmp.eq.s32.totalorder %s33, 1
    %p261 = por %p259, %p260
    %p262 = scmp.ne.s32.totalorder %s253, %s254
    %p263 = scmp.eq.s32.totalorder %s33, 0
    %p264 = por %p262, %p263
    %p265 = scmp.ne.s32.totalorder %s253, %s254
    %p266 = scmp.eq.s32.totalorder %s34, 1
    %p267 = por %p265, %p266
    %p269 = scmp.ne.s32.totalorder %s254, %s268
    %p270 = scmp.eq.s32.totalorder %s34, 0
    %p271 = por %p269, %p270
    %s273 = sadd.s32 %s272, 1
    %p276 = scmp.eq.s32.totalorder %s28, 1
    %p277 = scmp.ne.s32.totalorder %s272, %s274
    %p278 = scmp.eq.s32.totalorder %s28, 0
    %p279 = por %p277, %p278
    %p280 = scmp.ne.s32.totalorder %s272, %s274
    %p281 = scmp.eq.s32.totalorder %s33, 1
    %p282 = por %p280, %p281
    %p283 = scmp.ne.s32.totalorder %s274, %s275
    %p284 = scmp.eq.s32.totalorder %s33, 0
    %p285 = por %p283, %p284
    %p286 = scmp.ne.s32.totalorder %s274, %s275
    %p287 = scmp.eq.s32.totalorder %s34, 1
    %p288 = por %p286, %p287
    %p290 = scmp.ne.s32.totalorder %s275, %s289
    %p291 = scmp.eq.s32.totalorder %s34, 0
    %p292 = por %p290, %p291
    %s294 = sadd.s32 %s293, 1
    %p297 = scmp.eq.s32.totalorder %s28, 1
    %p298 = scmp.ne.s32.totalorder %s293, %s295
    %p299 = scmp.eq.s32.totalorder %s28, 0
    %p300 = por %p298, %p299
    %p301 = scmp.ne.s32.totalorder %s293, %s295
    %p302 = scmp.eq.s32.totalorder %s33, 1
    %p303 = por %p301, %p302
    %p304 = scmp.ne.s32.totalorder %s295, %s296
    %p305 = scmp.eq.s32.totalorder %s33, 0
    %p306 = por %p304, %p305
    %p307 = scmp.ne.s32.totalorder %s295, %s296
    %p308 = scmp.eq.s32.totalorder %s34, 1
    %p309 = por %p307, %p308
    %p311 = scmp.ne.s32.totalorder %s296, %s310
    %p312 = scmp.eq.s32.totalorder %s34, 0
    %p313 = por %p311, %p312
    %s315 = sadd.s32 %s314, 1
    %p318 = scmp.eq.s32.totalorder %s28, 1
    %p319 = scmp.ne.s32.totalorder %s314, %s316
    %p320 = scmp.eq.s32.totalorder %s28, 0
    %p321 = por %p319, %p320
    %p322 = scmp.ne.s32.totalorder %s314, %s316
    %p323 = scmp.eq.s32.totalorder %s33, 1
    %p324 = por %p322, %p323
    %p325 = scmp.ne.s32.totalorder %s316, %s317
    %p326 = scmp.eq.s32.totalorder %s33, 0
    %p327 = por %p325, %p326
    %p328 = scmp.ne.s32.totalorder %s316, %s317
    %p329 = scmp.eq.s32.totalorder %s34, 1
    %p330 = por %p328, %p329
    %p332 = scmp.ne.s32.totalorder %s317, %s331
    %p333 = scmp.eq.s32.totalorder %s34, 0
    %p334 = por %p332, %p333
    %s336 = sadd.s32 %s335, 1
    %p339 = scmp.eq.s32.totalorder %s28, 1
    %p340 = scmp.ne.s32.totalorder %s335, %s337
    %p341 = scmp.eq.s32.totalorder %s28, 0
    %p342 = por %p340, %p341
    %p343 = scmp.ne.s32.totalorder %s335, %s337
    %p344 = scmp.eq.s32.totalorder %s33, 1
    %p345 = por %p343, %p344
    %p346 = scmp.ne.s32.totalorder %s337, %s338
    %p347 = scmp.eq.s32.totalorder %s33, 0
    %p348 = por %p346, %p347
    %p349 = scmp.ne.s32.totalorder %s337, %s338
    %p350 = scmp.eq.s32.totalorder %s34, 1
    %p351 = por %p349, %p350
    %p353 = scmp.ne.s32.totalorder %s338, %s352
    %p354 = scmp.eq.s32.totalorder %s34, 0
    %p355 = por %p353, %p354
    %s357 = sadd.s32 %s356, 1
    %p360 = scmp.eq.s32.totalorder %s28, 1
    %p361 = scmp.ne.s32.totalorder %s356, %s358
    %p362 = scmp.eq.s32.totalorder %s28, 0
    %p363 = por %p361, %p362
    %p364 = scmp.ne.s32.totalorder %s356, %s358
    %p365 = scmp.eq.s32.totalorder %s33, 1
    %p366 = por %p364, %p365
    %p367 = scmp.ne.s32.totalorder %s358, %s359
    %p368 = scmp.eq.s32.totalorder %s33, 0
    %p369 = por %p367, %p368
    %p370 = scmp.ne.s32.totalorder %s358, %s359
    %p371 = scmp.eq.s32.totalorder %s34, 1
    %p372 = por %p370, %p371
    %p374 = scmp.ne.s32.totalorder %s359, %s373
    %p375 = scmp.eq.s32.totalorder %s34, 0
    %p376 = por %p374, %p375
    %s378 = sadd.s32 %s377, 1
    %p381 = scmp.eq.s32.totalorder %s28, 1
    %p382 = scmp.ne.s32.totalorder %s377, %s379
    %p383 = scmp.eq.s32.totalorder %s28, 0
    %p384 = por %p382, %p383
    %p385 = scmp.ne.s32.totalorder %s377, %s379
    %p386 = scmp.eq.s32.totalorder %s33, 1
    %p387 = por %p385, %p386
    %p388 = scmp.ne.s32.totalorder %s379, %s380
    %p389 = scmp.eq.s32.totalorder %s33, 0
    %p390 = por %p388, %p389
    %p391 = scmp.ne.s32.totalorder %s379, %s380
    %p392 = scmp.eq.s32.totalorder %s34, 1
    %p393 = por %p391, %p392
    %p395 = scmp.ne.s32.totalorder %s380, %s394
    %p396 = scmp.eq.s32.totalorder %s34, 0
    %p397 = por %p395, %p396
    %s399 = sadd.s32 %s398, 1
    %p402 = scmp.eq.s32.totalorder %s28, 1
    %p403 = scmp.ne.s32.totalorder %s398, %s400
    %p404 = scmp.eq.s32.totalorder %s28, 0
    %p405 = por %p403, %p404
    %p406 = scmp.ne.s32.totalorder %s398, %s400
    %p407 = scmp.eq.s32.totalorder %s33, 1
    %p408 = por %p406, %p407
    %p409 = scmp.ne.s32.totalorder %s400, %s401
    %p410 = scmp.eq.s32.totalorder %s33, 0
    %p411 = por %p409, %p410
    %p412 = scmp.ne.s32.totalorder %s400, %s401
    %p413 = scmp.eq.s32.totalorder %s34, 1
    %p414 = por %p412, %p413
    %p416 = scmp.ne.s32.totalorder %s401, %s415
    %p417 = scmp.eq.s32.totalorder %s34, 0
    %p418 = por %p416, %p417
    %s420 = sadd.s32 %s419, 1
    %p423 = scmp.eq.s32.totalorder %s28, 1
    %p424 = scmp.ne.s32.totalorder %s419, %s421
    %p425 = scmp.eq.s32.totalorder %s28, 0
    %p426 = por %p424, %p425
    %p427 = scmp.ne.s32.totalorder %s419, %s421
    %p428 = scmp.eq.s32.totalorder %s33, 1
    %p429 = por %p427, %p428
    %p430 = scmp.ne.s32.totalorder %s421, %s422
    %p431 = scmp.eq.s32.totalorder %s33, 0
    %p432 = por %p430, %p431
    %p433 = scmp.ne.s32.totalorder %s421, %s422
    %p434 = scmp.eq.s32.totalorder %s34, 1
    %p435 = por %p433, %p434
    %p437 = scmp.ne.s32.totalorder %s422, %s436
    %p438 = scmp.eq.s32.totalorder %s34, 0
    %p439 = por %p437, %p438
    %s441 = sadd.s32 %s440, 1
    %p444 = scmp.eq.s32.totalorder %s28, 1
    %p445 = scmp.ne.s32.totalorder %s440, %s442
    %p446 = scmp.eq.s32.totalorder %s28, 0
    %p447 = por %p445, %p446
    %p448 = scmp.ne.s32.totalorder %s440, %s442
    %p449 = scmp.eq.s32.totalorder %s33, 1
    %p450 = por %p448, %p449
    %p451 = scmp.ne.s32.totalorder %s442, %s443
    %p452 = scmp.eq.s32.totalorder %s33, 0
    %p453 = por %p451, %p452
    %p454 = scmp.ne.s32.totalorder %s442, %s443
    %p455 = scmp.eq.s32.totalorder %s34, 1
    %p456 = por %p454, %p455
    %p458 = scmp.ne.s32.totalorder %s443, %s457
    %p459 = scmp.eq.s32.totalorder %s34, 0
    %p460 = por %p458, %p459
    %s461 = ssub.s32 %s28, %s35
    %p462 = scmp.eq.s32.totalorder %s461, 0
    %s464 = sadd.s32 %s463, 1
    %s465 = scalar_select %p462, %s463, %s464
    %p468 = pneg %p462
    %p469 = scmp.eq.s32.totalorder %s28, 1
    %p470 = por %p468, %p469
    %p471 = scmp.ne.s32.totalorder %s463, %s466
    %p472 = scmp.eq.s32.totalorder %s28, 0
    %p473 = por %p471, %p472
    %p474 = scmp.ne.s32.totalorder %s463, %s466
    %p475 = scmp.eq.s32.totalorder %s33, 1
    %p476 = por %p474, %p475
    %p477 = scmp.ne.s32.totalorder %s466, %s467
    %p478 = scmp.eq.s32.totalorder %s33, 0
    %p479 = por %p477, %p478
    %p480 = scmp.ne.s32.totalorder %s466, %s467
    %p481 = scmp.eq.s32.totalorder %s34, 1
    %p482 = por %p480, %p481
    %p484 = scmp.ne.s32.totalorder %s467, %s483
    %p485 = scmp.eq.s32.totalorder %s34, 0
    %p486 = por %p484, %p485
    %s487 = ssub.s32 %s28, %s35
    %p488 = scmp.eq.s32.totalorder %s487, 0
    %s490 = sadd.s32 %s489, 1
    %s491 = scalar_select %p488, %s489, %s490
    %p494 = pneg %p488
    %p495 = scmp.eq.s32.totalorder %s28, 1
    %p496 = por %p494, %p495
    %p497 = scmp.ne.s32.totalorder %s489, %s492
    %p498 = scmp.eq.s32.totalorder %s28, 0
    %p499 = por %p497, %p498
    %p500 = scmp.ne.s32.totalorder %s489, %s492
    %p501 = scmp.eq.s32.totalorder %s33, 1
    %p502 = por %p500, %p501
    %p503 = scmp.ne.s32.totalorder %s492, %s493
    %p504 = scmp.eq.s32.totalorder %s33, 0
    %p505 = por %p503, %p504
    %p506 = scmp.ne.s32.totalorder %s492, %s493
    %p507 = scmp.eq.s32.totalorder %s34, 1
    %p508 = por %p506, %p507
    %p510 = scmp.ne.s32.totalorder %s493, %s509
    %p511 = scmp.eq.s32.totalorder %s34, 0
    %p512 = por %p510, %p511
    %p513 = scmp.le.s32.totalorder 1, %s28
    %p514 = scmp.lt.s32.totalorder %s28, 3
    %p515 = pnand %p513, %p514
    %p516 = pneg %p515
    // Predicated region
    $region9: #{dgtrack_forward.1} parent=5 // pred_check
      _
    $region10: #{dgtrack_forward.1} parent=5 // pred_check_branch
      %518 = sbr.rel (%p515) target = $region12
    $region11: #{dgtrack_forward.1} parent=5 // pred_region
      %s519 = ssub.s32 %s28, 1
      // Predicated region
      $region13: #{dgtrack_forward.1} parent=11 // pred_check
        %p520 = pneg %p75
      $region14: #{dgtrack_forward.1} parent=11 // pred_check_branch
        %522 = sbr.rel (%p520) target = $region16
      $region15: #{dgtrack_forward.1} parent=11 // pred_region
        _
      $region16: #{dgtrack_forward.1} parent=11 // pred_fallthru
        _
      // Predicated region
      $region17: #{dgtrack_forward.1} parent=11 // pred_check
        %p523 = pneg %p96
      $region18: #{dgtrack_forward.1} parent=11 // pred_check_branch
        %525 = sbr.rel (%p523) target = $region20
      $region19: #{dgtrack_forward.1} parent=11 // pred_region
        _
      $region20: #{dgtrack_forward.1} parent=11 // pred_fallthru
        _
      // Predicated region
      $region21: #{dgtrack_forward.1} parent=11 // pred_check
        %p526 = pneg %p117
      $region22: #{dgtrack_forward.1} parent=11 // pred_check_branch
        %528 = sbr.rel (%p526) target = $region24
      $region23: #{dgtrack_forward.1} parent=11 // pred_region
        _
      $region24: #{dgtrack_forward.1} parent=11 // pred_fallthru
        _
      // Predicated region
      $region25: #{dgtrack_forward.1} parent=11 // pred_check
        %p529 = pneg %p138
      $region26: #{dgtrack_forward.1} parent=11 // pred_check_branch
        %531 = sbr.rel (%p529) target = $region28
      $region27: #{dgtrack_forward.1} parent=11 // pred_region
        _
      $region28: #{dgtrack_forward.1} parent=11 // pred_fallthru
        _
      // Predicated region
      $region29: #{dgtrack_forward.1} parent=11 // pred_check
        %p532 = pneg %p159
      $region30: #{dgtrack_forward.1} parent=11 // pred_check_branch
        %534 = sbr.rel (%p532) target = $region32
      $region31: #{dgtrack_forward.1} parent=11 // pred_region
        _
      $region32: #{dgtrack_forward.1} parent=11 // pred_fallthru
        _
      // Predicated region
      $region33: #{dgtrack_forward.1} parent=11 // pred_check
        %p535 = pneg %p180
      $region34: #{dgtrack_forward.1} parent=11 // pred_check_branch
        %537 = sbr.rel (%p535) target = $region36
      $region35: #{dgtrack_forward.1} parent=11 // pred_region
        _
      $region36: #{dgtrack_forward.1} parent=11 // pred_fallthru
        _
      // Predicated region
      $region37: #{dgtrack_forward.1} parent=11 // pred_check
        %p538 = pneg %p201
      $region38: #{dgtrack_forward.1} parent=11 // pred_check_branch
        %540 = sbr.rel (%p538) target = $region40
      $region39: #{dgtrack_forward.1} parent=11 // pred_region
        _
      $region40: #{dgtrack_forward.1} parent=11 // pred_fallthru
        _
      // Predicated region
      $region41: #{dgtrack_forward.1} parent=11 // pred_check
        %p541 = pneg %p222
      $region42: #{dgtrack_forward.1} parent=11 // pred_check_branch
        %543 = sbr.rel (%p541) target = $region44
      $region43: #{dgtrack_forward.1} parent=11 // pred_region
        _
      $region44: #{dgtrack_forward.1} parent=11 // pred_fallthru
        _
      // Predicated region
      $region45: #{dgtrack_forward.1} parent=11 // pred_check
        %p544 = pneg %p243
      $region46: #{dgtrack_forward.1} parent=11 // pred_check_branch
        %546 = sbr.rel (%p544) target = $region48
      $region47: #{dgtrack_forward.1} parent=11 // pred_region
        _
      $region48: #{dgtrack_forward.1} parent=11 // pred_fallthru
        _
      // Predicated region
      $region49: #{dgtrack_forward.1} parent=11 // pred_check
        %p547 = pneg %p264
      $region50: #{dgtrack_forward.1} parent=11 // pred_check_branch
        %549 = sbr.rel (%p547) target = $region52
      $region51: #{dgtrack_forward.1} parent=11 // pred_region
        _
      $region52: #{dgtrack_forward.1} parent=11 // pred_fallthru
        _
      // Predicated region
      $region53: #{dgtrack_forward.1} parent=11 // pred_check
        %p550 = pneg %p285
      $region54: #{dgtrack_forward.1} parent=11 // pred_check_branch
        %552 = sbr.rel (%p550) target = $region56
      $region55: #{dgtrack_forward.1} parent=11 // pred_region
        _
      $region56: #{dgtrack_forward.1} parent=11 // pred_fallthru
        _
      // Predicated region
      $region57: #{dgtrack_forward.1} parent=11 // pred_check
        %p553 = pneg %p306
      $region58: #{dgtrack_forward.1} parent=11 // pred_check_branch
        %555 = sbr.rel (%p553) target = $region60
      $region59: #{dgtrack_forward.1} parent=11 // pred_region
        _
      $region60: #{dgtrack_forward.1} parent=11 // pred_fallthru
        _
      // Predicated region
      $region61: #{dgtrack_forward.1} parent=11 // pred_check
        %p556 = pneg %p327
      $region62: #{dgtrack_forward.1} parent=11 // pred_check_branch
        %558 = sbr.rel (%p556) target = $region64
      $region63: #{dgtrack_forward.1} parent=11 // pred_region
        _
      $region64: #{dgtrack_forward.1} parent=11 // pred_fallthru
        _
      // Predicated region
      $region65: #{dgtrack_forward.1} parent=11 // pred_check
        %p559 = pneg %p348
      $region66: #{dgtrack_forward.1} parent=11 // pred_check_branch
        %561 = sbr.rel (%p559) target = $region68
      $region67: #{dgtrack_forward.1} parent=11 // pred_region
        _
      $region68: #{dgtrack_forward.1} parent=11 // pred_fallthru
        _
      // Predicated region
      $region69: #{dgtrack_forward.1} parent=11 // pred_check
        %p562 = pneg %p369
      $region70: #{dgtrack_forward.1} parent=11 // pred_check_branch
        %564 = sbr.rel (%p562) target = $region72
      $region71: #{dgtrack_forward.1} parent=11 // pred_region
        _
      $region72: #{dgtrack_forward.1} parent=11 // pred_fallthru
        _
      // Predicated region
      $region73: #{dgtrack_forward.1} parent=11 // pred_check
        %p565 = pneg %p390
      $region74: #{dgtrack_forward.1} parent=11 // pred_check_branch
        %567 = sbr.rel (%p565) target = $region76
      $region75: #{dgtrack_forward.1} parent=11 // pred_region
        _
      $region76: #{dgtrack_forward.1} parent=11 // pred_fallthru
        _
      // Predicated region
      $region77: #{dgtrack_forward.1} parent=11 // pred_check
        %p568 = pneg %p411
      $region78: #{dgtrack_forward.1} parent=11 // pred_check_branch
        %570 = sbr.rel (%p568) target = $region80
      $region79: #{dgtrack_forward.1} parent=11 // pred_region
        _
      $region80: #{dgtrack_forward.1} parent=11 // pred_fallthru
        _
      // Predicated region
      $region81: #{dgtrack_forward.1} parent=11 // pred_check
        %p571 = pneg %p432
      $region82: #{dgtrack_forward.1} parent=11 // pred_check_branch
        %573 = sbr.rel (%p571) target = $region84
      $region83: #{dgtrack_forward.1} parent=11 // pred_region
        _
      $region84: #{dgtrack_forward.1} parent=11 // pred_fallthru
        _
      // Predicated region
      $region85: #{dgtrack_forward.1} parent=11 // pred_check
        %p574 = pneg %p453
      $region86: #{dgtrack_forward.1} parent=11 // pred_check_branch
        %576 = sbr.rel (%p574) target = $region88
      $region87: #{dgtrack_forward.1} parent=11 // pred_region
        _
      $region88: #{dgtrack_forward.1} parent=11 // pred_fallthru
        _
    $region12: #{dgtrack_forward.1} parent=5 // pred_fallthru
      _
    %p577 = scmp.lt.s32.totalorder %s28, 2
    // Predicated region
    $region89: #{dgtrack_forward.1} parent=5 // pred_check
      %p578 = pneg %p577
    $region90: #{dgtrack_forward.1} parent=5 // pred_check_branch
      %580 = sbr.rel (%p578) target = $region92
    $region91: #{dgtrack_forward.1} parent=5 // pred_region
      // Predicated region
      $region93: #{dgtrack_forward.1} parent=91 // pred_check
        %p581 = pneg %p48
      $region94: #{dgtrack_forward.1} parent=91 // pred_check_branch
        %583 = sbr.rel (%p581) target = $region96
      $region95: #{dgtrack_forward.1} parent=91 // pred_region
        %p584 = scmp.lt.s32.totalorder %s28, 1
        %s585 = scalar_select %p584, %s28, 1
        %s586 = smul.addr %s585, 10
        %s587 = smul.addr %s586, 8
        %s588 = scalar_lea.vmem %s0, %s587
      $region96: #{dgtrack_forward.1} parent=91 // pred_fallthru
        _
    $region92: #{dgtrack_forward.1} parent=5 // pred_fallthru
      _
    %p589 = scmp.le.s32.totalorder 1, %s28
    %p590 = scmp.lt.s32.totalorder %s28, 3
    %p591 = pnand %p589, %p590
    %p592 = pneg %p591
    // Predicated region
    $region97: #{dgtrack_forward.1} parent=5 // pred_check
      _
    $region98: #{dgtrack_forward.1} parent=5 // pred_check_branch
      %594 = sbr.rel (%p591) target = $region100
    $region99: #{dgtrack_forward.1} parent=5 // pred_region
      %s595 = ssub.s32 %s28, 1
      %p596 = scmp.lt.s32.totalorder %s33, 1
      %s597 = scalar_select %p596, %s33, 1
      %s598 = smul.addr %s597, 10
      %s599 = smul.addr %s598, 8
      %s600 = scalar_lea.vmem %s0, %s599
      %p601 = pneg %p54
      %p602 = pneg %p51
      %p603 = pneg %p75
      %p604 = pneg %p72
      %p605 = pneg %p96
      %p606 = pneg %p93
      %p607 = pneg %p117
      %p608 = pneg %p114
      %p609 = pneg %p138
      %p610 = pneg %p135
      %p611 = pneg %p159
      %p612 = pneg %p156
      %p613 = pneg %p180
      %p614 = pneg %p177
      %p615 = pneg %p201
      %p616 = pneg %p198
      %p617 = pneg %p222
      %p618 = pneg %p219
      %p619 = pneg %p243
      %p620 = pneg %p240
      %p621 = pneg %p264
      %p622 = pneg %p261
      %p623 = pneg %p285
      %p624 = pneg %p282
      %p625 = pneg %p306
      %p626 = pneg %p303
      %p627 = pneg %p327
      %p628 = pneg %p324
      %p629 = pneg %p348
      %p630 = pneg %p345
      %p631 = pneg %p369
      %p632 = pneg %p366
      %p633 = pneg %p390
      %p634 = pneg %p387
      %p635 = pneg %p411
      %p636 = pneg %p408
      %p637 = pneg %p432
      %p638 = pneg %p429
      %p639 = pneg %p453
      %p640 = pneg %p450
      %p641 = pneg %p479
      %p642 = pneg %p476
      %p643 = scmp.lt.s32.totalorder %s33, 1
      %s644 = scalar_select %p643, %s33, 1
      %s645 = smul.addr %s644, 10
      %s646 = smul.addr %s645, 8
      %s647 = scalar_lea.vmem %s20, %s646
      %p648 = pneg %p505
      %p649 = pneg %p502
      %p650 = scmp.lt.s32.totalorder %s33, 1
      %s651 = scalar_select %p650, %s33, 1
      %s652 = smul.addr %s651, 8
      %s653 = smul.addr %s652, 8
      %s654 = scalar_lea.vmem %s21, %s653
      %p655 = scmp.lt.s32.totalorder %s33, 1
      %s656 = scalar_select %p655, %s33, 1
      %s657 = smul.addr %s656, 10
      %s658 = smul.addr %s657, 8
      %s659 = scalar_lea.vmem %s0, %s658
      %p660 = scmp.lt.s32.totalorder %s33, 1
      %s661 = scalar_select %p660, %s33, 1
      %s662 = smul.addr %s661, 10
      %s663 = smul.addr %s662, 8
      %s664 = scalar_lea.vmem %s20, %s663
      %p665 = scmp.lt.s32.totalorder %s33, 1
      %s666 = scalar_select %p665, %s33, 1
      %s667 = smul.addr %s666, 8
      %s668 = smul.addr %s667, 8
      %s669 = scalar_lea.vmem %s21, %s668
      %v670 = vld [vmem:[%s659] sm:$0xff]
      %v671 = vld [vmem:[%s659 + $0x8] sm:$0xff]
      %v672 = vld [vmem:[%s659 + $0x10] sm:$0xff]
      %v673 = vld [vmem:[%s659 + $0x18] sm:$0xff]
      %v674 = vld [vmem:[%s659 + $0x20] sm:$0xff]
      %v675 = vld [vmem:[%s659 + $0x28] sm:$0xff]
      %v676 = vld [vmem:[%s659 + $0x30] sm:$0xff]
      %v677 = vld [vmem:[%s659 + $0x38] sm:$0xff]
      %v678 = vld [vmem:[%s659 + $0x40] sm:$0xff]
      %v679 = vld [vmem:[%s659 + $0x48] sm:$0xff]
      %v680 = vld [vmem:[%s1] sm:$0xff]
      %v681 = vld [vmem:[%s1 + $0x8] sm:$0xff]
      %v682 = vld [vmem:[%s1 + $0x10] sm:$0xff]
      %v683 = vld [vmem:[%s1 + $0x18] sm:$0xff]
      %v684 = vld [vmem:[%s1 + $0x20] sm:$0xff]
      %v685 = vld [vmem:[%s1 + $0x28] sm:$0xff]
      %v686 = vld [vmem:[%s2] sm:$0x1]
      %v688 = vlaneseq
      %v689 = vshrl.u32 %v688, 7
      %v690 = vsub.s32 0, %v689
      %v691 = vrot.slane %v686, %v690
      %vm693 = vcmask 392192
      %v695 = vsel %vm693, %v670, 0
      %v698 = vsel %vm693, %v671, 0
      %v701 = vsel %vm693, %v672, 0
      %v704 = vsel %vm693, %v673, 0
      %v707 = vsel %vm693, %v674, 0
      %v710 = vsel %vm693, %v675, 0
      %v713 = vsel %vm693, %v676, 0
      %v716 = vsel %vm693, %v677, 0
      %v719 = vsel %vm693, %v678, 0
      %v722 = vsel %vm693, %v679, 0
      %724 = vmatprep.subr.mxu0 0.0
      %725 = vmatpush1.msra.mxu0 0.0
      %726 = vmatprep.subr.mxu0 0.0
      %727 = vmatpush1.msra.mxu0 0.0
      %728 = vmatprep.subr.mxu0 0.0
      %729 = vmatpush1.msra.mxu0 0.0
      %730 = vmatprep.subr.mxu0 0.0
      %731 = vmatpush1.msra.mxu0 0.0
      %732 = vmatprep.subr.mxu0 0.0
      %733 = vmatpush1.msra.mxu0 0.0
      %734 = vmatprep.subr.mxu0 0.0
      %735 = vmatpush1.msra.mxu0 0.0
      %736 = vmatprep.subr.mxu0 0.0
      %737 = vmatpush1.msra.mxu0 0.0
      %738 = vmatprep.subr.mxu0 0.0
      %739 = vmatpush1.msra.mxu0 0.0
      %740 = vmatprep.subr.mxu0 0.0
      %741 = vmatpush1.msra.mxu0 0.0
      %742 = vmatprep.subr.mxu0 0.0
      %743 = vmatpush1.msra.mxu0 0.0
      %744 = vmatprep.subr.mxu0 0.0
      %745 = vmatpush1.msra.mxu0 %v685
      %746 = vmatprep.subr.mxu0 0.0
      %747 = vmatpush1.msra.mxu0 %v684
      %748 = vmatprep.subr.mxu0 0.0
      %749 = vmatpush1.msra.mxu0 %v683
      %750 = vmatprep.subr.mxu0 0.0
      %751 = vmatpush1.msra.mxu0 %v682
      %752 = vmatprep.subr.mxu0 0.0
      %753 = vmatpush1.msra.mxu0 %v681
      %754 = vmatprep.subr.mxu0 0.0
      %755 = vmatpush1.msra.mxu0 %v680
      %756 = vmatprep.subr.mxu0 0.0
      %757 = vmatpush2.msra.mxu0 0.0
      %758 = vmatprep.subr.mxu0 0.0
      %759 = vmatpush2.msra.mxu0 0.0
      %760 = vmatprep.subr.mxu0 0.0
      %761 = vmatpush2.msra.mxu0 0.0
      %762 = vmatprep.subr.mxu0 0.0
      %763 = vmatpush2.msra.mxu0 0.0
      %764 = vmatprep.subr.mxu0 0.0
      %765 = vmatpush2.msra.mxu0 0.0
      %766 = vmatprep.subr.mxu0 0.0
      %767 = vmatpush2.msra.mxu0 0.0
      %768 = vmatprep.subr.mxu0 0.0
      %769 = vmatpush2.msra.mxu0 0.0
      %770 = vmatprep.subr.mxu0 0.0
      %771 = vmatpush2.msra.mxu0 0.0
      %772 = vmatprep.subr.mxu0 0.0
      %773 = vmatpush2.msra.mxu0 0.0
      %774 = vmatprep.subr.mxu0 0.0
      %775 = vmatpush2.msra.mxu0 0.0
      %776 = vmatprep.subr.mxu0 0.0
      %777 = vmatpush2.msra.mxu0 0.0
      %778 = vmatprep.subr.mxu0 0.0
      %779 = vmatpush2.msra.mxu0 0.0
      %780 = vmatprep.subr.mxu0 0.0
      %781 = vmatpush2.msra.mxu0 0.0
      %782 = vmatprep.subr.mxu0 0.0
      %783 = vmatpush2.msra.mxu0 0.0
      %784 = vmatprep.subr.mxu0 0.0
      %785 = vmatpush2.msra.mxu0 0.0
      %786 = vmatprep.subr.mxu0 0.0
      %787 = vmatpush2.msra.mxu0 0.0
      %788 = vmatprep.mubr.f32.mxu0 0.0
      %789 = vmatmul.mubr.f32.gmra.mxu0 %v695
      %v790 = vpop.f32.mrf.mxu0
      %v791 = vadd.f32 %v691, %v790
      %v792 = vpop.f32.mrf.mxu0
      %793 = vmatprep.mubr.f32.mxu0 0.0
      %794 = vmatmul.mubr.f32.gmra.mxu0 %v698
      %v795 = vpop.f32.mrf.mxu0
      %v796 = vadd.f32 %v691, %v795
      %v797 = vpop.f32.mrf.mxu0
      %798 = vmatprep.mubr.f32.mxu0 0.0
      %799 = vmatmul.mubr.f32.gmra.mxu0 %v701
      %v800 = vpop.f32.mrf.mxu0
      %v801 = vadd.f32 %v691, %v800
      %v802 = vpop.f32.mrf.mxu0
      %803 = vmatprep.mubr.f32.mxu0 0.0
      %804 = vmatmul.mubr.f32.gmra.mxu0 %v704
      %v805 = vpop.f32.mrf.mxu0
      %v806 = vadd.f32 %v691, %v805
      %v807 = vpop.f32.mrf.mxu0
      %808 = vmatprep.mubr.f32.mxu0 0.0
      %809 = vmatmul.mubr.f32.gmra.mxu0 %v707
      %v810 = vpop.f32.mrf.mxu0
      %v811 = vadd.f32 %v691, %v810
      %v812 = vpop.f32.mrf.mxu0
      %813 = vmatprep.mubr.f32.mxu0 0.0
      %814 = vmatmul.mubr.f32.gmra.mxu0 %v710
      %v815 = vpop.f32.mrf.mxu0
      %v816 = vadd.f32 %v691, %v815
      %v817 = vpop.f32.mrf.mxu0
      %818 = vmatprep.mubr.f32.mxu0 0.0
      %819 = vmatmul.mubr.f32.gmra.mxu0 %v713
      %v820 = vpop.f32.mrf.mxu0
      %v821 = vadd.f32 %v691, %v820
      %v822 = vpop.f32.mrf.mxu0
      %823 = vmatprep.mubr.f32.mxu0 0.0
      %824 = vmatmul.mubr.f32.gmra.mxu0 %v716
      %v825 = vpop.f32.mrf.mxu0
      %v826 = vadd.f32 %v691, %v825
      %v827 = vpop.f32.mrf.mxu0
      %828 = vmatprep.mubr.f32.mxu0 0.0
      %829 = vmatmul.mubr.f32.gmra.mxu0 %v719
      %v830 = vpop.f32.mrf.mxu0
      %v831 = vadd.f32 %v691, %v830
      %v832 = vpop.f32.mrf.mxu0
      %833 = vmatprep.mubr.f32.mxu0 0.0
      %834 = vmatmul.mubr.f32.gmra.mxu0 %v722
      %v835 = vpop.f32.mrf.mxu0
      %v836 = vadd.f32 %v691, %v835
      %v837 = vpop.f32.mrf.mxu0
      %838 = vdwg.mxu0
      %v839 = vld [vmem:[%s3] sm:$0xff]
      %v840 = vld [vmem:[%s3 + $0x8] sm:$0xff]
      %v841 = vld [vmem:[%s3 + $0x10] sm:$0xff]
      %v842 = vld [vmem:[%s3 + $0x18] sm:$0xff]
      %v843 = vld [vmem:[%s3 + $0x20] sm:$0xff]
      %v844 = vld [vmem:[%s3 + $0x28] sm:$0xff]
      %v845 = vld [vmem:[%s3 + $0x30] sm:$0xff]
      %v846 = vld [vmem:[%s3 + $0x38] sm:$0xff]
      %v847 = vld [vmem:[%s3 + $0x40] sm:$0xff]
      %v848 = vld [vmem:[%s3 + $0x48] sm:$0xff]
      %v849 = vadd.f32 %v791, %v839
      %v850 = vadd.f32 %v796, %v840
      %v851 = vadd.f32 %v801, %v841
      %v852 = vadd.f32 %v806, %v842
      %v853 = vadd.f32 %v811, %v843
      %v854 = vadd.f32 %v816, %v844
      %v855 = vadd.f32 %v821, %v845
      %v856 = vadd.f32 %v826, %v846
      %v857 = vadd.f32 %v831, %v847
      %v858 = vadd.f32 %v836, %v848
      %v859 = vld [vmem:[%s4] sm:$0x1]
      %v860 = vld [vmem:[%s5] sm:$0x1]
      %vm861 = vcmask 261120
      %v862 = vsel %vm861, %v849, 0.0
      %863 = vadd.xlane.f32.xlu0 %v862
      %v864 = vpop.xlane.xlu0 %863
      %v865 = vsel %vm861, %v850, 0.0
      %866 = vadd.xlane.f32.xlu0 %v865
      %v867 = vpop.xlane.xlu0 %866
      %v868 = vsel %vm861, %v851, 0.0
      %869 = vadd.xlane.f32.xlu0 %v868
      %v870 = vpop.xlane.xlu0 %869
      %v871 = vsel %vm861, %v852, 0.0
      %872 = vadd.xlane.f32.xlu0 %v871
      %v873 = vpop.xlane.xlu0 %872
      %v874 = vsel %vm861, %v853, 0.0
      %875 = vadd.xlane.f32.xlu0 %v874
      %v876 = vpop.xlane.xlu0 %875
      %v877 = vsel %vm861, %v854, 0.0
      %878 = vadd.xlane.f32.xlu0 %v877
      %v879 = vpop.xlane.xlu0 %878
      %v880 = vsel %vm861, %v855, 0.0
      %881 = vadd.xlane.f32.xlu0 %v880
      %v882 = vpop.xlane.xlu0 %881
      %v883 = vsel %vm861, %v856, 0.0
      %884 = vadd.xlane.f32.xlu0 %v883
      %v885 = vpop.xlane.xlu0 %884
      %v886 = vsel %vm861, %v857, 0.0
      %887 = vadd.xlane.f32.xlu0 %v886
      %v888 = vpop.xlane.xlu0 %887
      %v889 = vsel %vm861, %v858, 0.0
      %890 = vadd.xlane.f32.xlu0 %v889
      %v891 = vpop.xlane.xlu0 %890
      %v892 = vrcp.pop 32.0
      %v893 = vmul.f32 %v864, %v892
      %v894 = vmul.f32 %v867, %v892
      %v895 = vmul.f32 %v870, %v892
      %v896 = vmul.f32 %v873, %v892
      %v897 = vmul.f32 %v876, %v892
      %v898 = vmul.f32 %v879, %v892
      %v899 = vmul.f32 %v882, %v892
      %v900 = vmul.f32 %v885, %v892
      %v901 = vmul.f32 %v888, %v892
      %v902 = vmul.f32 %v891, %v892
      %v903 = vsub.f32 %v849, %v893
      %v904 = vsub.f32 %v850, %v894
      %v905 = vsub.f32 %v851, %v895
      %v906 = vsub.f32 %v852, %v896
      %v907 = vsub.f32 %v853, %v897
      %v908 = vsub.f32 %v854, %v898
      %v909 = vsub.f32 %v855, %v899
      %v910 = vsub.f32 %v856, %v900
      %v911 = vsub.f32 %v857, %v901
      %v912 = vsub.f32 %v858, %v902
      %v913 = vmul.f32 %v903, %v903
      %v914 = vmul.f32 %v904, %v904
      %v915 = vmul.f32 %v905, %v905
      %v916 = vmul.f32 %v906, %v906
      %v917 = vmul.f32 %v907, %v907
      %v918 = vmul.f32 %v908, %v908
      %v919 = vmul.f32 %v909, %v909
      %v920 = vmul.f32 %v910, %v910
      %v921 = vmul.f32 %v911, %v911
      %v922 = vmul.f32 %v912, %v912
      %v923 = vsel %vm861, %v913, 0.0
      %924 = vadd.xlane.f32.xlu0 %v923
      %v925 = vpop.xlane.xlu0 %924
      %v926 = vsel %vm861, %v914, 0.0
      %927 = vadd.xlane.f32.xlu0 %v926
      %v928 = vpop.xlane.xlu0 %927
      %v929 = vsel %vm861, %v915, 0.0
      %930 = vadd.xlane.f32.xlu0 %v929
      %v931 = vpop.xlane.xlu0 %930
      %v932 = vsel %vm861, %v916, 0.0
      %933 = vadd.xlane.f32.xlu0 %v932
      %v934 = vpop.xlane.xlu0 %933
      %v935 = vsel %vm861, %v917, 0.0
      %936 = vadd.xlane.f32.xlu0 %v935
      %v937 = vpop.xlane.xlu0 %936
      %v938 = vsel %vm861, %v918, 0.0
      %939 = vadd.xlane.f32.xlu0 %v938
      %v940 = vpop.xlane.xlu0 %939
      %v941 = vsel %vm861, %v919, 0.0
      %942 = vadd.xlane.f32.xlu0 %v941
      %v943 = vpop.xlane.xlu0 %942
      %v944 = vsel %vm861, %v920, 0.0
      %945 = vadd.xlane.f32.xlu0 %v944
      %v946 = vpop.xlane.xlu0 %945
      %v947 = vsel %vm861, %v921, 0.0
      %948 = vadd.xlane.f32.xlu0 %v947
      %v949 = vpop.xlane.xlu0 %948
      %v950 = vsel %vm861, %v922, 0.0
      %951 = vadd.xlane.f32.xlu0 %v950
      %v952 = vpop.xlane.xlu0 %951
      %v953 = vmul.f32 %v925, %v892
      %v954 = vmul.f32 %v928, %v892
      %v955 = vmul.f32 %v931, %v892
      %v956 = vmul.f32 %v934, %v892
      %v957 = vmul.f32 %v937, %v892
      %v958 = vmul.f32 %v940, %v892
      %v959 = vmul.f32 %v943, %v892
      %v960 = vmul.f32 %v946, %v892
      %v961 = vmul.f32 %v949, %v892
      %v962 = vmul.f32 %v952, %v892
      %v963 = vadd.f32 %v953, 1e-06
      %v964 = vadd.f32 %v954, 1e-06
      %v965 = vadd.f32 %v955, 1e-06
      %v966 = vadd.f32 %v956, 1e-06
      %v967 = vadd.f32 %v957, 1e-06
      %v968 = vadd.f32 %v958, 1e-06
      %v969 = vadd.f32 %v959, 1e-06
      %v970 = vadd.f32 %v960, 1e-06
      %v971 = vadd.f32 %v961, 1e-06
      %v972 = vadd.f32 %v962, 1e-06
      %v973 = vrsqrt.pop %v963
      %v974 = vrsqrt.pop %v964
      %v975 = vrsqrt.pop %v965
      %v976 = vrsqrt.pop %v966
      %v977 = vrsqrt.pop %v967
      %v978 = vrsqrt.pop %v968
      %v979 = vrsqrt.pop %v969
      %v980 = vrsqrt.pop %v970
      %v981 = vrsqrt.pop %v971
      %v982 = vrsqrt.pop %v972
      %v983 = vmul.f32 %v903, %v973
      %v984 = vmul.f32 %v904, %v974
      %v985 = vmul.f32 %v905, %v975
      %v986 = vmul.f32 %v906, %v976
      %v987 = vmul.f32 %v907, %v977
      %v988 = vmul.f32 %v908, %v978
      %v989 = vmul.f32 %v909, %v979
      %v990 = vmul.f32 %v910, %v980
      %v991 = vmul.f32 %v911, %v981
      %v992 = vmul.f32 %v912, %v982
      %v994 = vlaneseq
      %v995 = vshrl.u32 %v994, 7
      %v996 = vsub.s32 0, %v995
      %v997 = vrot.slane %v859, %v996
      %v999 = vmul.f32 %v983, %v997
      %v1000 = vmul.f32 %v984, %v997
      %v1001 = vmul.f32 %v985, %v997
      %v1002 = vmul.f32 %v986, %v997
      %v1003 = vmul.f32 %v987, %v997
      %v1004 = vmul.f32 %v988, %v997
      %v1005 = vmul.f32 %v989, %v997
      %v1006 = vmul.f32 %v990, %v997
      %v1007 = vmul.f32 %v991, %v997
      %v1008 = vmul.f32 %v992, %v997
      %v1010 = vlaneseq
      %v1011 = vshrl.u32 %v1010, 7
      %v1012 = vsub.s32 0, %v1011
      %v1013 = vrot.slane %v860, %v1012
      %v1015 = vadd.f32 %v999, %v1013
      %v1016 = vadd.f32 %v1000, %v1013
      %v1017 = vadd.f32 %v1001, %v1013
      %v1018 = vadd.f32 %v1002, %v1013
      %v1019 = vadd.f32 %v1003, %v1013
      %v1020 = vadd.f32 %v1004, %v1013
      %v1021 = vadd.f32 %v1005, %v1013
      %v1022 = vadd.f32 %v1006, %v1013
      %v1023 = vadd.f32 %v1007, %v1013
      %v1024 = vadd.f32 %v1008, %v1013
      %v1025 = vld [vmem:[%s6] sm:$0xff]
      %v1026 = vld [vmem:[%s6 + $0x8] sm:$0xff]
      %v1027 = vld [vmem:[%s6 + $0x10] sm:$0xff]
      %v1028 = vld [vmem:[%s6 + $0x18] sm:$0xff]
      %v1029 = vld [vmem:[%s7] sm:$0x1]
      %v1031 = vlaneseq
      %v1032 = vshrl.u32 %v1031, 7
      %v1033 = vsub.s32 0, %v1032
      %v1034 = vrot.slane %v1029, %v1033
      %v1037 = vsel %vm861, %v1015, 0
      %v1040 = vsel %vm861, %v1016, 0
      %v1043 = vsel %vm861, %v1017, 0
      %v1046 = vsel %vm861, %v1018, 0
      %v1049 = vsel %vm861, %v1019, 0
      %v1052 = vsel %vm861, %v1020, 0
      %v1055 = vsel %vm861, %v1021, 0
      %v1058 = vsel %vm861, %v1022, 0
      %v1061 = vsel %vm861, %v1023, 0
      %v1064 = vsel %vm861, %v1024, 0
      %1066 = vmatprep.subr.mxu0 0.0
      %1067 = vmatpush1.msra.mxu0 0.0
      %1068 = vmatprep.subr.mxu0 0.0
      %1069 = vmatpush1.msra.mxu0 0.0
      %1070 = vmatprep.subr.mxu0 0.0
      %1071 = vmatpush1.msra.mxu0 0.0
      %1072 = vmatprep.subr.mxu0 0.0
      %1073 = vmatpush1.msra.mxu0 0.0
      %1074 = vmatprep.subr.mxu0 0.0
      %1075 = vmatpush1.msra.mxu0 0.0
      %1076 = vmatprep.subr.mxu0 0.0
      %1077 = vmatpush1.msra.mxu0 0.0
      %1078 = vmatprep.subr.mxu0 0.0
      %1079 = vmatpush1.msra.mxu0 0.0
      %1080 = vmatprep.subr.mxu0 0.0
      %1081 = vmatpush1.msra.mxu0 0.0
      %1082 = vmatprep.subr.mxu0 0.0
      %1083 = vmatpush1.msra.mxu0 0.0
      %1084 = vmatprep.subr.mxu0 0.0
      %1085 = vmatpush1.msra.mxu0 0.0
      %1086 = vmatprep.subr.mxu0 0.0
      %1087 = vmatpush1.msra.mxu0 0.0
      %1088 = vmatprep.subr.mxu0 0.0
      %1089 = vmatpush1.msra.mxu0 0.0
      %1090 = vmatprep.subr.mxu0 0.0
      %1091 = vmatpush1.msra.mxu0 %v1028
      %1092 = vmatprep.subr.mxu0 0.0
      %1093 = vmatpush1.msra.mxu0 %v1027
      %1094 = vmatprep.subr.mxu0 0.0
      %1095 = vmatpush1.msra.mxu0 %v1026
      %1096 = vmatprep.subr.mxu0 0.0
      %1097 = vmatpush1.msra.mxu0 %v1025
      %1098 = vmatprep.subr.mxu0 0.0
      %1099 = vmatpush2.msra.mxu0 0.0
      %1100 = vmatprep.subr.mxu0 0.0
      %1101 = vmatpush2.msra.mxu0 0.0
      %1102 = vmatprep.subr.mxu0 0.0
      %1103 = vmatpush2.msra.mxu0 0.0
      %1104 = vmatprep.subr.mxu0 0.0
      %1105 = vmatpush2.msra.mxu0 0.0
      %1106 = vmatprep.subr.mxu0 0.0
      %1107 = vmatpush2.msra.mxu0 0.0
      %1108 = vmatprep.subr.mxu0 0.0
      %1109 = vmatpush2.msra.mxu0 0.0
      %1110 = vmatprep.subr.mxu0 0.0
      %1111 = vmatpush2.msra.mxu0 0.0
      %1112 = vmatprep.subr.mxu0 0.0
      %1113 = vmatpush2.msra.mxu0 0.0
      %1114 = vmatprep.subr.mxu0 0.0
      %1115 = vmatpush2.msra.mxu0 0.0
      %1116 = vmatprep.subr.mxu0 0.0
      %1117 = vmatpush2.msra.mxu0 0.0
      %1118 = vmatprep.subr.mxu0 0.0
      %1119 = vmatpush2.msra.mxu0 0.0
      %1120 = vmatprep.subr.mxu0 0.0
      %1121 = vmatpush2.msra.mxu0 0.0
      %1122 = vmatprep.subr.mxu0 0.0
      %1123 = vmatpush2.msra.mxu0 0.0
      %1124 = vmatprep.subr.mxu0 0.0
      %1125 = vmatpush2.msra.mxu0 0.0
      %1126 = vmatprep.subr.mxu0 0.0
      %1127 = vmatpush2.msra.mxu0 0.0
      %1128 = vmatprep.subr.mxu0 0.0
      %1129 = vmatpush2.msra.mxu0 0.0
      %1130 = vmatprep.mubr.f32.mxu0 0.0
      %1131 = vmatmul.mubr.f32.gmra.mxu0 %v1037
      %v1132 = vpop.f32.mrf.mxu0
      %v1133 = vadd.f32 %v1034, %v1132
      %v1134 = vpop.f32.mrf.mxu0
      %1135 = vmatprep.mubr.f32.mxu0 0.0
      %1136 = vmatmul.mubr.f32.gmra.mxu0 %v1040
      %v1137 = vpop.f32.mrf.mxu0
      %v1138 = vadd.f32 %v1034, %v1137
      %v1139 = vpop.f32.mrf.mxu0
      %1140 = vmatprep.mubr.f32.mxu0 0.0
      %1141 = vmatmul.mubr.f32.gmra.mxu0 %v1043
      %v1142 = vpop.f32.mrf.mxu0
      %v1143 = vadd.f32 %v1034, %v1142
      %v1144 = vpop.f32.mrf.mxu0
      %1145 = vmatprep.mubr.f32.mxu0 0.0
      %1146 = vmatmul.mubr.f32.gmra.mxu0 %v1046
      %v1147 = vpop.f32.mrf.mxu0
      %v1148 = vadd.f32 %v1034, %v1147
      %v1149 = vpop.f32.mrf.mxu0
      %1150 = vmatprep.mubr.f32.mxu0 0.0
      %1151 = vmatmul.mubr.f32.gmra.mxu0 %v1049
      %v1152 = vpop.f32.mrf.mxu0
      %v1153 = vadd.f32 %v1034, %v1152
      %v1154 = vpop.f32.mrf.mxu0
      %1155 = vmatprep.mubr.f32.mxu0 0.0
      %1156 = vmatmul.mubr.f32.gmra.mxu0 %v1052
      %v1157 = vpop.f32.mrf.mxu0
      %v1158 = vadd.f32 %v1034, %v1157
      %v1159 = vpop.f32.mrf.mxu0
      %1160 = vmatprep.mubr.f32.mxu0 0.0
      %1161 = vmatmul.mubr.f32.gmra.mxu0 %v1055
      %v1162 = vpop.f32.mrf.mxu0
      %v1163 = vadd.f32 %v1034, %v1162
      %v1164 = vpop.f32.mrf.mxu0
      %1165 = vmatprep.mubr.f32.mxu0 0.0
      %1166 = vmatmul.mubr.f32.gmra.mxu0 %v1058
      %v1167 = vpop.f32.mrf.mxu0
      %v1168 = vadd.f32 %v1034, %v1167
      %v1169 = vpop.f32.mrf.mxu0
      %1170 = vmatprep.mubr.f32.mxu0 0.0
      %1171 = vmatmul.mubr.f32.gmra.mxu0 %v1061
      %v1172 = vpop.f32.mrf.mxu0
      %v1173 = vadd.f32 %v1034, %v1172
      %v1174 = vpop.f32.mrf.mxu0
      %1175 = vmatprep.mubr.f32.mxu0 0.0
      %1176 = vmatmul.mubr.f32.gmra.mxu0 %v1064
      %v1177 = vpop.f32.mrf.mxu0
      %v1178 = vadd.f32 %v1034, %v1177
      %v1179 = vpop.f32.mrf.mxu0
      %1180 = vdwg.mxu0
      %v1181 = vld [vmem:[%s8] sm:$0xff]
      %v1182 = vld [vmem:[%s8 + $0x8] sm:$0xff]
      %v1183 = vld [vmem:[%s8 + $0x10] sm:$0xff]
      %v1184 = vld [vmem:[%s8 + $0x18] sm:$0xff]
      %1195 = vrot.lane.b32.xlu0 %v1133, 96
      %v1196 = vpop.permute.xlu0 %1195
      %1197 = vrot.lane.b32.xlu0 %v1138, 96
      %v1198 = vpop.permute.xlu0 %1197
      %1199 = vrot.lane.b32.xlu0 %v1143, 96
      %v1200 = vpop.permute.xlu0 %1199
      %1201 = vrot.lane.b32.xlu0 %v1148, 96
      %v1202 = vpop.permute.xlu0 %1201
      %1203 = vrot.lane.b32.xlu0 %v1153, 96
      %v1204 = vpop.permute.xlu0 %1203
      %1205 = vrot.lane.b32.xlu0 %v1158, 96
      %v1206 = vpop.permute.xlu0 %1205
      %1207 = vrot.lane.b32.xlu0 %v1163, 96
      %v1208 = vpop.permute.xlu0 %1207
      %1209 = vrot.lane.b32.xlu0 %v1168, 96
      %v1210 = vpop.permute.xlu0 %1209
      %1211 = vrot.lane.b32.xlu0 %v1173, 96
      %v1212 = vpop.permute.xlu0 %1211
      %1213 = vrot.lane.b32.xlu0 %v1178, 96
      %v1214 = vpop.permute.xlu0 %1213
      %vm1215 = vcmask 64512
      %v1216 = vsel %vm1215, %v1133, 0
      %v1218 = vsel %vm1215, %v1138, 0
      %v1220 = vsel %vm1215, %v1143, 0
      %v1222 = vsel %vm1215, %v1148, 0
      %v1224 = vsel %vm1215, %v1153, 0
      %v1226 = vsel %vm1215, %v1158, 0
      %v1228 = vsel %vm1215, %v1163, 0
      %v1230 = vsel %vm1215, %v1168, 0
      %v1232 = vsel %vm1215, %v1173, 0
      %v1234 = vsel %vm1215, %v1178, 0
      %v1236 = vsel %vm1215, %v1196, 0
      %v1238 = vsel %vm1215, %v1198, 0
      %v1240 = vsel %vm1215, %v1200, 0
      %v1242 = vsel %vm1215, %v1202, 0
      %v1244 = vsel %vm1215, %v1204, 0
      %v1246 = vsel %vm1215, %v1206, 0
      %v1248 = vsel %vm1215, %v1208, 0
      %v1250 = vsel %vm1215, %v1210, 0
      %v1252 = vsel %vm1215, %v1212, 0
      %v1254 = vsel %vm1215, %v1214, 0
      %1256 = vmatprep.subr.mxu0 0.0
      %1257 = vmatpush1.xpose.msra.mxu0 0.0
      %1258 = vmatprep.subr.mxu0 0.0
      %1259 = vmatpush1.xpose.msra.mxu0 0.0
      %1260 = vmatprep.subr.mxu0 0.0
      %1261 = vmatpush1.xpose.msra.mxu0 0.0
      %1262 = vmatprep.subr.mxu0 0.0
      %1263 = vmatpush1.xpose.msra.mxu0 0.0
      %1264 = vmatprep.subr.mxu0 0.0
      %1265 = vmatpush1.xpose.msra.mxu0 0.0
      %1266 = vmatprep.subr.mxu0 0.0
      %1267 = vmatpush1.xpose.msra.mxu0 0.0
      %1268 = vmatprep.subr.mxu0 0.0
      %1269 = vmatpush1.xpose.msra.mxu0 %v1254
      %1270 = vmatprep.subr.mxu0 0.0
      %1271 = vmatpush1.xpose.msra.mxu0 %v1252
      %1272 = vmatprep.subr.mxu0 0.0
      %1273 = vmatpush1.xpose.msra.mxu0 %v1250
      %1274 = vmatprep.subr.mxu0 0.0
      %1275 = vmatpush1.xpose.msra.mxu0 %v1248
      %1276 = vmatprep.subr.mxu0 0.0
      %1277 = vmatpush1.xpose.msra.mxu0 %v1246
      %1278 = vmatprep.subr.mxu0 0.0
      %1279 = vmatpush1.xpose.msra.mxu0 %v1244
      %1280 = vmatprep.subr.mxu0 0.0
      %1281 = vmatpush1.xpose.msra.mxu0 %v1242
      %1282 = vmatprep.subr.mxu0 0.0
      %1283 = vmatpush1.xpose.msra.mxu0 %v1240
      %1284 = vmatprep.subr.mxu0 0.0
      %1285 = vmatpush1.xpose.msra.mxu0 %v1238
      %1286 = vmatprep.subr.mxu0 0.0
      %1287 = vmatpush1.xpose.msra.mxu0 %v1236
      %1288 = vmatprep.subr.mxu0 0.0
      %1289 = vmatpush2.xpose.msra.mxu0 0.0
      %1290 = vmatprep.subr.mxu0 0.0
      %1291 = vmatpush2.xpose.msra.mxu0 0.0
      %1292 = vmatprep.subr.mxu0 0.0
      %1293 = vmatpush2.xpose.msra.mxu0 0.0
      %1294 = vmatprep.subr.mxu0 0.0
      %1295 = vmatpush2.xpose.msra.mxu0 0.0
      %1296 = vmatprep.subr.mxu0 0.0
      %1297 = vmatpush2.xpose.msra.mxu0 0.0
      %1298 = vmatprep.subr.mxu0 0.0
      %1299 = vmatpush2.xpose.msra.mxu0 0.0
      %1300 = vmatprep.subr.mxu0 0.0
      %1301 = vmatpush2.xpose.msra.mxu0 0.0
      %1302 = vmatprep.subr.mxu0 0.0
      %1303 = vmatpush2.xpose.msra.mxu0 0.0
      %1304 = vmatprep.subr.mxu0 0.0
      %1305 = vmatpush2.xpose.msra.mxu0 0.0
      %1306 = vmatprep.subr.mxu0 0.0
      %1307 = vmatpush2.xpose.msra.mxu0 0.0
      %1308 = vmatprep.subr.mxu0 0.0
      %1309 = vmatpush2.xpose.msra.mxu0 0.0
      %1310 = vmatprep.subr.mxu0 0.0
      %1311 = vmatpush2.xpose.msra.mxu0 0.0
      %1312 = vmatprep.subr.mxu0 0.0
      %1313 = vmatpush2.xpose.msra.mxu0 0.0
      %1314 = vmatprep.subr.mxu0 0.0
      %1315 = vmatpush2.xpose.msra.mxu0 0.0
      %1316 = vmatprep.subr.mxu0 0.0
      %1317 = vmatpush2.xpose.msra.mxu0 0.0
      %1318 = vmatprep.subr.mxu0 0.0
      %1319 = vmatpush2.xpose.msra.mxu0 0.0
      %1320 = vmatprep.mubr.f32.mxu0 0.0
      %1321 = vmatmul.mubr.f32.gmra.mxu0 %v1216
      %v1322 = vpop.f32.mrf.mxu0
      %v1323 = vadd.f32 0.0, %v1322
      %v1324 = vpop.f32.mrf.mxu0
      %1325 = vmatprep.mubr.f32.mxu0 0.0
      %1326 = vmatmul.mubr.f32.gmra.mxu0 %v1218
      %v1327 = vpop.f32.mrf.mxu0
      %v1328 = vadd.f32 0.0, %v1327
      %v1329 = vpop.f32.mrf.mxu0
      %1330 = vmatprep.mubr.f32.mxu0 0.0
      %1331 = vmatmul.mubr.f32.gmra.mxu0 %v1220
      %v1332 = vpop.f32.mrf.mxu0
      %v1333 = vadd.f32 0.0, %v1332
      %v1334 = vpop.f32.mrf.mxu0
      %1335 = vmatprep.mubr.f32.mxu0 0.0
      %1336 = vmatmul.mubr.f32.gmra.mxu0 %v1222
      %v1337 = vpop.f32.mrf.mxu0
      %v1338 = vadd.f32 0.0, %v1337
      %v1339 = vpop.f32.mrf.mxu0
      %1340 = vmatprep.mubr.f32.mxu0 0.0
      %1341 = vmatmul.mubr.f32.gmra.mxu0 %v1224
      %v1342 = vpop.f32.mrf.mxu0
      %v1343 = vadd.f32 0.0, %v1342
      %v1344 = vpop.f32.mrf.mxu0
      %1345 = vmatprep.mubr.f32.mxu0 0.0
      %1346 = vmatmul.mubr.f32.gmra.mxu0 %v1226
      %v1347 = vpop.f32.mrf.mxu0
      %v1348 = vadd.f32 0.0, %v1347
      %v1349 = vpop.f32.mrf.mxu0
      %1350 = vmatprep.mubr.f32.mxu0 0.0
      %1351 = vmatmul.mubr.f32.gmra.mxu0 %v1228
      %v1352 = vpop.f32.mrf.mxu0
      %v1353 = vadd.f32 0.0, %v1352
      %v1354 = vpop.f32.mrf.mxu0
      %1355 = vmatprep.mubr.f32.mxu0 0.0
      %1356 = vmatmul.mubr.f32.gmra.mxu0 %v1230
      %v1357 = vpop.f32.mrf.mxu0
      %v1358 = vadd.f32 0.0, %v1357
      %v1359 = vpop.f32.mrf.mxu0
      %1360 = vmatprep.mubr.f32.mxu0 0.0
      %1361 = vmatmul.mubr.f32.gmra.mxu0 %v1232
      %v1362 = vpop.f32.mrf.mxu0
      %v1363 = vadd.f32 0.0, %v1362
      %v1364 = vpop.f32.mrf.mxu0
      %1365 = vmatprep.mubr.f32.mxu0 0.0
      %1366 = vmatmul.mubr.f32.gmra.mxu0 %v1234
      %v1367 = vpop.f32.mrf.mxu0
      %v1368 = vadd.f32 0.0, %v1367
      %v1369 = vpop.f32.mrf.mxu0
      %1370 = vdwg.mxu0
      %v1371 = vmul.f32 %v1323, 0.35355338
      %v1372 = vmul.f32 %v1328, 0.35355338
      %v1373 = vmul.f32 %v1333, 0.35355338
      %v1374 = vmul.f32 %v1338, 0.35355338
      %v1375 = vmul.f32 %v1343, 0.35355338
      %v1376 = vmul.f32 %v1348, 0.35355338
      %v1377 = vmul.f32 %v1353, 0.35355338
      %v1378 = vmul.f32 %v1358, 0.35355338
      %v1379 = vmul.f32 %v1363, 0.35355338
      %v1380 = vmul.f32 %v1368, 0.35355338
      %vm1381 = vcmask 654336
      %v1382 = vsel %vm1381, %v1371, -inf
      %1383 = vmax.xlane.f32.xlu0 %v1382
      %v1384 = vpop.xlane.xlu0 %1383
      %v1385 = vsel %vm1381, %v1372, -inf
      %1386 = vmax.xlane.f32.xlu0 %v1385
      %v1387 = vpop.xlane.xlu0 %1386
      %v1388 = vsel %vm1381, %v1373, -inf
      %1389 = vmax.xlane.f32.xlu0 %v1388
      %v1390 = vpop.xlane.xlu0 %1389
      %v1391 = vsel %vm1381, %v1374, -inf
      %1392 = vmax.xlane.f32.xlu0 %v1391
      %v1393 = vpop.xlane.xlu0 %1392
      %v1394 = vsel %vm1381, %v1375, -inf
      %1395 = vmax.xlane.f32.xlu0 %v1394
      %v1396 = vpop.xlane.xlu0 %1395
      %v1397 = vsel %vm1381, %v1376, -inf
      %1398 = vmax.xlane.f32.xlu0 %v1397
      %v1399 = vpop.xlane.xlu0 %1398
      %v1400 = vsel %vm1381, %v1377, -inf
      %1401 = vmax.xlane.f32.xlu0 %v1400
      %v1402 = vpop.xlane.xlu0 %1401
      %v1403 = vsel %vm1381, %v1378, -inf
      %1404 = vmax.xlane.f32.xlu0 %v1403
      %v1405 = vpop.xlane.xlu0 %1404
      %v1406 = vsel %vm1381, %v1379, -inf
      %1407 = vmax.xlane.f32.xlu0 %v1406
      %v1408 = vpop.xlane.xlu0 %1407
      %v1409 = vsel %vm1381, %v1380, -inf
      %1410 = vmax.xlane.f32.xlu0 %v1409
      %v1411 = vpop.xlane.xlu0 %1410
      %v1412 = vsub.f32 %v1371, %v1384
      %v1413 = vsub.f32 %v1372, %v1387
      %v1414 = vsub.f32 %v1373, %v1390
      %v1415 = vsub.f32 %v1374, %v1393
      %v1416 = vsub.f32 %v1375, %v1396
      %v1417 = vsub.f32 %v1376, %v1399
      %v1418 = vsub.f32 %v1377, %v1402
      %v1419 = vsub.f32 %v1378, %v1405
      %v1420 = vsub.f32 %v1379, %v1408
      %v1421 = vsub.f32 %v1380, %v1411
      %v1422 = vmul.f32 %v1412, 1.442695
      %v1423 = vpow.pop %v1422
      %v1424 = vmul.f32 %v1413, 1.442695
      %v1425 = vpow.pop %v1424
      %v1426 = vmul.f32 %v1414, 1.442695
      %v1427 = vpow.pop %v1426
      %v1428 = vmul.f32 %v1415, 1.442695
      %v1429 = vpow.pop %v1428
      %v1430 = vmul.f32 %v1416, 1.442695
      %v1431 = vpow.pop %v1430
      %v1432 = vmul.f32 %v1417, 1.442695
      %v1433 = vpow.pop %v1432
      %v1434 = vmul.f32 %v1418, 1.442695
      %v1435 = vpow.pop %v1434
      %v1436 = vmul.f32 %v1419, 1.442695
      %v1437 = vpow.pop %v1436
      %v1438 = vmul.f32 %v1420, 1.442695
      %v1439 = vpow.pop %v1438
      %v1440 = vmul.f32 %v1421, 1.442695
      %v1441 = vpow.pop %v1440
      %v1442 = vsel %vm1381, %v1423, 0.0
      %1443 = vadd.xlane.f32.xlu0 %v1442
      %v1444 = vpop.xlane.xlu0 %1443
      %v1445 = vsel %vm1381, %v1425, 0.0
      %1446 = vadd.xlane.f32.xlu0 %v1445
      %v1447 = vpop.xlane.xlu0 %1446
      %v1448 = vsel %vm1381, %v1427, 0.0
      %1449 = vadd.xlane.f32.xlu0 %v1448
      %v1450 = vpop.xlane.xlu0 %1449
      %v1451 = vsel %vm1381, %v1429, 0.0
      %1452 = vadd.xlane.f32.xlu0 %v1451
      %v1453 = vpop.xlane.xlu0 %1452
      %v1454 = vsel %vm1381, %v1431, 0.0
      %1455 = vadd.xlane.f32.xlu0 %v1454
      %v1456 = vpop.xlane.xlu0 %1455
      %v1457 = vsel %vm1381, %v1433, 0.0
      %1458 = vadd.xlane.f32.xlu0 %v1457
      %v1459 = vpop.xlane.xlu0 %1458
      %v1460 = vsel %vm1381, %v1435, 0.0
      %1461 = vadd.xlane.f32.xlu0 %v1460
      %v1462 = vpop.xlane.xlu0 %1461
      %v1463 = vsel %vm1381, %v1437, 0.0
      %1464 = vadd.xlane.f32.xlu0 %v1463
      %v1465 = vpop.xlane.xlu0 %1464
      %v1466 = vsel %vm1381, %v1439, 0.0
      %1467 = vadd.xlane.f32.xlu0 %v1466
      %v1468 = vpop.xlane.xlu0 %1467
      %v1469 = vsel %vm1381, %v1441, 0.0
      %1470 = vadd.xlane.f32.xlu0 %v1469
      %v1471 = vpop.xlane.xlu0 %1470
      %v1472 = vrcp.pop %v1444
      %v1473 = vrcp.pop %v1447
      %v1474 = vrcp.pop %v1450
      %v1475 = vrcp.pop %v1453
      %v1476 = vrcp.pop %v1456
      %v1477 = vrcp.pop %v1459
      %v1478 = vrcp.pop %v1462
      %v1479 = vrcp.pop %v1465
      %v1480 = vrcp.pop %v1468
      %v1481 = vrcp.pop %v1471
      %v1482 = vmul.f32 %v1423, %v1472
      %v1483 = vmul.f32 %v1425, %v1473
      %v1484 = vmul.f32 %v1427, %v1474
      %v1485 = vmul.f32 %v1429, %v1475
      %v1486 = vmul.f32 %v1431, %v1476
      %v1487 = vmul.f32 %v1433, %v1477
      %v1488 = vmul.f32 %v1435, %v1478
      %v1489 = vmul.f32 %v1437, %v1479
      %v1490 = vmul.f32 %v1439, %v1480
      %v1491 = vmul.f32 %v1441, %v1481
      %1492 = vrot.lane.b32.xlu0 %v1133, 64
      %v1493 = vpop.permute.xlu0 %1492
      %1494 = vrot.lane.b32.xlu0 %v1138, 64
      %v1495 = vpop.permute.xlu0 %1494
      %1496 = vrot.lane.b32.xlu0 %v1143, 64
      %v1497 = vpop.permute.xlu0 %1496
      %1498 = vrot.lane.b32.xlu0 %v1148, 64
      %v1499 = vpop.permute.xlu0 %1498
      %1500 = vrot.lane.b32.xlu0 %v1153, 64
      %v1501 = vpop.permute.xlu0 %1500
      %1502 = vrot.lane.b32.xlu0 %v1158, 64
      %v1503 = vpop.permute.xlu0 %1502
      %1504 = vrot.lane.b32.xlu0 %v1163, 64
      %v1505 = vpop.permute.xlu0 %1504
      %1506 = vrot.lane.b32.xlu0 %v1168, 64
      %v1507 = vpop.permute.xlu0 %1506
      %1508 = vrot.lane.b32.xlu0 %v1173, 64
      %v1509 = vpop.permute.xlu0 %1508
      %1510 = vrot.lane.b32.xlu0 %v1178, 64
      %v1511 = vpop.permute.xlu0 %1510
      %v1523 = vsel %vm1381, %v1482, 0
      %v1526 = vsel %vm1381, %v1483, 0
      %v1529 = vsel %vm1381, %v1484, 0
      %v1532 = vsel %vm1381, %v1485, 0
      %v1535 = vsel %vm1381, %v1486, 0
      %v1538 = vsel %vm1381, %v1487, 0
      %v1541 = vsel %vm1381, %v1488, 0
      %v1544 = vsel %vm1381, %v1489, 0
      %v1547 = vsel %vm1381, %v1490, 0
      %v1550 = vsel %vm1381, %v1491, 0
      %1552 = vmatprep.subr.mxu0 0.0
      %1553 = vmatpush1.msra.mxu0 0.0
      %1554 = vmatprep.subr.mxu0 0.0
      %1555 = vmatpush1.msra.mxu0 0.0
      %1556 = vmatprep.subr.mxu0 0.0
      %1557 = vmatpush1.msra.mxu0 0.0
      %1558 = vmatprep.subr.mxu0 0.0
      %1559 = vmatpush1.msra.mxu0 0.0
      %1560 = vmatprep.subr.mxu0 0.0
      %1561 = vmatpush1.msra.mxu0 0.0
      %1562 = vmatprep.subr.mxu0 0.0
      %1563 = vmatpush1.msra.mxu0 0.0
      %1564 = vmatprep.subr.mxu0 0.0
      %1565 = vmatpush1.msra.mxu0 %v1511
      %1566 = vmatprep.subr.mxu0 0.0
      %1567 = vmatpush1.msra.mxu0 %v1509
      %1568 = vmatprep.subr.mxu0 0.0
      %1569 = vmatpush1.msra.mxu0 %v1507
      %1570 = vmatprep.subr.mxu0 0.0
      %1571 = vmatpush1.msra.mxu0 %v1505
      %1572 = vmatprep.subr.mxu0 0.0
      %1573 = vmatpush1.msra.mxu0 %v1503
      %1574 = vmatprep.subr.mxu0 0.0
      %1575 = vmatpush1.msra.mxu0 %v1501
      %1576 = vmatprep.subr.mxu0 0.0
      %1577 = vmatpush1.msra.mxu0 %v1499
      %1578 = vmatprep.subr.mxu0 0.0
      %1579 = vmatpush1.msra.mxu0 %v1497
      %1580 = vmatprep.subr.mxu0 0.0
      %1581 = vmatpush1.msra.mxu0 %v1495
      %1582 = vmatprep.subr.mxu0 0.0
      %1583 = vmatpush1.msra.mxu0 %v1493
      %1584 = vmatprep.subr.mxu0 0.0
      %1585 = vmatpush2.msra.mxu0 0.0
      %1586 = vmatprep.subr.mxu0 0.0
      %1587 = vmatpush2.msra.mxu0 0.0
      %1588 = vmatprep.subr.mxu0 0.0
      %1589 = vmatpush2.msra.mxu0 0.0
      %1590 = vmatprep.subr.mxu0 0.0
      %1591 = vmatpush2.msra.mxu0 0.0
      %1592 = vmatprep.subr.mxu0 0.0
      %1593 = vmatpush2.msra.mxu0 0.0
      %1594 = vmatprep.subr.mxu0 0.0
      %1595 = vmatpush2.msra.mxu0 0.0
      %1596 = vmatprep.subr.mxu0 0.0
      %1597 = vmatpush2.msra.mxu0 0.0
      %1598 = vmatprep.subr.mxu0 0.0
      %1599 = vmatpush2.msra.mxu0 0.0
      %1600 = vmatprep.subr.mxu0 0.0
      %1601 = vmatpush2.msra.mxu0 0.0
      %1602 = vmatprep.subr.mxu0 0.0
      %1603 = vmatpush2.msra.mxu0 0.0
      %1604 = vmatprep.subr.mxu0 0.0
      %1605 = vmatpush2.msra.mxu0 0.0
      %1606 = vmatprep.subr.mxu0 0.0
      %1607 = vmatpush2.msra.mxu0 0.0
      %1608 = vmatprep.subr.mxu0 0.0
      %1609 = vmatpush2.msra.mxu0 0.0
      %1610 = vmatprep.subr.mxu0 0.0
      %1611 = vmatpush2.msra.mxu0 0.0
      %1612 = vmatprep.subr.mxu0 0.0
      %1613 = vmatpush2.msra.mxu0 0.0
      %1614 = vmatprep.subr.mxu0 0.0
      %1615 = vmatpush2.msra.mxu0 0.0
      %1616 = vmatprep.mubr.f32.mxu0 0.0
      %1617 = vmatmul.mubr.f32.gmra.mxu0 %v1523
      %v1618 = vpop.f32.mrf.mxu0
      %v1619 = vadd.f32 0.0, %v1618
      %v1620 = vpop.f32.mrf.mxu0
      %1621 = vmatprep.mubr.f32.mxu0 0.0
      %1622 = vmatmul.mubr.f32.gmra.mxu0 %v1526
      %v1623 = vpop.f32.mrf.mxu0
      %v1624 = vadd.f32 0.0, %v1623
      %v1625 = vpop.f32.mrf.mxu0
      %1626 = vmatprep.mubr.f32.mxu0 0.0
      %1627 = vmatmul.mubr.f32.gmra.mxu0 %v1529
      %v1628 = vpop.f32.mrf.mxu0
      %v1629 = vadd.f32 0.0, %v1628
      %v1630 = vpop.f32.mrf.mxu0
      %1631 = vmatprep.mubr.f32.mxu0 0.0
      %1632 = vmatmul.mubr.f32.gmra.mxu0 %v1532
      %v1633 = vpop.f32.mrf.mxu0
      %v1634 = vadd.f32 0.0, %v1633
      %v1635 = vpop.f32.mrf.mxu0
      %1636 = vmatprep.mubr.f32.mxu0 0.0
      %1637 = vmatmul.mubr.f32.gmra.mxu0 %v1535
      %v1638 = vpop.f32.mrf.mxu0
      %v1639 = vadd.f32 0.0, %v1638
      %v1640 = vpop.f32.mrf.mxu0
      %1641 = vmatprep.mubr.f32.mxu0 0.0
      %1642 = vmatmul.mubr.f32.gmra.mxu0 %v1538
      %v1643 = vpop.f32.mrf.mxu0
      %v1644 = vadd.f32 0.0, %v1643
      %v1645 = vpop.f32.mrf.mxu0
      %1646 = vmatprep.mubr.f32.mxu0 0.0
      %1647 = vmatmul.mubr.f32.gmra.mxu0 %v1541
      %v1648 = vpop.f32.mrf.mxu0
      %v1649 = vadd.f32 0.0, %v1648
      %v1650 = vpop.f32.mrf.mxu0
      %1651 = vmatprep.mubr.f32.mxu0 0.0
      %1652 = vmatmul.mubr.f32.gmra.mxu0 %v1544
      %v1653 = vpop.f32.mrf.mxu0
      %v1654 = vadd.f32 0.0, %v1653
      %v1655 = vpop.f32.mrf.mxu0
      %1656 = vmatprep.mubr.f32.mxu0 0.0
      %1657 = vmatmul.mubr.f32.gmra.mxu0 %v1547
      %v1658 = vpop.f32.mrf.mxu0
      %v1659 = vadd.f32 0.0, %v1658
      %v1660 = vpop.f32.mrf.mxu0
      %1661 = vmatprep.mubr.f32.mxu0 0.0
      %1662 = vmatmul.mubr.f32.gmra.mxu0 %v1550
      %v1663 = vpop.f32.mrf.mxu0
      %v1664 = vadd.f32 0.0, %v1663
      %v1665 = vpop.f32.mrf.mxu0
      %1666 = vdwg.mxu0
      %1667 = vrot.lane.b32.xlu0 %v1133, 120
      %v1668 = vpop.permute.xlu0 %1667
      %1669 = vrot.lane.b32.xlu0 %v1138, 120
      %v1670 = vpop.permute.xlu0 %1669
      %1671 = vrot.lane.b32.xlu0 %v1143, 120
      %v1672 = vpop.permute.xlu0 %1671
      %1673 = vrot.lane.b32.xlu0 %v1148, 120
      %v1674 = vpop.permute.xlu0 %1673
      %1675 = vrot.lane.b32.xlu0 %v1153, 120
      %v1676 = vpop.permute.xlu0 %1675
      %1677 = vrot.lane.b32.xlu0 %v1158, 120
      %v1678 = vpop.permute.xlu0 %1677
      %1679 = vrot.lane.b32.xlu0 %v1163, 120
      %v1680 = vpop.permute.xlu0 %1679
      %1681 = vrot.lane.b32.xlu0 %v1168, 120
      %v1682 = vpop.permute.xlu0 %1681
      %1683 = vrot.lane.b32.xlu0 %v1173, 120
      %v1684 = vpop.permute.xlu0 %1683
      %1685 = vrot.lane.b32.xlu0 %v1178, 120
      %v1686 = vpop.permute.xlu0 %1685
      %1687 = vrot.lane.b32.xlu0 %v1133, 88
      %v1688 = vpop.permute.xlu0 %1687
      %1689 = vrot.lane.b32.xlu0 %v1138, 88
      %v1690 = vpop.permute.xlu0 %1689
      %1691 = vrot.lane.b32.xlu0 %v1143, 88
      %v1692 = vpop.permute.xlu0 %1691
      %1693 = vrot.lane.b32.xlu0 %v1148, 88
      %v1694 = vpop.permute.xlu0 %1693
      %1695 = vrot.lane.b32.xlu0 %v1153, 88
      %v1696 = vpop.permute.xlu0 %1695
      %1697 = vrot.lane.b32.xlu0 %v1158, 88
      %v1698 = vpop.permute.xlu0 %1697
      %1699 = vrot.lane.b32.xlu0 %v1163, 88
      %v1700 = vpop.permute.xlu0 %1699
      %1701 = vrot.lane.b32.xlu0 %v1168, 88
      %v1702 = vpop.permute.xlu0 %1701
      %1703 = vrot.lane.b32.xlu0 %v1173, 88
      %v1704 = vpop.permute.xlu0 %1703
      %1705 = vrot.lane.b32.xlu0 %v1178, 88
      %v1706 = vpop.permute.xlu0 %1705
      %v1707 = vsel %vm1215, %v1668, 0
      %v1709 = vsel %vm1215, %v1670, 0
      %v1711 = vsel %vm1215, %v1672, 0
      %v1713 = vsel %vm1215, %v1674, 0
      %v1715 = vsel %vm1215, %v1676, 0
      %v1717 = vsel %vm1215, %v1678, 0
      %v1719 = vsel %vm1215, %v1680, 0
      %v1721 = vsel %vm1215, %v1682, 0
      %v1723 = vsel %vm1215, %v1684, 0
      %v1725 = vsel %vm1215, %v1686, 0
      %v1727 = vsel %vm1215, %v1688, 0
      %v1729 = vsel %vm1215, %v1690, 0
      %v1731 = vsel %vm1215, %v1692, 0
      %v1733 = vsel %vm1215, %v1694, 0
      %v1735 = vsel %vm1215, %v1696, 0
      %v1737 = vsel %vm1215, %v1698, 0
      %v1739 = vsel %vm1215, %v1700, 0
      %v1741 = vsel %vm1215, %v1702, 0
      %v1743 = vsel %vm1215, %v1704, 0
      %v1745 = vsel %vm1215, %v1706, 0
      %1747 = vmatprep.subr.mxu0 0.0
      %1748 = vmatpush1.xpose.msra.mxu0 0.0
      %1749 = vmatprep.subr.mxu0 0.0
      %1750 = vmatpush1.xpose.msra.mxu0 0.0
      %1751 = vmatprep.subr.mxu0 0.0
      %1752 = vmatpush1.xpose.msra.mxu0 0.0
      %1753 = vmatprep.subr.mxu0 0.0
      %1754 = vmatpush1.xpose.msra.mxu0 0.0
      %1755 = vmatprep.subr.mxu0 0.0
      %1756 = vmatpush1.xpose.msra.mxu0 0.0
      %1757 = vmatprep.subr.mxu0 0.0
      %1758 = vmatpush1.xpose.msra.mxu0 0.0
      %1759 = vmatprep.subr.mxu0 0.0
      %1760 = vmatpush1.xpose.msra.mxu0 %v1745
      %1761 = vmatprep.subr.mxu0 0.0
      %1762 = vmatpush1.xpose.msra.mxu0 %v1743
      %1763 = vmatprep.subr.mxu0 0.0
      %1764 = vmatpush1.xpose.msra.mxu0 %v1741
      %1765 = vmatprep.subr.mxu0 0.0
      %1766 = vmatpush1.xpose.msra.mxu0 %v1739
      %1767 = vmatprep.subr.mxu0 0.0
      %1768 = vmatpush1.xpose.msra.mxu0 %v1737
      %1769 = vmatprep.subr.mxu0 0.0
      %1770 = vmatpush1.xpose.msra.mxu0 %v1735
      %1771 = vmatprep.subr.mxu0 0.0
      %1772 = vmatpush1.xpose.msra.mxu0 %v1733
      %1773 = vmatprep.subr.mxu0 0.0
      %1774 = vmatpush1.xpose.msra.mxu0 %v1731
      %1775 = vmatprep.subr.mxu0 0.0
      %1776 = vmatpush1.xpose.msra.mxu0 %v1729
      %1777 = vmatprep.subr.mxu0 0.0
      %1778 = vmatpush1.xpose.msra.mxu0 %v1727
      %1779 = vmatprep.subr.mxu0 0.0
      %1780 = vmatpush2.xpose.msra.mxu0 0.0
      %1781 = vmatprep.subr.mxu0 0.0
      %1782 = vmatpush2.xpose.msra.mxu0 0.0
      %1783 = vmatprep.subr.mxu0 0.0
      %1784 = vmatpush2.xpose.msra.mxu0 0.0
      %1785 = vmatprep.subr.mxu0 0.0
      %1786 = vmatpush2.xpose.msra.mxu0 0.0
      %1787 = vmatprep.subr.mxu0 0.0
      %1788 = vmatpush2.xpose.msra.mxu0 0.0
      %1789 = vmatprep.subr.mxu0 0.0
      %1790 = vmatpush2.xpose.msra.mxu0 0.0
      %1791 = vmatprep.subr.mxu0 0.0
      %1792 = vmatpush2.xpose.msra.mxu0 0.0
      %1793 = vmatprep.subr.mxu0 0.0
      %1794 = vmatpush2.xpose.msra.mxu0 0.0
      %1795 = vmatprep.subr.mxu0 0.0
      %1796 = vmatpush2.xpose.msra.mxu0 0.0
      %1797 = vmatprep.subr.mxu0 0.0
      %1798 = vmatpush2.xpose.msra.mxu0 0.0
      %1799 = vmatprep.subr.mxu0 0.0
      %1800 = vmatpush2.xpose.msra.mxu0 0.0
      %1801 = vmatprep.subr.mxu0 0.0
      %1802 = vmatpush2.xpose.msra.mxu0 0.0
      %1803 = vmatprep.subr.mxu0 0.0
      %1804 = vmatpush2.xpose.msra.mxu0 0.0
      %1805 = vmatprep.subr.mxu0 0.0
      %1806 = vmatpush2.xpose.msra.mxu0 0.0
      %1807 = vmatprep.subr.mxu0 0.0
      %1808 = vmatpush2.xpose.msra.mxu0 0.0
      %1809 = vmatprep.subr.mxu0 0.0
      %1810 = vmatpush2.xpose.msra.mxu0 0.0
      %1811 = vmatprep.mubr.f32.mxu0 0.0
      %1812 = vmatmul.mubr.f32.gmra.mxu0 %v1707
      %v1813 = vpop.f32.mrf.mxu0
      %v1814 = vadd.f32 0.0, %v1813
      %v1815 = vpop.f32.mrf.mxu0
      %1816 = vmatprep.mubr.f32.mxu0 0.0
      %1817 = vmatmul.mubr.f32.gmra.mxu0 %v1709
      %v1818 = vpop.f32.mrf.mxu0
      %v1819 = vadd.f32 0.0, %v1818
      %v1820 = vpop.f32.mrf.mxu0
      %1821 = vmatprep.mubr.f32.mxu0 0.0
      %1822 = vmatmul.mubr.f32.gmra.mxu0 %v1711
      %v1823 = vpop.f32.mrf.mxu0
      %v1824 = vadd.f32 0.0, %v1823
      %v1825 = vpop.f32.mrf.mxu0
      %1826 = vmatprep.mubr.f32.mxu0 0.0
      %1827 = vmatmul.mubr.f32.gmra.mxu0 %v1713
      %v1828 = vpop.f32.mrf.mxu0
      %v1829 = vadd.f32 0.0, %v1828
      %v1830 = vpop.f32.mrf.mxu0
      %1831 = vmatprep.mubr.f32.mxu0 0.0
      %1832 = vmatmul.mubr.f32.gmra.mxu0 %v1715
      %v1833 = vpop.f32.mrf.mxu0
      %v1834 = vadd.f32 0.0, %v1833
      %v1835 = vpop.f32.mrf.mxu0
      %1836 = vmatprep.mubr.f32.mxu0 0.0
      %1837 = vmatmul.mubr.f32.gmra.mxu0 %v1717
      %v1838 = vpop.f32.mrf.mxu0
      %v1839 = vadd.f32 0.0, %v1838
      %v1840 = vpop.f32.mrf.mxu0
      %1841 = vmatprep.mubr.f32.mxu0 0.0
      %1842 = vmatmul.mubr.f32.gmra.mxu0 %v1719
      %v1843 = vpop.f32.mrf.mxu0
      %v1844 = vadd.f32 0.0, %v1843
      %v1845 = vpop.f32.mrf.mxu0
      %1846 = vmatprep.mubr.f32.mxu0 0.0
      %1847 = vmatmul.mubr.f32.gmra.mxu0 %v1721
      %v1848 = vpop.f32.mrf.mxu0
      %v1849 = vadd.f32 0.0, %v1848
      %v1850 = vpop.f32.mrf.mxu0
      %1851 = vmatprep.mubr.f32.mxu0 0.0
      %1852 = vmatmul.mubr.f32.gmra.mxu0 %v1723
      %v1853 = vpop.f32.mrf.mxu0
      %v1854 = vadd.f32 0.0, %v1853
      %v1855 = vpop.f32.mrf.mxu0
      %1856 = vmatprep.mubr.f32.mxu0 0.0
      %1857 = vmatmul.mubr.f32.gmra.mxu0 %v1725
      %v1858 = vpop.f32.mrf.mxu0
      %v1859 = vadd.f32 0.0, %v1858
      %v1860 = vpop.f32.mrf.mxu0
      %1861 = vdwg.mxu0
      %v1862 = vmul.f32 %v1814, 0.35355338
      %v1863 = vmul.f32 %v1819, 0.35355338
      %v1864 = vmul.f32 %v1824, 0.35355338
      %v1865 = vmul.f32 %v1829, 0.35355338
      %v1866 = vmul.f32 %v1834, 0.35355338
      %v1867 = vmul.f32 %v1839, 0.35355338
      %v1868 = vmul.f32 %v1844, 0.35355338
      %v1869 = vmul.f32 %v1849, 0.35355338
      %v1870 = vmul.f32 %v1854, 0.35355338
      %v1871 = vmul.f32 %v1859, 0.35355338
      %v1872 = vsel %vm1381, %v1862, -inf
      %1873 = vmax.xlane.f32.xlu0 %v1872
      %v1874 = vpop.xlane.xlu0 %1873
      %v1875 = vsel %vm1381, %v1863, -inf
      %1876 = vmax.xlane.f32.xlu0 %v1875
      %v1877 = vpop.xlane.xlu0 %1876
      %v1878 = vsel %vm1381, %v1864, -inf
      %1879 = vmax.xlane.f32.xlu0 %v1878
      %v1880 = vpop.xlane.xlu0 %1879
      %v1881 = vsel %vm1381, %v1865, -inf
      %1882 = vmax.xlane.f32.xlu0 %v1881
      %v1883 = vpop.xlane.xlu0 %1882
      %v1884 = vsel %vm1381, %v1866, -inf
      %1885 = vmax.xlane.f32.xlu0 %v1884
      %v1886 = vpop.xlane.xlu0 %1885
      %v1887 = vsel %vm1381, %v1867, -inf
      %1888 = vmax.xlane.f32.xlu0 %v1887
      %v1889 = vpop.xlane.xlu0 %1888
      %v1890 = vsel %vm1381, %v1868, -inf
      %1891 = vmax.xlane.f32.xlu0 %v1890
      %v1892 = vpop.xlane.xlu0 %1891
      %v1893 = vsel %vm1381, %v1869, -inf
      %1894 = vmax.xlane.f32.xlu0 %v1893
      %v1895 = vpop.xlane.xlu0 %1894
      %v1896 = vsel %vm1381, %v1870, -inf
      %1897 = vmax.xlane.f32.xlu0 %v1896
      %v1898 = vpop.xlane.xlu0 %1897
      %v1899 = vsel %vm1381, %v1871, -inf
      %1900 = vmax.xlane.f32.xlu0 %v1899
      %v1901 = vpop.xlane.xlu0 %1900
      %v1902 = vsub.f32 %v1862, %v1874
      %v1903 = vsub.f32 %v1863, %v1877
      %v1904 = vsub.f32 %v1864, %v1880
      %v1905 = vsub.f32 %v1865, %v1883
      %v1906 = vsub.f32 %v1866, %v1886
      %v1907 = vsub.f32 %v1867, %v1889
      %v1908 = vsub.f32 %v1868, %v1892
      %v1909 = vsub.f32 %v1869, %v1895
      %v1910 = vsub.f32 %v1870, %v1898
      %v1911 = vsub.f32 %v1871, %v1901
      %v1912 = vmul.f32 %v1902, 1.442695
      %v1913 = vpow.pop %v1912
      %v1914 = vmul.f32 %v1903, 1.442695
      %v1915 = vpow.pop %v1914
      %v1916 = vmul.f32 %v1904, 1.442695
      %v1917 = vpow.pop %v1916
      %v1918 = vmul.f32 %v1905, 1.442695
      %v1919 = vpow.pop %v1918
      %v1920 = vmul.f32 %v1906, 1.442695
      %v1921 = vpow.pop %v1920
      %v1922 = vmul.f32 %v1907, 1.442695
      %v1923 = vpow.pop %v1922
      %v1924 = vmul.f32 %v1908, 1.442695
      %v1925 = vpow.pop %v1924
      %v1926 = vmul.f32 %v1909, 1.442695
      %v1927 = vpow.pop %v1926
      %v1928 = vmul.f32 %v1910, 1.442695
      %v1929 = vpow.pop %v1928
      %v1930 = vmul.f32 %v1911, 1.442695
      %v1931 = vpow.pop %v1930
      %v1932 = vsel %vm1381, %v1913, 0.0
      %1933 = vadd.xlane.f32.xlu0 %v1932
      %v1934 = vpop.xlane.xlu0 %1933
      %v1935 = vsel %vm1381, %v1915, 0.0
      %1936 = vadd.xlane.f32.xlu0 %v1935
      %v1937 = vpop.xlane.xlu0 %1936
      %v1938 = vsel %vm1381, %v1917, 0.0
      %1939 = vadd.xlane.f32.xlu0 %v1938
      %v1940 = vpop.xlane.xlu0 %1939
      %v1941 = vsel %vm1381, %v1919, 0.0
      %1942 = vadd.xlane.f32.xlu0 %v1941
      %v1943 = vpop.xlane.xlu0 %1942
      %v1944 = vsel %vm1381, %v1921, 0.0
      %1945 = vadd.xlane.f32.xlu0 %v1944
      %v1946 = vpop.xlane.xlu0 %1945
      %v1947 = vsel %vm1381, %v1923, 0.0
      %1948 = vadd.xlane.f32.xlu0 %v1947
      %v1949 = vpop.xlane.xlu0 %1948
      %v1950 = vsel %vm1381, %v1925, 0.0
      %1951 = vadd.xlane.f32.xlu0 %v1950
      %v1952 = vpop.xlane.xlu0 %1951
      %v1953 = vsel %vm1381, %v1927, 0.0
      %1954 = vadd.xlane.f32.xlu0 %v1953
      %v1955 = vpop.xlane.xlu0 %1954
      %v1956 = vsel %vm1381, %v1929, 0.0
      %1957 = vadd.xlane.f32.xlu0 %v1956
      %v1958 = vpop.xlane.xlu0 %1957
      %v1959 = vsel %vm1381, %v1931, 0.0
      %1960 = vadd.xlane.f32.xlu0 %v1959
      %v1961 = vpop.xlane.xlu0 %1960
      %v1962 = vrcp.pop %v1934
      %v1963 = vrcp.pop %v1937
      %v1964 = vrcp.pop %v1940
      %v1965 = vrcp.pop %v1943
      %v1966 = vrcp.pop %v1946
      %v1967 = vrcp.pop %v1949
      %v1968 = vrcp.pop %v1952
      %v1969 = vrcp.pop %v1955
      %v1970 = vrcp.pop %v1958
      %v1971 = vrcp.pop %v1961
      %v1972 = vmul.f32 %v1913, %v1962
      %v1973 = vmul.f32 %v1915, %v1963
      %v1974 = vmul.f32 %v1917, %v1964
      %v1975 = vmul.f32 %v1919, %v1965
      %v1976 = vmul.f32 %v1921, %v1966
      %v1977 = vmul.f32 %v1923, %v1967
      %v1978 = vmul.f32 %v1925, %v1968
      %v1979 = vmul.f32 %v1927, %v1969
      %v1980 = vmul.f32 %v1929, %v1970
      %v1981 = vmul.f32 %v1931, %v1971
      %1982 = vrot.lane.b32.xlu0 %v1133, 56
      %v1983 = vpop.permute.xlu0 %1982
      %1984 = vrot.lane.b32.xlu0 %v1138, 56
      %v1985 = vpop.permute.xlu0 %1984
      %1986 = vrot.lane.b32.xlu0 %v1143, 56
      %v1987 = vpop.permute.xlu0 %1986
      %1988 = vrot.lane.b32.xlu0 %v1148, 56
      %v1989 = vpop.permute.xlu0 %1988
      %1990 = vrot.lane.b32.xlu0 %v1153, 56
      %v1991 = vpop.permute.xlu0 %1990
      %1992 = vrot.lane.b32.xlu0 %v1158, 56
      %v1993 = vpop.permute.xlu0 %1992
      %1994 = vrot.lane.b32.xlu0 %v1163, 56
      %v1995 = vpop.permute.xlu0 %1994
      %1996 = vrot.lane.b32.xlu0 %v1168, 56
      %v1997 = vpop.permute.xlu0 %1996
      %1998 = vrot.lane.b32.xlu0 %v1173, 56
      %v1999 = vpop.permute.xlu0 %1998
      %2000 = vrot.lane.b32.xlu0 %v1178, 56
      %v2001 = vpop.permute.xlu0 %2000
      %v2013 = vsel %vm1381, %v1972, 0
      %v2016 = vsel %vm1381, %v1973, 0
      %v2019 = vsel %vm1381, %v1974, 0
      %v2022 = vsel %vm1381, %v1975, 0
      %v2025 = vsel %vm1381, %v1976, 0
      %v2028 = vsel %vm1381, %v1977, 0
      %v2031 = vsel %vm1381, %v1978, 0
      %v2034 = vsel %vm1381, %v1979, 0
      %v2037 = vsel %vm1381, %v1980, 0
      %v2040 = vsel %vm1381, %v1981, 0
      %2042 = vmatprep.subr.mxu0 0.0
      %2043 = vmatpush1.msra.mxu0 0.0
      %2044 = vmatprep.subr.mxu0 0.0
      %2045 = vmatpush1.msra.mxu0 0.0
      %2046 = vmatprep.subr.mxu0 0.0
      %2047 = vmatpush1.msra.mxu0 0.0
      %2048 = vmatprep.subr.mxu0 0.0
      %2049 = vmatpush1.msra.mxu0 0.0
      %2050 = vmatprep.subr.mxu0 0.0
      %2051 = vmatpush1.msra.mxu0 0.0
      %2052 = vmatprep.subr.mxu0 0.0
      %2053 = vmatpush1.msra.mxu0 0.0
      %2054 = vmatprep.subr.mxu0 0.0
      %2055 = vmatpush1.msra.mxu0 %v2001
      %2056 = vmatprep.subr.mxu0 0.0
      %2057 = vmatpush1.msra.mxu0 %v1999
      %2058 = vmatprep.subr.mxu0 0.0
      %2059 = vmatpush1.msra.mxu0 %v1997
      %2060 = vmatprep.subr.mxu0 0.0
      %2061 = vmatpush1.msra.mxu0 %v1995
      %2062 = vmatprep.subr.mxu0 0.0
      %2063 = vmatpush1.msra.mxu0 %v1993
      %2064 = vmatprep.subr.mxu0 0.0
      %2065 = vmatpush1.msra.mxu0 %v1991
      %2066 = vmatprep.subr.mxu0 0.0
      %2067 = vmatpush1.msra.mxu0 %v1989
      %2068 = vmatprep.subr.mxu0 0.0
      %2069 = vmatpush1.msra.mxu0 %v1987
      %2070 = vmatprep.subr.mxu0 0.0
      %2071 = vmatpush1.msra.mxu0 %v1985
      %2072 = vmatprep.subr.mxu0 0.0
      %2073 = vmatpush1.msra.mxu0 %v1983
      %2074 = vmatprep.subr.mxu0 0.0
      %2075 = vmatpush2.msra.mxu0 0.0
      %2076 = vmatprep.subr.mxu0 0.0
      %2077 = vmatpush2.msra.mxu0 0.0
      %2078 = vmatprep.subr.mxu0 0.0
      %2079 = vmatpush2.msra.mxu0 0.0
      %2080 = vmatprep.subr.mxu0 0.0
      %2081 = vmatpush2.msra.mxu0 0.0
      %2082 = vmatprep.subr.mxu0 0.0
      %2083 = vmatpush2.msra.mxu0 0.0
      %2084 = vmatprep.subr.mxu0 0.0
      %2085 = vmatpush2.msra.mxu0 0.0
      %2086 = vmatprep.subr.mxu0 0.0
      %2087 = vmatpush2.msra.mxu0 0.0
      %2088 = vmatprep.subr.mxu0 0.0
      %2089 = vmatpush2.msra.mxu0 0.0
      %2090 = vmatprep.subr.mxu0 0.0
      %2091 = vmatpush2.msra.mxu0 0.0
      %2092 = vmatprep.subr.mxu0 0.0
      %2093 = vmatpush2.msra.mxu0 0.0
      %2094 = vmatprep.subr.mxu0 0.0
      %2095 = vmatpush2.msra.mxu0 0.0
      %2096 = vmatprep.subr.mxu0 0.0
      %2097 = vmatpush2.msra.mxu0 0.0
      %2098 = vmatprep.subr.mxu0 0.0
      %2099 = vmatpush2.msra.mxu0 0.0
      %2100 = vmatprep.subr.mxu0 0.0
      %2101 = vmatpush2.msra.mxu0 0.0
      %2102 = vmatprep.subr.mxu0 0.0
      %2103 = vmatpush2.msra.mxu0 0.0
      %2104 = vmatprep.subr.mxu0 0.0
      %2105 = vmatpush2.msra.mxu0 0.0
      %2106 = vmatprep.mubr.f32.mxu0 0.0
      %2107 = vmatmul.mubr.f32.gmra.mxu0 %v2013
      %v2108 = vpop.f32.mrf.mxu0
      %v2109 = vadd.f32 0.0, %v2108
      %v2110 = vpop.f32.mrf.mxu0
      %2111 = vmatprep.mubr.f32.mxu0 0.0
      %2112 = vmatmul.mubr.f32.gmra.mxu0 %v2016
      %v2113 = vpop.f32.mrf.mxu0
      %v2114 = vadd.f32 0.0, %v2113
      %v2115 = vpop.f32.mrf.mxu0
      %2116 = vmatprep.mubr.f32.mxu0 0.0
      %2117 = vmatmul.mubr.f32.gmra.mxu0 %v2019
      %v2118 = vpop.f32.mrf.mxu0
      %v2119 = vadd.f32 0.0, %v2118
      %v2120 = vpop.f32.mrf.mxu0
      %2121 = vmatprep.mubr.f32.mxu0 0.0
      %2122 = vmatmul.mubr.f32.gmra.mxu0 %v2022
      %v2123 = vpop.f32.mrf.mxu0
      %v2124 = vadd.f32 0.0, %v2123
      %v2125 = vpop.f32.mrf.mxu0
      %2126 = vmatprep.mubr.f32.mxu0 0.0
      %2127 = vmatmul.mubr.f32.gmra.mxu0 %v2025
      %v2128 = vpop.f32.mrf.mxu0
      %v2129 = vadd.f32 0.0, %v2128
      %v2130 = vpop.f32.mrf.mxu0
      %2131 = vmatprep.mubr.f32.mxu0 0.0
      %2132 = vmatmul.mubr.f32.gmra.mxu0 %v2028
      %v2133 = vpop.f32.mrf.mxu0
      %v2134 = vadd.f32 0.0, %v2133
      %v2135 = vpop.f32.mrf.mxu0
      %2136 = vmatprep.mubr.f32.mxu0 0.0
      %2137 = vmatmul.mubr.f32.gmra.mxu0 %v2031
      %v2138 = vpop.f32.mrf.mxu0
      %v2139 = vadd.f32 0.0, %v2138
      %v2140 = vpop.f32.mrf.mxu0
      %2141 = vmatprep.mubr.f32.mxu0 0.0
      %2142 = vmatmul.mubr.f32.gmra.mxu0 %v2034
      %v2143 = vpop.f32.mrf.mxu0
      %v2144 = vadd.f32 0.0, %v2143
      %v2145 = vpop.f32.mrf.mxu0
      %2146 = vmatprep.mubr.f32.mxu0 0.0
      %2147 = vmatmul.mubr.f32.gmra.mxu0 %v2037
      %v2148 = vpop.f32.mrf.mxu0
      %v2149 = vadd.f32 0.0, %v2148
      %v2150 = vpop.f32.mrf.mxu0
      %2151 = vmatprep.mubr.f32.mxu0 0.0
      %2152 = vmatmul.mubr.f32.gmra.mxu0 %v2040
      %v2153 = vpop.f32.mrf.mxu0
      %v2154 = vadd.f32 0.0, %v2153
      %v2155 = vpop.f32.mrf.mxu0
      %2156 = vdwg.mxu0
      %v2158 = vsel %vm1215, %v2109, 0
      %v2161 = vsel %vm1215, %v2114, 0
      %v2164 = vsel %vm1215, %v2119, 0
      %v2167 = vsel %vm1215, %v2124, 0
      %v2170 = vsel %vm1215, %v2129, 0
      %v2173 = vsel %vm1215, %v2134, 0
      %v2176 = vsel %vm1215, %v2139, 0
      %v2179 = vsel %vm1215, %v2144, 0
      %v2182 = vsel %vm1215, %v2149, 0
      %v2185 = vsel %vm1215, %v2154, 0
      %2187 = vmatprep.subr.mxu0 0.0
      %2188 = vmatpush1.msra.mxu0 0.0
      %2189 = vmatprep.subr.mxu0 0.0
      %2190 = vmatpush1.msra.mxu0 0.0
      %2191 = vmatprep.subr.mxu0 0.0
      %2192 = vmatpush1.msra.mxu0 0.0
      %2193 = vmatprep.subr.mxu0 0.0
      %2194 = vmatpush1.msra.mxu0 0.0
      %2195 = vmatprep.subr.mxu0 0.0
      %2196 = vmatpush1.msra.mxu0 0.0
      %2197 = vmatprep.subr.mxu0 0.0
      %2198 = vmatpush1.msra.mxu0 0.0
      %2199 = vmatprep.subr.mxu0 0.0
      %2200 = vmatpush1.msra.mxu0 0.0
      %2201 = vmatprep.subr.mxu0 0.0
      %2202 = vmatpush1.msra.mxu0 0.0
      %2203 = vmatprep.subr.mxu0 0.0
      %2204 = vmatpush1.msra.mxu0 0.0
      %2205 = vmatprep.subr.mxu0 0.0
      %2206 = vmatpush1.msra.mxu0 0.0
      %2207 = vmatprep.subr.mxu0 0.0
      %2208 = vmatpush1.msra.mxu0 0.0
      %2209 = vmatprep.subr.mxu0 0.0
      %2210 = vmatpush1.msra.mxu0 0.0
      %2211 = vmatprep.subr.mxu0 0.0
      %2212 = vmatpush1.msra.mxu0 0.0
      %2213 = vmatprep.subr.mxu0 0.0
      %2214 = vmatpush1.msra.mxu0 0.0
      %2215 = vmatprep.subr.mxu0 0.0
      %2216 = vmatpush1.msra.mxu0 0.0
      %2217 = vmatprep.subr.mxu0 0.0
      %2218 = vmatpush1.msra.mxu0 %v1182
      %2219 = vmatprep.subr.mxu0 0.0
      %2220 = vmatpush2.msra.mxu0 0.0
      %2221 = vmatprep.subr.mxu0 0.0
      %2222 = vmatpush2.msra.mxu0 0.0
      %2223 = vmatprep.subr.mxu0 0.0
      %2224 = vmatpush2.msra.mxu0 0.0
      %2225 = vmatprep.subr.mxu0 0.0
      %2226 = vmatpush2.msra.mxu0 0.0
      %2227 = vmatprep.subr.mxu0 0.0
      %2228 = vmatpush2.msra.mxu0 0.0
      %2229 = vmatprep.subr.mxu0 0.0
      %2230 = vmatpush2.msra.mxu0 0.0
      %2231 = vmatprep.subr.mxu0 0.0
      %2232 = vmatpush2.msra.mxu0 0.0
      %2233 = vmatprep.subr.mxu0 0.0
      %2234 = vmatpush2.msra.mxu0 0.0
      %2235 = vmatprep.subr.mxu0 0.0
      %2236 = vmatpush2.msra.mxu0 0.0
      %2237 = vmatprep.subr.mxu0 0.0
      %2238 = vmatpush2.msra.mxu0 0.0
      %2239 = vmatprep.subr.mxu0 0.0
      %2240 = vmatpush2.msra.mxu0 0.0
      %2241 = vmatprep.subr.mxu0 0.0
      %2242 = vmatpush2.msra.mxu0 0.0
      %2243 = vmatprep.subr.mxu0 0.0
      %2244 = vmatpush2.msra.mxu0 0.0
      %2245 = vmatprep.subr.mxu0 0.0
      %2246 = vmatpush2.msra.mxu0 0.0
      %2247 = vmatprep.subr.mxu0 0.0
      %2248 = vmatpush2.msra.mxu0 0.0
      %2249 = vmatprep.subr.mxu0 0.0
      %2250 = vmatpush2.msra.mxu0 0.0
      %2251 = vmatprep.mubr.f32.mxu0 0.0
      %2252 = vmatmul.mubr.f32.gmra.mxu0 %v2158
      %v2253 = vpop.f32.mrf.mxu0
      %v2254 = vadd.f32 0.0, %v2253
      %v2255 = vpop.f32.mrf.mxu0
      %2256 = vmatprep.mubr.f32.mxu0 0.0
      %2257 = vmatmul.mubr.f32.gmra.mxu0 %v2161
      %v2258 = vpop.f32.mrf.mxu0
      %v2259 = vadd.f32 0.0, %v2258
      %v2260 = vpop.f32.mrf.mxu0
      %2261 = vmatprep.mubr.f32.mxu0 0.0
      %2262 = vmatmul.mubr.f32.gmra.mxu0 %v2164
      %v2263 = vpop.f32.mrf.mxu0
      %v2264 = vadd.f32 0.0, %v2263
      %v2265 = vpop.f32.mrf.mxu0
      %2266 = vmatprep.mubr.f32.mxu0 0.0
      %2267 = vmatmul.mubr.f32.gmra.mxu0 %v2167
      %v2268 = vpop.f32.mrf.mxu0
      %v2269 = vadd.f32 0.0, %v2268
      %v2270 = vpop.f32.mrf.mxu0
      %2271 = vmatprep.mubr.f32.mxu0 0.0
      %2272 = vmatmul.mubr.f32.gmra.mxu0 %v2170
      %v2273 = vpop.f32.mrf.mxu0
      %v2274 = vadd.f32 0.0, %v2273
      %v2275 = vpop.f32.mrf.mxu0
      %2276 = vmatprep.mubr.f32.mxu0 0.0
      %2277 = vmatmul.mubr.f32.gmra.mxu0 %v2173
      %v2278 = vpop.f32.mrf.mxu0
      %v2279 = vadd.f32 0.0, %v2278
      %v2280 = vpop.f32.mrf.mxu0
      %2281 = vmatprep.mubr.f32.mxu0 0.0
      %2282 = vmatmul.mubr.f32.gmra.mxu0 %v2176
      %v2283 = vpop.f32.mrf.mxu0
      %v2284 = vadd.f32 0.0, %v2283
      %v2285 = vpop.f32.mrf.mxu0
      %2286 = vmatprep.mubr.f32.mxu0 0.0
      %2287 = vmatmul.mubr.f32.gmra.mxu0 %v2179
      %v2288 = vpop.f32.mrf.mxu0
      %v2289 = vadd.f32 0.0, %v2288
      %v2290 = vpop.f32.mrf.mxu0
      %2291 = vmatprep.mubr.f32.mxu0 0.0
      %2292 = vmatmul.mubr.f32.gmra.mxu0 %v2182
      %v2293 = vpop.f32.mrf.mxu0
      %v2294 = vadd.f32 0.0, %v2293
      %v2295 = vpop.f32.mrf.mxu0
      %2296 = vmatprep.mubr.f32.mxu0 0.0
      %2297 = vmatmul.mubr.f32.gmra.mxu0 %v2185
      %v2298 = vpop.f32.mrf.mxu0
      %v2299 = vadd.f32 0.0, %v2298
      %v2300 = vpop.f32.mrf.mxu0
      %2301 = vdwg.mxu0
      %v2303 = vsel %vm1215, %v1619, 0
      %v2306 = vsel %vm1215, %v1624, 0
      %v2309 = vsel %vm1215, %v1629, 0
      %v2312 = vsel %vm1215, %v1634, 0
      %v2315 = vsel %vm1215, %v1639, 0
      %v2318 = vsel %vm1215, %v1644, 0
      %v2321 = vsel %vm1215, %v1649, 0
      %v2324 = vsel %vm1215, %v1654, 0
      %v2327 = vsel %vm1215, %v1659, 0
      %v2330 = vsel %vm1215, %v1664, 0
      %2332 = vmatprep.subr.mxu0 0.0
      %2333 = vmatpush1.msra.mxu0 0.0
      %2334 = vmatprep.subr.mxu0 0.0
      %2335 = vmatpush1.msra.mxu0 0.0
      %2336 = vmatprep.subr.mxu0 0.0
      %2337 = vmatpush1.msra.mxu0 0.0
      %2338 = vmatprep.subr.mxu0 0.0
      %2339 = vmatpush1.msra.mxu0 0.0
      %2340 = vmatprep.subr.mxu0 0.0
      %2341 = vmatpush1.msra.mxu0 0.0
      %2342 = vmatprep.subr.mxu0 0.0
      %2343 = vmatpush1.msra.mxu0 0.0
      %2344 = vmatprep.subr.mxu0 0.0
      %2345 = vmatpush1.msra.mxu0 0.0
      %2346 = vmatprep.subr.mxu0 0.0
      %2347 = vmatpush1.msra.mxu0 0.0
      %2348 = vmatprep.subr.mxu0 0.0
      %2349 = vmatpush1.msra.mxu0 0.0
      %2350 = vmatprep.subr.mxu0 0.0
      %2351 = vmatpush1.msra.mxu0 0.0
      %2352 = vmatprep.subr.mxu0 0.0
      %2353 = vmatpush1.msra.mxu0 0.0
      %2354 = vmatprep.subr.mxu0 0.0
      %2355 = vmatpush1.msra.mxu0 0.0
      %2356 = vmatprep.subr.mxu0 0.0
      %2357 = vmatpush1.msra.mxu0 0.0
      %2358 = vmatprep.subr.mxu0 0.0
      %2359 = vmatpush1.msra.mxu0 0.0
      %2360 = vmatprep.subr.mxu0 0.0
      %2361 = vmatpush1.msra.mxu0 0.0
      %2362 = vmatprep.subr.mxu0 0.0
      %2363 = vmatpush1.msra.mxu0 %v1181
      %2364 = vmatprep.subr.mxu0 0.0
      %2365 = vmatpush2.msra.mxu0 0.0
      %2366 = vmatprep.subr.mxu0 0.0
      %2367 = vmatpush2.msra.mxu0 0.0
      %2368 = vmatprep.subr.mxu0 0.0
      %2369 = vmatpush2.msra.mxu0 0.0
      %2370 = vmatprep.subr.mxu0 0.0
      %2371 = vmatpush2.msra.mxu0 0.0
      %2372 = vmatprep.subr.mxu0 0.0
      %2373 = vmatpush2.msra.mxu0 0.0
      %2374 = vmatprep.subr.mxu0 0.0
      %2375 = vmatpush2.msra.mxu0 0.0
      %2376 = vmatprep.subr.mxu0 0.0
      %2377 = vmatpush2.msra.mxu0 0.0
      %2378 = vmatprep.subr.mxu0 0.0
      %2379 = vmatpush2.msra.mxu0 0.0
      %2380 = vmatprep.subr.mxu0 0.0
      %2381 = vmatpush2.msra.mxu0 0.0
      %2382 = vmatprep.subr.mxu0 0.0
      %2383 = vmatpush2.msra.mxu0 0.0
      %2384 = vmatprep.subr.mxu0 0.0
      %2385 = vmatpush2.msra.mxu0 0.0
      %2386 = vmatprep.subr.mxu0 0.0
      %2387 = vmatpush2.msra.mxu0 0.0
      %2388 = vmatprep.subr.mxu0 0.0
      %2389 = vmatpush2.msra.mxu0 0.0
      %2390 = vmatprep.subr.mxu0 0.0
      %2391 = vmatpush2.msra.mxu0 0.0
      %2392 = vmatprep.subr.mxu0 0.0
      %2393 = vmatpush2.msra.mxu0 0.0
      %2394 = vmatprep.subr.mxu0 0.0
      %2395 = vmatpush2.msra.mxu0 0.0
      %2396 = vmatprep.mubr.f32.mxu0 0.0
      %2397 = vmatmul.mubr.f32.gmra.mxu0 %v2303
      %v2398 = vpop.f32.mrf.mxu0
      %v2399 = vadd.f32 %v2254, %v2398
      %v2400 = vpop.f32.mrf.mxu0
      %2401 = vmatprep.mubr.f32.mxu0 0.0
      %2402 = vmatmul.mubr.f32.gmra.mxu0 %v2306
      %v2403 = vpop.f32.mrf.mxu0
      %v2404 = vadd.f32 %v2259, %v2403
      %v2405 = vpop.f32.mrf.mxu0
      %2406 = vmatprep.mubr.f32.mxu0 0.0
      %2407 = vmatmul.mubr.f32.gmra.mxu0 %v2309
      %v2408 = vpop.f32.mrf.mxu0
      %v2409 = vadd.f32 %v2264, %v2408
      %v2410 = vpop.f32.mrf.mxu0
      %2411 = vmatprep.mubr.f32.mxu0 0.0
      %2412 = vmatmul.mubr.f32.gmra.mxu0 %v2312
      %v2413 = vpop.f32.mrf.mxu0
      %v2414 = vadd.f32 %v2269, %v2413
      %v2415 = vpop.f32.mrf.mxu0
      %2416 = vmatprep.mubr.f32.mxu0 0.0
      %2417 = vmatmul.mubr.f32.gmra.mxu0 %v2315
      %v2418 = vpop.f32.mrf.mxu0
      %v2419 = vadd.f32 %v2274, %v2418
      %v2420 = vpop.f32.mrf.mxu0
      %2421 = vmatprep.mubr.f32.mxu0 0.0
      %2422 = vmatmul.mubr.f32.gmra.mxu0 %v2318
      %v2423 = vpop.f32.mrf.mxu0
      %v2424 = vadd.f32 %v2279, %v2423
      %v2425 = vpop.f32.mrf.mxu0
      %2426 = vmatprep.mubr.f32.mxu0 0.0
      %2427 = vmatmul.mubr.f32.gmra.mxu0 %v2321
      %v2428 = vpop.f32.mrf.mxu0
      %v2429 = vadd.f32 %v2284, %v2428
      %v2430 = vpop.f32.mrf.mxu0
      %2431 = vmatprep.mubr.f32.mxu0 0.0
      %2432 = vmatmul.mubr.f32.gmra.mxu0 %v2324
      %v2433 = vpop.f32.mrf.mxu0
      %v2434 = vadd.f32 %v2289, %v2433
      %v2435 = vpop.f32.mrf.mxu0
      %2436 = vmatprep.mubr.f32.mxu0 0.0
      %2437 = vmatmul.mubr.f32.gmra.mxu0 %v2327
      %v2438 = vpop.f32.mrf.mxu0
      %v2439 = vadd.f32 %v2294, %v2438
      %v2440 = vpop.f32.mrf.mxu0
      %2441 = vmatprep.mubr.f32.mxu0 0.0
      %2442 = vmatmul.mubr.f32.gmra.mxu0 %v2330
      %v2443 = vpop.f32.mrf.mxu0
      %v2444 = vadd.f32 %v2299, %v2443
      %v2445 = vpop.f32.mrf.mxu0
      %2446 = vdwg.mxu0
      %2447 = vrot.lane.b32.xlu0 %v1133, 112
      %v2448 = vpop.permute.xlu0 %2447
      %2449 = vrot.lane.b32.xlu0 %v1138, 112
      %v2450 = vpop.permute.xlu0 %2449
      %2451 = vrot.lane.b32.xlu0 %v1143, 112
      %v2452 = vpop.permute.xlu0 %2451
      %2453 = vrot.lane.b32.xlu0 %v1148, 112
      %v2454 = vpop.permute.xlu0 %2453
      %2455 = vrot.lane.b32.xlu0 %v1153, 112
      %v2456 = vpop.permute.xlu0 %2455
      %2457 = vrot.lane.b32.xlu0 %v1158, 112
      %v2458 = vpop.permute.xlu0 %2457
      %2459 = vrot.lane.b32.xlu0 %v1163, 112
      %v2460 = vpop.permute.xlu0 %2459
      %2461 = vrot.lane.b32.xlu0 %v1168, 112
      %v2462 = vpop.permute.xlu0 %2461
      %2463 = vrot.lane.b32.xlu0 %v1173, 112
      %v2464 = vpop.permute.xlu0 %2463
      %2465 = vrot.lane.b32.xlu0 %v1178, 112
      %v2466 = vpop.permute.xlu0 %2465
      %2467 = vrot.lane.b32.xlu0 %v1133, 80
      %v2468 = vpop.permute.xlu0 %2467
      %2469 = vrot.lane.b32.xlu0 %v1138, 80
      %v2470 = vpop.permute.xlu0 %2469
      %2471 = vrot.lane.b32.xlu0 %v1143, 80
      %v2472 = vpop.permute.xlu0 %2471
      %2473 = vrot.lane.b32.xlu0 %v1148, 80
      %v2474 = vpop.permute.xlu0 %2473
      %2475 = vrot.lane.b32.xlu0 %v1153, 80
      %v2476 = vpop.permute.xlu0 %2475
      %2477 = vrot.lane.b32.xlu0 %v1158, 80
      %v2478 = vpop.permute.xlu0 %2477
      %2479 = vrot.lane.b32.xlu0 %v1163, 80
      %v2480 = vpop.permute.xlu0 %2479
      %2481 = vrot.lane.b32.xlu0 %v1168, 80
      %v2482 = vpop.permute.xlu0 %2481
      %2483 = vrot.lane.b32.xlu0 %v1173, 80
      %v2484 = vpop.permute.xlu0 %2483
      %2485 = vrot.lane.b32.xlu0 %v1178, 80
      %v2486 = vpop.permute.xlu0 %2485
      %v2487 = vsel %vm1215, %v2448, 0
      %v2489 = vsel %vm1215, %v2450, 0
      %v2491 = vsel %vm1215, %v2452, 0
      %v2493 = vsel %vm1215, %v2454, 0
      %v2495 = vsel %vm1215, %v2456, 0
      %v2497 = vsel %vm1215, %v2458, 0
      %v2499 = vsel %vm1215, %v2460, 0
      %v2501 = vsel %vm1215, %v2462, 0
      %v2503 = vsel %vm1215, %v2464, 0
      %v2505 = vsel %vm1215, %v2466, 0
      %v2507 = vsel %vm1215, %v2468, 0
      %v2509 = vsel %vm1215, %v2470, 0
      %v2511 = vsel %vm1215, %v2472, 0
      %v2513 = vsel %vm1215, %v2474, 0
      %v2515 = vsel %vm1215, %v2476, 0
      %v2517 = vsel %vm1215, %v2478, 0
      %v2519 = vsel %vm1215, %v2480, 0
      %v2521 = vsel %vm1215, %v2482, 0
      %v2523 = vsel %vm1215, %v2484, 0
      %v2525 = vsel %vm1215, %v2486, 0
      %2527 = vmatprep.subr.mxu0 0.0
      %2528 = vmatpush1.xpose.msra.mxu0 0.0
      %2529 = vmatprep.subr.mxu0 0.0
      %2530 = vmatpush1.xpose.msra.mxu0 0.0
      %2531 = vmatprep.subr.mxu0 0.0
      %2532 = vmatpush1.xpose.msra.mxu0 0.0
      %2533 = vmatprep.subr.mxu0 0.0
      %2534 = vmatpush1.xpose.msra.mxu0 0.0
      %2535 = vmatprep.subr.mxu0 0.0
      %2536 = vmatpush1.xpose.msra.mxu0 0.0
      %2537 = vmatprep.subr.mxu0 0.0
      %2538 = vmatpush1.xpose.msra.mxu0 0.0
      %2539 = vmatprep.subr.mxu0 0.0
      %2540 = vmatpush1.xpose.msra.mxu0 %v2525
      %2541 = vmatprep.subr.mxu0 0.0
      %2542 = vmatpush1.xpose.msra.mxu0 %v2523
      %2543 = vmatprep.subr.mxu0 0.0
      %2544 = vmatpush1.xpose.msra.mxu0 %v2521
      %2545 = vmatprep.subr.mxu0 0.0
      %2546 = vmatpush1.xpose.msra.mxu0 %v2519
      %2547 = vmatprep.subr.mxu0 0.0
      %2548 = vmatpush1.xpose.msra.mxu0 %v2517
      %2549 = vmatprep.subr.mxu0 0.0
      %2550 = vmatpush1.xpose.msra.mxu0 %v2515
      %2551 = vmatprep.subr.mxu0 0.0
      %2552 = vmatpush1.xpose.msra.mxu0 %v2513
      %2553 = vmatprep.subr.mxu0 0.0
      %2554 = vmatpush1.xpose.msra.mxu0 %v2511
      %2555 = vmatprep.subr.mxu0 0.0
      %2556 = vmatpush1.xpose.msra.mxu0 %v2509
      %2557 = vmatprep.subr.mxu0 0.0
      %2558 = vmatpush1.xpose.msra.mxu0 %v2507
      %2559 = vmatprep.subr.mxu0 0.0
      %2560 = vmatpush2.xpose.msra.mxu0 0.0
      %2561 = vmatprep.subr.mxu0 0.0
      %2562 = vmatpush2.xpose.msra.mxu0 0.0
      %2563 = vmatprep.subr.mxu0 0.0
      %2564 = vmatpush2.xpose.msra.mxu0 0.0
      %2565 = vmatprep.subr.mxu0 0.0
      %2566 = vmatpush2.xpose.msra.mxu0 0.0
      %2567 = vmatprep.subr.mxu0 0.0
      %2568 = vmatpush2.xpose.msra.mxu0 0.0
      %2569 = vmatprep.subr.mxu0 0.0
      %2570 = vmatpush2.xpose.msra.mxu0 0.0
      %2571 = vmatprep.subr.mxu0 0.0
      %2572 = vmatpush2.xpose.msra.mxu0 0.0
      %2573 = vmatprep.subr.mxu0 0.0
      %2574 = vmatpush2.xpose.msra.mxu0 0.0
      %2575 = vmatprep.subr.mxu0 0.0
      %2576 = vmatpush2.xpose.msra.mxu0 0.0
      %2577 = vmatprep.subr.mxu0 0.0
      %2578 = vmatpush2.xpose.msra.mxu0 0.0
      %2579 = vmatprep.subr.mxu0 0.0
      %2580 = vmatpush2.xpose.msra.mxu0 0.0
      %2581 = vmatprep.subr.mxu0 0.0
      %2582 = vmatpush2.xpose.msra.mxu0 0.0
      %2583 = vmatprep.subr.mxu0 0.0
      %2584 = vmatpush2.xpose.msra.mxu0 0.0
      %2585 = vmatprep.subr.mxu0 0.0
      %2586 = vmatpush2.xpose.msra.mxu0 0.0
      %2587 = vmatprep.subr.mxu0 0.0
      %2588 = vmatpush2.xpose.msra.mxu0 0.0
      %2589 = vmatprep.subr.mxu0 0.0
      %2590 = vmatpush2.xpose.msra.mxu0 0.0
      %2591 = vmatprep.mubr.f32.mxu0 0.0
      %2592 = vmatmul.mubr.f32.gmra.mxu0 %v2487
      %v2593 = vpop.f32.mrf.mxu0
      %v2594 = vadd.f32 0.0, %v2593
      %v2595 = vpop.f32.mrf.mxu0
      %2596 = vmatprep.mubr.f32.mxu0 0.0
      %2597 = vmatmul.mubr.f32.gmra.mxu0 %v2489
      %v2598 = vpop.f32.mrf.mxu0
      %v2599 = vadd.f32 0.0, %v2598
      %v2600 = vpop.f32.mrf.mxu0
      %2601 = vmatprep.mubr.f32.mxu0 0.0
      %2602 = vmatmul.mubr.f32.gmra.mxu0 %v2491
      %v2603 = vpop.f32.mrf.mxu0
      %v2604 = vadd.f32 0.0, %v2603
      %v2605 = vpop.f32.mrf.mxu0
      %2606 = vmatprep.mubr.f32.mxu0 0.0
      %2607 = vmatmul.mubr.f32.gmra.mxu0 %v2493
      %v2608 = vpop.f32.mrf.mxu0
      %v2609 = vadd.f32 0.0, %v2608
      %v2610 = vpop.f32.mrf.mxu0
      %2611 = vmatprep.mubr.f32.mxu0 0.0
      %2612 = vmatmul.mubr.f32.gmra.mxu0 %v2495
      %v2613 = vpop.f32.mrf.mxu0
      %v2614 = vadd.f32 0.0, %v2613
      %v2615 = vpop.f32.mrf.mxu0
      %2616 = vmatprep.mubr.f32.mxu0 0.0
      %2617 = vmatmul.mubr.f32.gmra.mxu0 %v2497
      %v2618 = vpop.f32.mrf.mxu0
      %v2619 = vadd.f32 0.0, %v2618
      %v2620 = vpop.f32.mrf.mxu0
      %2621 = vmatprep.mubr.f32.mxu0 0.0
      %2622 = vmatmul.mubr.f32.gmra.mxu0 %v2499
      %v2623 = vpop.f32.mrf.mxu0
      %v2624 = vadd.f32 0.0, %v2623
      %v2625 = vpop.f32.mrf.mxu0
      %2626 = vmatprep.mubr.f32.mxu0 0.0
      %2627 = vmatmul.mubr.f32.gmra.mxu0 %v2501
      %v2628 = vpop.f32.mrf.mxu0
      %v2629 = vadd.f32 0.0, %v2628
      %v2630 = vpop.f32.mrf.mxu0
      %2631 = vmatprep.mubr.f32.mxu0 0.0
      %2632 = vmatmul.mubr.f32.gmra.mxu0 %v2503
      %v2633 = vpop.f32.mrf.mxu0
      %v2634 = vadd.f32 0.0, %v2633
      %v2635 = vpop.f32.mrf.mxu0
      %2636 = vmatprep.mubr.f32.mxu0 0.0
      %2637 = vmatmul.mubr.f32.gmra.mxu0 %v2505
      %v2638 = vpop.f32.mrf.mxu0
      %v2639 = vadd.f32 0.0, %v2638
      %v2640 = vpop.f32.mrf.mxu0
      %2641 = vdwg.mxu0
      %v2642 = vmul.f32 %v2594, 0.35355338
      %v2643 = vmul.f32 %v2599, 0.35355338
      %v2644 = vmul.f32 %v2604, 0.35355338
      %v2645 = vmul.f32 %v2609, 0.35355338
      %v2646 = vmul.f32 %v2614, 0.35355338
      %v2647 = vmul.f32 %v2619, 0.35355338
      %v2648 = vmul.f32 %v2624, 0.35355338
      %v2649 = vmul.f32 %v2629, 0.35355338
      %v2650 = vmul.f32 %v2634, 0.35355338
      %v2651 = vmul.f32 %v2639, 0.35355338
      %v2652 = vsel %vm1381, %v2642, -inf
      %2653 = vmax.xlane.f32.xlu0 %v2652
      %v2654 = vpop.xlane.xlu0 %2653
      %v2655 = vsel %vm1381, %v2643, -inf
      %2656 = vmax.xlane.f32.xlu0 %v2655
      %v2657 = vpop.xlane.xlu0 %2656
      %v2658 = vsel %vm1381, %v2644, -inf
      %2659 = vmax.xlane.f32.xlu0 %v2658
      %v2660 = vpop.xlane.xlu0 %2659
      %v2661 = vsel %vm1381, %v2645, -inf
      %2662 = vmax.xlane.f32.xlu0 %v2661
      %v2663 = vpop.xlane.xlu0 %2662
      %v2664 = vsel %vm1381, %v2646, -inf
      %2665 = vmax.xlane.f32.xlu0 %v2664
      %v2666 = vpop.xlane.xlu0 %2665
      %v2667 = vsel %vm1381, %v2647, -inf
      %2668 = vmax.xlane.f32.xlu0 %v2667
      %v2669 = vpop.xlane.xlu0 %2668
      %v2670 = vsel %vm1381, %v2648, -inf
      %2671 = vmax.xlane.f32.xlu0 %v2670
      %v2672 = vpop.xlane.xlu0 %2671
      %v2673 = vsel %vm1381, %v2649, -inf
      %2674 = vmax.xlane.f32.xlu0 %v2673
      %v2675 = vpop.xlane.xlu0 %2674
      %v2676 = vsel %vm1381, %v2650, -inf
      %2677 = vmax.xlane.f32.xlu0 %v2676
      %v2678 = vpop.xlane.xlu0 %2677
      %v2679 = vsel %vm1381, %v2651, -inf
      %2680 = vmax.xlane.f32.xlu0 %v2679
      %v2681 = vpop.xlane.xlu0 %2680
      %v2682 = vsub.f32 %v2642, %v2654
      %v2683 = vsub.f32 %v2643, %v2657
      %v2684 = vsub.f32 %v2644, %v2660
      %v2685 = vsub.f32 %v2645, %v2663
      %v2686 = vsub.f32 %v2646, %v2666
      %v2687 = vsub.f32 %v2647, %v2669
      %v2688 = vsub.f32 %v2648, %v2672
      %v2689 = vsub.f32 %v2649, %v2675
      %v2690 = vsub.f32 %v2650, %v2678
      %v2691 = vsub.f32 %v2651, %v2681
      %v2692 = vmul.f32 %v2682, 1.442695
      %v2693 = vpow.pop %v2692
      %v2694 = vmul.f32 %v2683, 1.442695
      %v2695 = vpow.pop %v2694
      %v2696 = vmul.f32 %v2684, 1.442695
      %v2697 = vpow.pop %v2696
      %v2698 = vmul.f32 %v2685, 1.442695
      %v2699 = vpow.pop %v2698
      %v2700 = vmul.f32 %v2686, 1.442695
      %v2701 = vpow.pop %v2700
      %v2702 = vmul.f32 %v2687, 1.442695
      %v2703 = vpow.pop %v2702
      %v2704 = vmul.f32 %v2688, 1.442695
      %v2705 = vpow.pop %v2704
      %v2706 = vmul.f32 %v2689, 1.442695
      %v2707 = vpow.pop %v2706
      %v2708 = vmul.f32 %v2690, 1.442695
      %v2709 = vpow.pop %v2708
      %v2710 = vmul.f32 %v2691, 1.442695
      %v2711 = vpow.pop %v2710
      %v2712 = vsel %vm1381, %v2693, 0.0
      %2713 = vadd.xlane.f32.xlu0 %v2712
      %v2714 = vpop.xlane.xlu0 %2713
      %v2715 = vsel %vm1381, %v2695, 0.0
      %2716 = vadd.xlane.f32.xlu0 %v2715
      %v2717 = vpop.xlane.xlu0 %2716
      %v2718 = vsel %vm1381, %v2697, 0.0
      %2719 = vadd.xlane.f32.xlu0 %v2718
      %v2720 = vpop.xlane.xlu0 %2719
      %v2721 = vsel %vm1381, %v2699, 0.0
      %2722 = vadd.xlane.f32.xlu0 %v2721
      %v2723 = vpop.xlane.xlu0 %2722
      %v2724 = vsel %vm1381, %v2701, 0.0
      %2725 = vadd.xlane.f32.xlu0 %v2724
      %v2726 = vpop.xlane.xlu0 %2725
      %v2727 = vsel %vm1381, %v2703, 0.0
      %2728 = vadd.xlane.f32.xlu0 %v2727
      %v2729 = vpop.xlane.xlu0 %2728
      %v2730 = vsel %vm1381, %v2705, 0.0
      %2731 = vadd.xlane.f32.xlu0 %v2730
      %v2732 = vpop.xlane.xlu0 %2731
      %v2733 = vsel %vm1381, %v2707, 0.0
      %2734 = vadd.xlane.f32.xlu0 %v2733
      %v2735 = vpop.xlane.xlu0 %2734
      %v2736 = vsel %vm1381, %v2709, 0.0
      %2737 = vadd.xlane.f32.xlu0 %v2736
      %v2738 = vpop.xlane.xlu0 %2737
      %v2739 = vsel %vm1381, %v2711, 0.0
      %2740 = vadd.xlane.f32.xlu0 %v2739
      %v2741 = vpop.xlane.xlu0 %2740
      %v2742 = vrcp.pop %v2714
      %v2743 = vrcp.pop %v2717
      %v2744 = vrcp.pop %v2720
      %v2745 = vrcp.pop %v2723
      %v2746 = vrcp.pop %v2726
      %v2747 = vrcp.pop %v2729
      %v2748 = vrcp.pop %v2732
      %v2749 = vrcp.pop %v2735
      %v2750 = vrcp.pop %v2738
      %v2751 = vrcp.pop %v2741
      %v2752 = vmul.f32 %v2693, %v2742
      %v2753 = vmul.f32 %v2695, %v2743
      %v2754 = vmul.f32 %v2697, %v2744
      %v2755 = vmul.f32 %v2699, %v2745
      %v2756 = vmul.f32 %v2701, %v2746
      %v2757 = vmul.f32 %v2703, %v2747
      %v2758 = vmul.f32 %v2705, %v2748
      %v2759 = vmul.f32 %v2707, %v2749
      %v2760 = vmul.f32 %v2709, %v2750
      %v2761 = vmul.f32 %v2711, %v2751
      %2762 = vrot.lane.b32.xlu0 %v1133, 48
      %v2763 = vpop.permute.xlu0 %2762
      %2764 = vrot.lane.b32.xlu0 %v1138, 48
      %v2765 = vpop.permute.xlu0 %2764
      %2766 = vrot.lane.b32.xlu0 %v1143, 48
      %v2767 = vpop.permute.xlu0 %2766
      %2768 = vrot.lane.b32.xlu0 %v1148, 48
      %v2769 = vpop.permute.xlu0 %2768
      %2770 = vrot.lane.b32.xlu0 %v1153, 48
      %v2771 = vpop.permute.xlu0 %2770
      %2772 = vrot.lane.b32.xlu0 %v1158, 48
      %v2773 = vpop.permute.xlu0 %2772
      %2774 = vrot.lane.b32.xlu0 %v1163, 48
      %v2775 = vpop.permute.xlu0 %2774
      %2776 = vrot.lane.b32.xlu0 %v1168, 48
      %v2777 = vpop.permute.xlu0 %2776
      %2778 = vrot.lane.b32.xlu0 %v1173, 48
      %v2779 = vpop.permute.xlu0 %2778
      %2780 = vrot.lane.b32.xlu0 %v1178, 48
      %v2781 = vpop.permute.xlu0 %2780
      %v2793 = vsel %vm1381, %v2752, 0
      %v2796 = vsel %vm1381, %v2753, 0
      %v2799 = vsel %vm1381, %v2754, 0
      %v2802 = vsel %vm1381, %v2755, 0
      %v2805 = vsel %vm1381, %v2756, 0
      %v2808 = vsel %vm1381, %v2757, 0
      %v2811 = vsel %vm1381, %v2758, 0
      %v2814 = vsel %vm1381, %v2759, 0
      %v2817 = vsel %vm1381, %v2760, 0
      %v2820 = vsel %vm1381, %v2761, 0
      %2822 = vmatprep.subr.mxu0 0.0
      %2823 = vmatpush1.msra.mxu0 0.0
      %2824 = vmatprep.subr.mxu0 0.0
      %2825 = vmatpush1.msra.mxu0 0.0
      %2826 = vmatprep.subr.mxu0 0.0
      %2827 = vmatpush1.msra.mxu0 0.0
      %2828 = vmatprep.subr.mxu0 0.0
      %2829 = vmatpush1.msra.mxu0 0.0
      %2830 = vmatprep.subr.mxu0 0.0
      %2831 = vmatpush1.msra.mxu0 0.0
      %2832 = vmatprep.subr.mxu0 0.0
      %2833 = vmatpush1.msra.mxu0 0.0
      %2834 = vmatprep.subr.mxu0 0.0
      %2835 = vmatpush1.msra.mxu0 %v2781
      %2836 = vmatprep.subr.mxu0 0.0
      %2837 = vmatpush1.msra.mxu0 %v2779
      %2838 = vmatprep.subr.mxu0 0.0
      %2839 = vmatpush1.msra.mxu0 %v2777
      %2840 = vmatprep.subr.mxu0 0.0
      %2841 = vmatpush1.msra.mxu0 %v2775
      %2842 = vmatprep.subr.mxu0 0.0
      %2843 = vmatpush1.msra.mxu0 %v2773
      %2844 = vmatprep.subr.mxu0 0.0
      %2845 = vmatpush1.msra.mxu0 %v2771
      %2846 = vmatprep.subr.mxu0 0.0
      %2847 = vmatpush1.msra.mxu0 %v2769
      %2848 = vmatprep.subr.mxu0 0.0
      %2849 = vmatpush1.msra.mxu0 %v2767
      %2850 = vmatprep.subr.mxu0 0.0
      %2851 = vmatpush1.msra.mxu0 %v2765
      %2852 = vmatprep.subr.mxu0 0.0
      %2853 = vmatpush1.msra.mxu0 %v2763
      %2854 = vmatprep.subr.mxu0 0.0
      %2855 = vmatpush2.msra.mxu0 0.0
      %2856 = vmatprep.subr.mxu0 0.0
      %2857 = vmatpush2.msra.mxu0 0.0
      %2858 = vmatprep.subr.mxu0 0.0
      %2859 = vmatpush2.msra.mxu0 0.0
      %2860 = vmatprep.subr.mxu0 0.0
      %2861 = vmatpush2.msra.mxu0 0.0
      %2862 = vmatprep.subr.mxu0 0.0
      %2863 = vmatpush2.msra.mxu0 0.0
      %2864 = vmatprep.subr.mxu0 0.0
      %2865 = vmatpush2.msra.mxu0 0.0
      %2866 = vmatprep.subr.mxu0 0.0
      %2867 = vmatpush2.msra.mxu0 0.0
      %2868 = vmatprep.subr.mxu0 0.0
      %2869 = vmatpush2.msra.mxu0 0.0
      %2870 = vmatprep.subr.mxu0 0.0
      %2871 = vmatpush2.msra.mxu0 0.0
      %2872 = vmatprep.subr.mxu0 0.0
      %2873 = vmatpush2.msra.mxu0 0.0
      %2874 = vmatprep.subr.mxu0 0.0
      %2875 = vmatpush2.msra.mxu0 0.0
      %2876 = vmatprep.subr.mxu0 0.0
      %2877 = vmatpush2.msra.mxu0 0.0
      %2878 = vmatprep.subr.mxu0 0.0
      %2879 = vmatpush2.msra.mxu0 0.0
      %2880 = vmatprep.subr.mxu0 0.0
      %2881 = vmatpush2.msra.mxu0 0.0
      %2882 = vmatprep.subr.mxu0 0.0
      %2883 = vmatpush2.msra.mxu0 0.0
      %2884 = vmatprep.subr.mxu0 0.0
      %2885 = vmatpush2.msra.mxu0 0.0
      %2886 = vmatprep.mubr.f32.mxu0 0.0
      %2887 = vmatmul.mubr.f32.gmra.mxu0 %v2793
      %v2888 = vpop.f32.mrf.mxu0
      %v2889 = vadd.f32 0.0, %v2888
      %v2890 = vpop.f32.mrf.mxu0
      %2891 = vmatprep.mubr.f32.mxu0 0.0
      %2892 = vmatmul.mubr.f32.gmra.mxu0 %v2796
      %v2893 = vpop.f32.mrf.mxu0
      %v2894 = vadd.f32 0.0, %v2893
      %v2895 = vpop.f32.mrf.mxu0
      %2896 = vmatprep.mubr.f32.mxu0 0.0
      %2897 = vmatmul.mubr.f32.gmra.mxu0 %v2799
      %v2898 = vpop.f32.mrf.mxu0
      %v2899 = vadd.f32 0.0, %v2898
      %v2900 = vpop.f32.mrf.mxu0
      %2901 = vmatprep.mubr.f32.mxu0 0.0
      %2902 = vmatmul.mubr.f32.gmra.mxu0 %v2802
      %v2903 = vpop.f32.mrf.mxu0
      %v2904 = vadd.f32 0.0, %v2903
      %v2905 = vpop.f32.mrf.mxu0
      %2906 = vmatprep.mubr.f32.mxu0 0.0
      %2907 = vmatmul.mubr.f32.gmra.mxu0 %v2805
      %v2908 = vpop.f32.mrf.mxu0
      %v2909 = vadd.f32 0.0, %v2908
      %v2910 = vpop.f32.mrf.mxu0
      %2911 = vmatprep.mubr.f32.mxu0 0.0
      %2912 = vmatmul.mubr.f32.gmra.mxu0 %v2808
      %v2913 = vpop.f32.mrf.mxu0
      %v2914 = vadd.f32 0.0, %v2913
      %v2915 = vpop.f32.mrf.mxu0
      %2916 = vmatprep.mubr.f32.mxu0 0.0
      %2917 = vmatmul.mubr.f32.gmra.mxu0 %v2811
      %v2918 = vpop.f32.mrf.mxu0
      %v2919 = vadd.f32 0.0, %v2918
      %v2920 = vpop.f32.mrf.mxu0
      %2921 = vmatprep.mubr.f32.mxu0 0.0
      %2922 = vmatmul.mubr.f32.gmra.mxu0 %v2814
      %v2923 = vpop.f32.mrf.mxu0
      %v2924 = vadd.f32 0.0, %v2923
      %v2925 = vpop.f32.mrf.mxu0
      %2926 = vmatprep.mubr.f32.mxu0 0.0
      %2927 = vmatmul.mubr.f32.gmra.mxu0 %v2817
      %v2928 = vpop.f32.mrf.mxu0
      %v2929 = vadd.f32 0.0, %v2928
      %v2930 = vpop.f32.mrf.mxu0
      %2931 = vmatprep.mubr.f32.mxu0 0.0
      %2932 = vmatmul.mubr.f32.gmra.mxu0 %v2820
      %v2933 = vpop.f32.mrf.mxu0
      %v2934 = vadd.f32 0.0, %v2933
      %v2935 = vpop.f32.mrf.mxu0
      %2936 = vdwg.mxu0
      %v2938 = vsel %vm1215, %v2889, 0
      %v2941 = vsel %vm1215, %v2894, 0
      %v2944 = vsel %vm1215, %v2899, 0
      %v2947 = vsel %vm1215, %v2904, 0
      %v2950 = vsel %vm1215, %v2909, 0
      %v2953 = vsel %vm1215, %v2914, 0
      %v2956 = vsel %vm1215, %v2919, 0
      %v2959 = vsel %vm1215, %v2924, 0
      %v2962 = vsel %vm1215, %v2929, 0
      %v2965 = vsel %vm1215, %v2934, 0
      %2967 = vmatprep.subr.mxu0 0.0
      %2968 = vmatpush1.msra.mxu0 0.0
      %2969 = vmatprep.subr.mxu0 0.0
      %2970 = vmatpush1.msra.mxu0 0.0
      %2971 = vmatprep.subr.mxu0 0.0
      %2972 = vmatpush1.msra.mxu0 0.0
      %2973 = vmatprep.subr.mxu0 0.0
      %2974 = vmatpush1.msra.mxu0 0.0
      %2975 = vmatprep.subr.mxu0 0.0
      %2976 = vmatpush1.msra.mxu0 0.0
      %2977 = vmatprep.subr.mxu0 0.0
      %2978 = vmatpush1.msra.mxu0 0.0
      %2979 = vmatprep.subr.mxu0 0.0
      %2980 = vmatpush1.msra.mxu0 0.0
      %2981 = vmatprep.subr.mxu0 0.0
      %2982 = vmatpush1.msra.mxu0 0.0
      %2983 = vmatprep.subr.mxu0 0.0
      %2984 = vmatpush1.msra.mxu0 0.0
      %2985 = vmatprep.subr.mxu0 0.0
      %2986 = vmatpush1.msra.mxu0 0.0
      %2987 = vmatprep.subr.mxu0 0.0
      %2988 = vmatpush1.msra.mxu0 0.0
      %2989 = vmatprep.subr.mxu0 0.0
      %2990 = vmatpush1.msra.mxu0 0.0
      %2991 = vmatprep.subr.mxu0 0.0
      %2992 = vmatpush1.msra.mxu0 0.0
      %2993 = vmatprep.subr.mxu0 0.0
      %2994 = vmatpush1.msra.mxu0 0.0
      %2995 = vmatprep.subr.mxu0 0.0
      %2996 = vmatpush1.msra.mxu0 0.0
      %2997 = vmatprep.subr.mxu0 0.0
      %2998 = vmatpush1.msra.mxu0 %v1183
      %2999 = vmatprep.subr.mxu0 0.0
      %3000 = vmatpush2.msra.mxu0 0.0
      %3001 = vmatprep.subr.mxu0 0.0
      %3002 = vmatpush2.msra.mxu0 0.0
      %3003 = vmatprep.subr.mxu0 0.0
      %3004 = vmatpush2.msra.mxu0 0.0
      %3005 = vmatprep.subr.mxu0 0.0
      %3006 = vmatpush2.msra.mxu0 0.0
      %3007 = vmatprep.subr.mxu0 0.0
      %3008 = vmatpush2.msra.mxu0 0.0
      %3009 = vmatprep.subr.mxu0 0.0
      %3010 = vmatpush2.msra.mxu0 0.0
      %3011 = vmatprep.subr.mxu0 0.0
      %3012 = vmatpush2.msra.mxu0 0.0
      %3013 = vmatprep.subr.mxu0 0.0
      %3014 = vmatpush2.msra.mxu0 0.0
      %3015 = vmatprep.subr.mxu0 0.0
      %3016 = vmatpush2.msra.mxu0 0.0
      %3017 = vmatprep.subr.mxu0 0.0
      %3018 = vmatpush2.msra.mxu0 0.0
      %3019 = vmatprep.subr.mxu0 0.0
      %3020 = vmatpush2.msra.mxu0 0.0
      %3021 = vmatprep.subr.mxu0 0.0
      %3022 = vmatpush2.msra.mxu0 0.0
      %3023 = vmatprep.subr.mxu0 0.0
      %3024 = vmatpush2.msra.mxu0 0.0
      %3025 = vmatprep.subr.mxu0 0.0
      %3026 = vmatpush2.msra.mxu0 0.0
      %3027 = vmatprep.subr.mxu0 0.0
      %3028 = vmatpush2.msra.mxu0 0.0
      %3029 = vmatprep.subr.mxu0 0.0
      %3030 = vmatpush2.msra.mxu0 0.0
      %3031 = vmatprep.mubr.f32.mxu0 0.0
      %3032 = vmatmul.mubr.f32.gmra.mxu0 %v2938
      %v3033 = vpop.f32.mrf.mxu0
      %v3034 = vadd.f32 0.0, %v3033
      %v3035 = vpop.f32.mrf.mxu0
      %3036 = vmatprep.mubr.f32.mxu0 0.0
      %3037 = vmatmul.mubr.f32.gmra.mxu0 %v2941
      %v3038 = vpop.f32.mrf.mxu0
      %v3039 = vadd.f32 0.0, %v3038
      %v3040 = vpop.f32.mrf.mxu0
      %3041 = vmatprep.mubr.f32.mxu0 0.0
      %3042 = vmatmul.mubr.f32.gmra.mxu0 %v2944
      %v3043 = vpop.f32.mrf.mxu0
      %v3044 = vadd.f32 0.0, %v3043
      %v3045 = vpop.f32.mrf.mxu0
      %3046 = vmatprep.mubr.f32.mxu0 0.0
      %3047 = vmatmul.mubr.f32.gmra.mxu0 %v2947
      %v3048 = vpop.f32.mrf.mxu0
      %v3049 = vadd.f32 0.0, %v3048
      %v3050 = vpop.f32.mrf.mxu0
      %3051 = vmatprep.mubr.f32.mxu0 0.0
      %3052 = vmatmul.mubr.f32.gmra.mxu0 %v2950
      %v3053 = vpop.f32.mrf.mxu0
      %v3054 = vadd.f32 0.0, %v3053
      %v3055 = vpop.f32.mrf.mxu0
      %3056 = vmatprep.mubr.f32.mxu0 0.0
      %3057 = vmatmul.mubr.f32.gmra.mxu0 %v2953
      %v3058 = vpop.f32.mrf.mxu0
      %v3059 = vadd.f32 0.0, %v3058
      %v3060 = vpop.f32.mrf.mxu0
      %3061 = vmatprep.mubr.f32.mxu0 0.0
      %3062 = vmatmul.mubr.f32.gmra.mxu0 %v2956
      %v3063 = vpop.f32.mrf.mxu0
      %v3064 = vadd.f32 0.0, %v3063
      %v3065 = vpop.f32.mrf.mxu0
      %3066 = vmatprep.mubr.f32.mxu0 0.0
      %3067 = vmatmul.mubr.f32.gmra.mxu0 %v2959
      %v3068 = vpop.f32.mrf.mxu0
      %v3069 = vadd.f32 0.0, %v3068
      %v3070 = vpop.f32.mrf.mxu0
      %3071 = vmatprep.mubr.f32.mxu0 0.0
      %3072 = vmatmul.mubr.f32.gmra.mxu0 %v2962
      %v3073 = vpop.f32.mrf.mxu0
      %v3074 = vadd.f32 0.0, %v3073
      %v3075 = vpop.f32.mrf.mxu0
      %3076 = vmatprep.mubr.f32.mxu0 0.0
      %3077 = vmatmul.mubr.f32.gmra.mxu0 %v2965
      %v3078 = vpop.f32.mrf.mxu0
      %v3079 = vadd.f32 0.0, %v3078
      %v3080 = vpop.f32.mrf.mxu0
      %3081 = vdwg.mxu0
      %v3082 = vadd.f32 %v2399, %v3034
      %v3083 = vadd.f32 %v2404, %v3039
      %v3084 = vadd.f32 %v2409, %v3044
      %v3085 = vadd.f32 %v2414, %v3049
      %v3086 = vadd.f32 %v2419, %v3054
      %v3087 = vadd.f32 %v2424, %v3059
      %v3088 = vadd.f32 %v2429, %v3064
      %v3089 = vadd.f32 %v2434, %v3069
      %v3090 = vadd.f32 %v2439, %v3074
      %v3091 = vadd.f32 %v2444, %v3079
      %3092 = vrot.lane.b32.xlu0 %v1133, 104
      %v3093 = vpop.permute.xlu0 %3092
      %3094 = vrot.lane.b32.xlu0 %v1138, 104
      %v3095 = vpop.permute.xlu0 %3094
      %3096 = vrot.lane.b32.xlu0 %v1143, 104
      %v3097 = vpop.permute.xlu0 %3096
      %3098 = vrot.lane.b32.xlu0 %v1148, 104
      %v3099 = vpop.permute.xlu0 %3098
      %3100 = vrot.lane.b32.xlu0 %v1153, 104
      %v3101 = vpop.permute.xlu0 %3100
      %3102 = vrot.lane.b32.xlu0 %v1158, 104
      %v3103 = vpop.permute.xlu0 %3102
      %3104 = vrot.lane.b32.xlu0 %v1163, 104
      %v3105 = vpop.permute.xlu0 %3104
      %3106 = vrot.lane.b32.xlu0 %v1168, 104
      %v3107 = vpop.permute.xlu0 %3106
      %3108 = vrot.lane.b32.xlu0 %v1173, 104
      %v3109 = vpop.permute.xlu0 %3108
      %3110 = vrot.lane.b32.xlu0 %v1178, 104
      %v3111 = vpop.permute.xlu0 %3110
      %3112 = vrot.lane.b32.xlu0 %v1133, 72
      %v3113 = vpop.permute.xlu0 %3112
      %3114 = vrot.lane.b32.xlu0 %v1138, 72
      %v3115 = vpop.permute.xlu0 %3114
      %3116 = vrot.lane.b32.xlu0 %v1143, 72
      %v3117 = vpop.permute.xlu0 %3116
      %3118 = vrot.lane.b32.xlu0 %v1148, 72
      %v3119 = vpop.permute.xlu0 %3118
      %3120 = vrot.lane.b32.xlu0 %v1153, 72
      %v3121 = vpop.permute.xlu0 %3120
      %3122 = vrot.lane.b32.xlu0 %v1158, 72
      %v3123 = vpop.permute.xlu0 %3122
      %3124 = vrot.lane.b32.xlu0 %v1163, 72
      %v3125 = vpop.permute.xlu0 %3124
      %3126 = vrot.lane.b32.xlu0 %v1168, 72
      %v3127 = vpop.permute.xlu0 %3126
      %3128 = vrot.lane.b32.xlu0 %v1173, 72
      %v3129 = vpop.permute.xlu0 %3128
      %3130 = vrot.lane.b32.xlu0 %v1178, 72
      %v3131 = vpop.permute.xlu0 %3130
      %v3132 = vsel %vm1215, %v3093, 0
      %v3134 = vsel %vm1215, %v3095, 0
      %v3136 = vsel %vm1215, %v3097, 0
      %v3138 = vsel %vm1215, %v3099, 0
      %v3140 = vsel %vm1215, %v3101, 0
      %v3142 = vsel %vm1215, %v3103, 0
      %v3144 = vsel %vm1215, %v3105, 0
      %v3146 = vsel %vm1215, %v3107, 0
      %v3148 = vsel %vm1215, %v3109, 0
      %v3150 = vsel %vm1215, %v3111, 0
      %v3152 = vsel %vm1215, %v3113, 0
      %v3154 = vsel %vm1215, %v3115, 0
      %v3156 = vsel %vm1215, %v3117, 0
      %v3158 = vsel %vm1215, %v3119, 0
      %v3160 = vsel %vm1215, %v3121, 0
      %v3162 = vsel %vm1215, %v3123, 0
      %v3164 = vsel %vm1215, %v3125, 0
      %v3166 = vsel %vm1215, %v3127, 0
      %v3168 = vsel %vm1215, %v3129, 0
      %v3170 = vsel %vm1215, %v3131, 0
      %3172 = vmatprep.subr.mxu0 0.0
      %3173 = vmatpush1.xpose.msra.mxu0 0.0
      %3174 = vmatprep.subr.mxu0 0.0
      %3175 = vmatpush1.xpose.msra.mxu0 0.0
      %3176 = vmatprep.subr.mxu0 0.0
      %3177 = vmatpush1.xpose.msra.mxu0 0.0
      %3178 = vmatprep.subr.mxu0 0.0
      %3179 = vmatpush1.xpose.msra.mxu0 0.0
      %3180 = vmatprep.subr.mxu0 0.0
      %3181 = vmatpush1.xpose.msra.mxu0 0.0
      %3182 = vmatprep.subr.mxu0 0.0
      %3183 = vmatpush1.xpose.msra.mxu0 0.0
      %3184 = vmatprep.subr.mxu0 0.0
      %3185 = vmatpush1.xpose.msra.mxu0 %v3170
      %3186 = vmatprep.subr.mxu0 0.0
      %3187 = vmatpush1.xpose.msra.mxu0 %v3168
      %3188 = vmatprep.subr.mxu0 0.0
      %3189 = vmatpush1.xpose.msra.mxu0 %v3166
      %3190 = vmatprep.subr.mxu0 0.0
      %3191 = vmatpush1.xpose.msra.mxu0 %v3164
      %3192 = vmatprep.subr.mxu0 0.0
      %3193 = vmatpush1.xpose.msra.mxu0 %v3162
      %3194 = vmatprep.subr.mxu0 0.0
      %3195 = vmatpush1.xpose.msra.mxu0 %v3160
      %3196 = vmatprep.subr.mxu0 0.0
      %3197 = vmatpush1.xpose.msra.mxu0 %v3158
      %3198 = vmatprep.subr.mxu0 0.0
      %3199 = vmatpush1.xpose.msra.mxu0 %v3156
      %3200 = vmatprep.subr.mxu0 0.0
      %3201 = vmatpush1.xpose.msra.mxu0 %v3154
      %3202 = vmatprep.subr.mxu0 0.0
      %3203 = vmatpush1.xpose.msra.mxu0 %v3152
      %3204 = vmatprep.subr.mxu0 0.0
      %3205 = vmatpush2.xpose.msra.mxu0 0.0
      %3206 = vmatprep.subr.mxu0 0.0
      %3207 = vmatpush2.xpose.msra.mxu0 0.0
      %3208 = vmatprep.subr.mxu0 0.0
      %3209 = vmatpush2.xpose.msra.mxu0 0.0
      %3210 = vmatprep.subr.mxu0 0.0
      %3211 = vmatpush2.xpose.msra.mxu0 0.0
      %3212 = vmatprep.subr.mxu0 0.0
      %3213 = vmatpush2.xpose.msra.mxu0 0.0
      %3214 = vmatprep.subr.mxu0 0.0
      %3215 = vmatpush2.xpose.msra.mxu0 0.0
      %3216 = vmatprep.subr.mxu0 0.0
      %3217 = vmatpush2.xpose.msra.mxu0 0.0
      %3218 = vmatprep.subr.mxu0 0.0
      %3219 = vmatpush2.xpose.msra.mxu0 0.0
      %3220 = vmatprep.subr.mxu0 0.0
      %3221 = vmatpush2.xpose.msra.mxu0 0.0
      %3222 = vmatprep.subr.mxu0 0.0
      %3223 = vmatpush2.xpose.msra.mxu0 0.0
      %3224 = vmatprep.subr.mxu0 0.0
      %3225 = vmatpush2.xpose.msra.mxu0 0.0
      %3226 = vmatprep.subr.mxu0 0.0
      %3227 = vmatpush2.xpose.msra.mxu0 0.0
      %3228 = vmatprep.subr.mxu0 0.0
      %3229 = vmatpush2.xpose.msra.mxu0 0.0
      %3230 = vmatprep.subr.mxu0 0.0
      %3231 = vmatpush2.xpose.msra.mxu0 0.0
      %3232 = vmatprep.subr.mxu0 0.0
      %3233 = vmatpush2.xpose.msra.mxu0 0.0
      %3234 = vmatprep.subr.mxu0 0.0
      %3235 = vmatpush2.xpose.msra.mxu0 0.0
      %3236 = vmatprep.mubr.f32.mxu0 0.0
      %3237 = vmatmul.mubr.f32.gmra.mxu0 %v3132
      %v3238 = vpop.f32.mrf.mxu0
      %v3239 = vadd.f32 0.0, %v3238
      %v3240 = vpop.f32.mrf.mxu0
      %3241 = vmatprep.mubr.f32.mxu0 0.0
      %3242 = vmatmul.mubr.f32.gmra.mxu0 %v3134
      %v3243 = vpop.f32.mrf.mxu0
      %v3244 = vadd.f32 0.0, %v3243
      %v3245 = vpop.f32.mrf.mxu0
      %3246 = vmatprep.mubr.f32.mxu0 0.0
      %3247 = vmatmul.mubr.f32.gmra.mxu0 %v3136
      %v3248 = vpop.f32.mrf.mxu0
      %v3249 = vadd.f32 0.0, %v3248
      %v3250 = vpop.f32.mrf.mxu0
      %3251 = vmatprep.mubr.f32.mxu0 0.0
      %3252 = vmatmul.mubr.f32.gmra.mxu0 %v3138
      %v3253 = vpop.f32.mrf.mxu0
      %v3254 = vadd.f32 0.0, %v3253
      %v3255 = vpop.f32.mrf.mxu0
      %3256 = vmatprep.mubr.f32.mxu0 0.0
      %3257 = vmatmul.mubr.f32.gmra.mxu0 %v3140
      %v3258 = vpop.f32.mrf.mxu0
      %v3259 = vadd.f32 0.0, %v3258
      %v3260 = vpop.f32.mrf.mxu0
      %3261 = vmatprep.mubr.f32.mxu0 0.0
      %3262 = vmatmul.mubr.f32.gmra.mxu0 %v3142
      %v3263 = vpop.f32.mrf.mxu0
      %v3264 = vadd.f32 0.0, %v3263
      %v3265 = vpop.f32.mrf.mxu0
      %3266 = vmatprep.mubr.f32.mxu0 0.0
      %3267 = vmatmul.mubr.f32.gmra.mxu0 %v3144
      %v3268 = vpop.f32.mrf.mxu0
      %v3269 = vadd.f32 0.0, %v3268
      %v3270 = vpop.f32.mrf.mxu0
      %3271 = vmatprep.mubr.f32.mxu0 0.0
      %3272 = vmatmul.mubr.f32.gmra.mxu0 %v3146
      %v3273 = vpop.f32.mrf.mxu0
      %v3274 = vadd.f32 0.0, %v3273
      %v3275 = vpop.f32.mrf.mxu0
      %3276 = vmatprep.mubr.f32.mxu0 0.0
      %3277 = vmatmul.mubr.f32.gmra.mxu0 %v3148
      %v3278 = vpop.f32.mrf.mxu0
      %v3279 = vadd.f32 0.0, %v3278
      %v3280 = vpop.f32.mrf.mxu0
      %3281 = vmatprep.mubr.f32.mxu0 0.0
      %3282 = vmatmul.mubr.f32.gmra.mxu0 %v3150
      %v3283 = vpop.f32.mrf.mxu0
      %v3284 = vadd.f32 0.0, %v3283
      %v3285 = vpop.f32.mrf.mxu0
      %3286 = vdwg.mxu0
      %v3287 = vmul.f32 %v3239, 0.35355338
      %v3288 = vmul.f32 %v3244, 0.35355338
      %v3289 = vmul.f32 %v3249, 0.35355338
      %v3290 = vmul.f32 %v3254, 0.35355338
      %v3291 = vmul.f32 %v3259, 0.35355338
      %v3292 = vmul.f32 %v3264, 0.35355338
      %v3293 = vmul.f32 %v3269, 0.35355338
      %v3294 = vmul.f32 %v3274, 0.35355338
      %v3295 = vmul.f32 %v3279, 0.35355338
      %v3296 = vmul.f32 %v3284, 0.35355338
      %v3297 = vsel %vm1381, %v3287, -inf
      %3298 = vmax.xlane.f32.xlu0 %v3297
      %v3299 = vpop.xlane.xlu0 %3298
      %v3300 = vsel %vm1381, %v3288, -inf
      %3301 = vmax.xlane.f32.xlu0 %v3300
      %v3302 = vpop.xlane.xlu0 %3301
      %v3303 = vsel %vm1381, %v3289, -inf
      %3304 = vmax.xlane.f32.xlu0 %v3303
      %v3305 = vpop.xlane.xlu0 %3304
      %v3306 = vsel %vm1381, %v3290, -inf
      %3307 = vmax.xlane.f32.xlu0 %v3306
      %v3308 = vpop.xlane.xlu0 %3307
      %v3309 = vsel %vm1381, %v3291, -inf
      %3310 = vmax.xlane.f32.xlu0 %v3309
      %v3311 = vpop.xlane.xlu0 %3310
      %v3312 = vsel %vm1381, %v3292, -inf
      %3313 = vmax.xlane.f32.xlu0 %v3312
      %v3314 = vpop.xlane.xlu0 %3313
      %v3315 = vsel %vm1381, %v3293, -inf
      %3316 = vmax.xlane.f32.xlu0 %v3315
      %v3317 = vpop.xlane.xlu0 %3316
      %v3318 = vsel %vm1381, %v3294, -inf
      %3319 = vmax.xlane.f32.xlu0 %v3318
      %v3320 = vpop.xlane.xlu0 %3319
      %v3321 = vsel %vm1381, %v3295, -inf
      %3322 = vmax.xlane.f32.xlu0 %v3321
      %v3323 = vpop.xlane.xlu0 %3322
      %v3324 = vsel %vm1381, %v3296, -inf
      %3325 = vmax.xlane.f32.xlu0 %v3324
      %v3326 = vpop.xlane.xlu0 %3325
      %v3327 = vsub.f32 %v3287, %v3299
      %v3328 = vsub.f32 %v3288, %v3302
      %v3329 = vsub.f32 %v3289, %v3305
      %v3330 = vsub.f32 %v3290, %v3308
      %v3331 = vsub.f32 %v3291, %v3311
      %v3332 = vsub.f32 %v3292, %v3314
      %v3333 = vsub.f32 %v3293, %v3317
      %v3334 = vsub.f32 %v3294, %v3320
      %v3335 = vsub.f32 %v3295, %v3323
      %v3336 = vsub.f32 %v3296, %v3326
      %v3337 = vmul.f32 %v3327, 1.442695
      %v3338 = vpow.pop %v3337
      %v3339 = vmul.f32 %v3328, 1.442695
      %v3340 = vpow.pop %v3339
      %v3341 = vmul.f32 %v3329, 1.442695
      %v3342 = vpow.pop %v3341
      %v3343 = vmul.f32 %v3330, 1.442695
      %v3344 = vpow.pop %v3343
      %v3345 = vmul.f32 %v3331, 1.442695
      %v3346 = vpow.pop %v3345
      %v3347 = vmul.f32 %v3332, 1.442695
      %v3348 = vpow.pop %v3347
      %v3349 = vmul.f32 %v3333, 1.442695
      %v3350 = vpow.pop %v3349
      %v3351 = vmul.f32 %v3334, 1.442695
      %v3352 = vpow.pop %v3351
      %v3353 = vmul.f32 %v3335, 1.442695
      %v3354 = vpow.pop %v3353
      %v3355 = vmul.f32 %v3336, 1.442695
      %v3356 = vpow.pop %v3355
      %v3357 = vsel %vm1381, %v3338, 0.0
      %3358 = vadd.xlane.f32.xlu0 %v3357
      %v3359 = vpop.xlane.xlu0 %3358
      %v3360 = vsel %vm1381, %v3340, 0.0
      %3361 = vadd.xlane.f32.xlu0 %v3360
      %v3362 = vpop.xlane.xlu0 %3361
      %v3363 = vsel %vm1381, %v3342, 0.0
      %3364 = vadd.xlane.f32.xlu0 %v3363
      %v3365 = vpop.xlane.xlu0 %3364
      %v3366 = vsel %vm1381, %v3344, 0.0
      %3367 = vadd.xlane.f32.xlu0 %v3366
      %v3368 = vpop.xlane.xlu0 %3367
      %v3369 = vsel %vm1381, %v3346, 0.0
      %3370 = vadd.xlane.f32.xlu0 %v3369
      %v3371 = vpop.xlane.xlu0 %3370
      %v3372 = vsel %vm1381, %v3348, 0.0
      %3373 = vadd.xlane.f32.xlu0 %v3372
      %v3374 = vpop.xlane.xlu0 %3373
      %v3375 = vsel %vm1381, %v3350, 0.0
      %3376 = vadd.xlane.f32.xlu0 %v3375
      %v3377 = vpop.xlane.xlu0 %3376
      %v3378 = vsel %vm1381, %v3352, 0.0
      %3379 = vadd.xlane.f32.xlu0 %v3378
      %v3380 = vpop.xlane.xlu0 %3379
      %v3381 = vsel %vm1381, %v3354, 0.0
      %3382 = vadd.xlane.f32.xlu0 %v3381
      %v3383 = vpop.xlane.xlu0 %3382
      %v3384 = vsel %vm1381, %v3356, 0.0
      %3385 = vadd.xlane.f32.xlu0 %v3384
      %v3386 = vpop.xlane.xlu0 %3385
      %v3387 = vrcp.pop %v3359
      %v3388 = vrcp.pop %v3362
      %v3389 = vrcp.pop %v3365
      %v3390 = vrcp.pop %v3368
      %v3391 = vrcp.pop %v3371
      %v3392 = vrcp.pop %v3374
      %v3393 = vrcp.pop %v3377
      %v3394 = vrcp.pop %v3380
      %v3395 = vrcp.pop %v3383
      %v3396 = vrcp.pop %v3386
      %v3397 = vmul.f32 %v3338, %v3387
      %v3398 = vmul.f32 %v3340, %v3388
      %v3399 = vmul.f32 %v3342, %v3389
      %v3400 = vmul.f32 %v3344, %v3390
      %v3401 = vmul.f32 %v3346, %v3391
      %v3402 = vmul.f32 %v3348, %v3392
      %v3403 = vmul.f32 %v3350, %v3393
      %v3404 = vmul.f32 %v3352, %v3394
      %v3405 = vmul.f32 %v3354, %v3395
      %v3406 = vmul.f32 %v3356, %v3396
      %3407 = vrot.lane.b32.xlu0 %v1133, 40
      %v3408 = vpop.permute.xlu0 %3407
      %3409 = vrot.lane.b32.xlu0 %v1138, 40
      %v3410 = vpop.permute.xlu0 %3409
      %3411 = vrot.lane.b32.xlu0 %v1143, 40
      %v3412 = vpop.permute.xlu0 %3411
      %3413 = vrot.lane.b32.xlu0 %v1148, 40
      %v3414 = vpop.permute.xlu0 %3413
      %3415 = vrot.lane.b32.xlu0 %v1153, 40
      %v3416 = vpop.permute.xlu0 %3415
      %3417 = vrot.lane.b32.xlu0 %v1158, 40
      %v3418 = vpop.permute.xlu0 %3417
      %3419 = vrot.lane.b32.xlu0 %v1163, 40
      %v3420 = vpop.permute.xlu0 %3419
      %3421 = vrot.lane.b32.xlu0 %v1168, 40
      %v3422 = vpop.permute.xlu0 %3421
      %3423 = vrot.lane.b32.xlu0 %v1173, 40
      %v3424 = vpop.permute.xlu0 %3423
      %3425 = vrot.lane.b32.xlu0 %v1178, 40
      %v3426 = vpop.permute.xlu0 %3425
      %v3438 = vsel %vm1381, %v3397, 0
      %v3441 = vsel %vm1381, %v3398, 0
      %v3444 = vsel %vm1381, %v3399, 0
      %v3447 = vsel %vm1381, %v3400, 0
      %v3450 = vsel %vm1381, %v3401, 0
      %v3453 = vsel %vm1381, %v3402, 0
      %v3456 = vsel %vm1381, %v3403, 0
      %v3459 = vsel %vm1381, %v3404, 0
      %v3462 = vsel %vm1381, %v3405, 0
      %v3465 = vsel %vm1381, %v3406, 0
      %3467 = vmatprep.subr.mxu0 0.0
      %3468 = vmatpush1.msra.mxu0 0.0
      %3469 = vmatprep.subr.mxu0 0.0
      %3470 = vmatpush1.msra.mxu0 0.0
      %3471 = vmatprep.subr.mxu0 0.0
      %3472 = vmatpush1.msra.mxu0 0.0
      %3473 = vmatprep.subr.mxu0 0.0
      %3474 = vmatpush1.msra.mxu0 0.0
      %3475 = vmatprep.subr.mxu0 0.0
      %3476 = vmatpush1.msra.mxu0 0.0
      %3477 = vmatprep.subr.mxu0 0.0
      %3478 = vmatpush1.msra.mxu0 0.0
      %3479 = vmatprep.subr.mxu0 0.0
      %3480 = vmatpush1.msra.mxu0 %v3426
      %3481 = vmatprep.subr.mxu0 0.0
      %3482 = vmatpush1.msra.mxu0 %v3424
      %3483 = vmatprep.subr.mxu0 0.0
      %3484 = vmatpush1.msra.mxu0 %v3422
      %3485 = vmatprep.subr.mxu0 0.0
      %3486 = vmatpush1.msra.mxu0 %v3420
      %3487 = vmatprep.subr.mxu0 0.0
      %3488 = vmatpush1.msra.mxu0 %v3418
      %3489 = vmatprep.subr.mxu0 0.0
      %3490 = vmatpush1.msra.mxu0 %v3416
      %3491 = vmatprep.subr.mxu0 0.0
      %3492 = vmatpush1.msra.mxu0 %v3414
      %3493 = vmatprep.subr.mxu0 0.0
      %3494 = vmatpush1.msra.mxu0 %v3412
      %3495 = vmatprep.subr.mxu0 0.0
      %3496 = vmatpush1.msra.mxu0 %v3410
      %3497 = vmatprep.subr.mxu0 0.0
      %3498 = vmatpush1.msra.mxu0 %v3408
      %3499 = vmatprep.subr.mxu0 0.0
      %3500 = vmatpush2.msra.mxu0 0.0
      %3501 = vmatprep.subr.mxu0 0.0
      %3502 = vmatpush2.msra.mxu0 0.0
      %3503 = vmatprep.subr.mxu0 0.0
      %3504 = vmatpush2.msra.mxu0 0.0
      %3505 = vmatprep.subr.mxu0 0.0
      %3506 = vmatpush2.msra.mxu0 0.0
      %3507 = vmatprep.subr.mxu0 0.0
      %3508 = vmatpush2.msra.mxu0 0.0
      %3509 = vmatprep.subr.mxu0 0.0
      %3510 = vmatpush2.msra.mxu0 0.0
      %3511 = vmatprep.subr.mxu0 0.0
      %3512 = vmatpush2.msra.mxu0 0.0
      %3513 = vmatprep.subr.mxu0 0.0
      %3514 = vmatpush2.msra.mxu0 0.0
      %3515 = vmatprep.subr.mxu0 0.0
      %3516 = vmatpush2.msra.mxu0 0.0
      %3517 = vmatprep.subr.mxu0 0.0
      %3518 = vmatpush2.msra.mxu0 0.0
      %3519 = vmatprep.subr.mxu0 0.0
      %3520 = vmatpush2.msra.mxu0 0.0
      %3521 = vmatprep.subr.mxu0 0.0
      %3522 = vmatpush2.msra.mxu0 0.0
      %3523 = vmatprep.subr.mxu0 0.0
      %3524 = vmatpush2.msra.mxu0 0.0
      %3525 = vmatprep.subr.mxu0 0.0
      %3526 = vmatpush2.msra.mxu0 0.0
      %3527 = vmatprep.subr.mxu0 0.0
      %3528 = vmatpush2.msra.mxu0 0.0
      %3529 = vmatprep.subr.mxu0 0.0
      %3530 = vmatpush2.msra.mxu0 0.0
      %3531 = vmatprep.mubr.f32.mxu0 0.0
      %3532 = vmatmul.mubr.f32.gmra.mxu0 %v3438
      %v3533 = vpop.f32.mrf.mxu0
      %v3534 = vadd.f32 0.0, %v3533
      %v3535 = vpop.f32.mrf.mxu0
      %3536 = vmatprep.mubr.f32.mxu0 0.0
      %3537 = vmatmul.mubr.f32.gmra.mxu0 %v3441
      %v3538 = vpop.f32.mrf.mxu0
      %v3539 = vadd.f32 0.0, %v3538
      %v3540 = vpop.f32.mrf.mxu0
      %3541 = vmatprep.mubr.f32.mxu0 0.0
      %3542 = vmatmul.mubr.f32.gmra.mxu0 %v3444
      %v3543 = vpop.f32.mrf.mxu0
      %v3544 = vadd.f32 0.0, %v3543
      %v3545 = vpop.f32.mrf.mxu0
      %3546 = vmatprep.mubr.f32.mxu0 0.0
      %3547 = vmatmul.mubr.f32.gmra.mxu0 %v3447
      %v3548 = vpop.f32.mrf.mxu0
      %v3549 = vadd.f32 0.0, %v3548
      %v3550 = vpop.f32.mrf.mxu0
      %3551 = vmatprep.mubr.f32.mxu0 0.0
      %3552 = vmatmul.mubr.f32.gmra.mxu0 %v3450
      %v3553 = vpop.f32.mrf.mxu0
      %v3554 = vadd.f32 0.0, %v3553
      %v3555 = vpop.f32.mrf.mxu0
      %3556 = vmatprep.mubr.f32.mxu0 0.0
      %3557 = vmatmul.mubr.f32.gmra.mxu0 %v3453
      %v3558 = vpop.f32.mrf.mxu0
      %v3559 = vadd.f32 0.0, %v3558
      %v3560 = vpop.f32.mrf.mxu0
      %3561 = vmatprep.mubr.f32.mxu0 0.0
      %3562 = vmatmul.mubr.f32.gmra.mxu0 %v3456
      %v3563 = vpop.f32.mrf.mxu0
      %v3564 = vadd.f32 0.0, %v3563
      %v3565 = vpop.f32.mrf.mxu0
      %3566 = vmatprep.mubr.f32.mxu0 0.0
      %3567 = vmatmul.mubr.f32.gmra.mxu0 %v3459
      %v3568 = vpop.f32.mrf.mxu0
      %v3569 = vadd.f32 0.0, %v3568
      %v3570 = vpop.f32.mrf.mxu0
      %3571 = vmatprep.mubr.f32.mxu0 0.0
      %3572 = vmatmul.mubr.f32.gmra.mxu0 %v3462
      %v3573 = vpop.f32.mrf.mxu0
      %v3574 = vadd.f32 0.0, %v3573
      %v3575 = vpop.f32.mrf.mxu0
      %3576 = vmatprep.mubr.f32.mxu0 0.0
      %3577 = vmatmul.mubr.f32.gmra.mxu0 %v3465
      %v3578 = vpop.f32.mrf.mxu0
      %v3579 = vadd.f32 0.0, %v3578
      %v3580 = vpop.f32.mrf.mxu0
      %3581 = vdwg.mxu0
      %v3583 = vsel %vm1215, %v3534, 0
      %v3586 = vsel %vm1215, %v3539, 0
      %v3589 = vsel %vm1215, %v3544, 0
      %v3592 = vsel %vm1215, %v3549, 0
      %v3595 = vsel %vm1215, %v3554, 0
      %v3598 = vsel %vm1215, %v3559, 0
      %v3601 = vsel %vm1215, %v3564, 0
      %v3604 = vsel %vm1215, %v3569, 0
      %v3607 = vsel %vm1215, %v3574, 0
      %v3610 = vsel %vm1215, %v3579, 0
      %3612 = vmatprep.subr.mxu0 0.0
      %3613 = vmatpush1.msra.mxu0 0.0
      %3614 = vmatprep.subr.mxu0 0.0
      %3615 = vmatpush1.msra.mxu0 0.0
      %3616 = vmatprep.subr.mxu0 0.0
      %3617 = vmatpush1.msra.mxu0 0.0
      %3618 = vmatprep.subr.mxu0 0.0
      %3619 = vmatpush1.msra.mxu0 0.0
      %3620 = vmatprep.subr.mxu0 0.0
      %3621 = vmatpush1.msra.mxu0 0.0
      %3622 = vmatprep.subr.mxu0 0.0
      %3623 = vmatpush1.msra.mxu0 0.0
      %3624 = vmatprep.subr.mxu0 0.0
      %3625 = vmatpush1.msra.mxu0 0.0
      %3626 = vmatprep.subr.mxu0 0.0
      %3627 = vmatpush1.msra.mxu0 0.0
      %3628 = vmatprep.subr.mxu0 0.0
      %3629 = vmatpush1.msra.mxu0 0.0
      %3630 = vmatprep.subr.mxu0 0.0
      %3631 = vmatpush1.msra.mxu0 0.0
      %3632 = vmatprep.subr.mxu0 0.0
      %3633 = vmatpush1.msra.mxu0 0.0
      %3634 = vmatprep.subr.mxu0 0.0
      %3635 = vmatpush1.msra.mxu0 0.0
      %3636 = vmatprep.subr.mxu0 0.0
      %3637 = vmatpush1.msra.mxu0 0.0
      %3638 = vmatprep.subr.mxu0 0.0
      %3639 = vmatpush1.msra.mxu0 0.0
      %3640 = vmatprep.subr.mxu0 0.0
      %3641 = vmatpush1.msra.mxu0 0.0
      %3642 = vmatprep.subr.mxu0 0.0
      %3643 = vmatpush1.msra.mxu0 %v1184
      %3644 = vmatprep.subr.mxu0 0.0
      %3645 = vmatpush2.msra.mxu0 0.0
      %3646 = vmatprep.subr.mxu0 0.0
      %3647 = vmatpush2.msra.mxu0 0.0
      %3648 = vmatprep.subr.mxu0 0.0
      %3649 = vmatpush2.msra.mxu0 0.0
      %3650 = vmatprep.subr.mxu0 0.0
      %3651 = vmatpush2.msra.mxu0 0.0
      %3652 = vmatprep.subr.mxu0 0.0
      %3653 = vmatpush2.msra.mxu0 0.0
      %3654 = vmatprep.subr.mxu0 0.0
      %3655 = vmatpush2.msra.mxu0 0.0
      %3656 = vmatprep.subr.mxu0 0.0
      %3657 = vmatpush2.msra.mxu0 0.0
      %3658 = vmatprep.subr.mxu0 0.0
      %3659 = vmatpush2.msra.mxu0 0.0
      %3660 = vmatprep.subr.mxu0 0.0
      %3661 = vmatpush2.msra.mxu0 0.0
      %3662 = vmatprep.subr.mxu0 0.0
      %3663 = vmatpush2.msra.mxu0 0.0
      %3664 = vmatprep.subr.mxu0 0.0
      %3665 = vmatpush2.msra.mxu0 0.0
      %3666 = vmatprep.subr.mxu0 0.0
      %3667 = vmatpush2.msra.mxu0 0.0
      %3668 = vmatprep.subr.mxu0 0.0
      %3669 = vmatpush2.msra.mxu0 0.0
      %3670 = vmatprep.subr.mxu0 0.0
      %3671 = vmatpush2.msra.mxu0 0.0
      %3672 = vmatprep.subr.mxu0 0.0
      %3673 = vmatpush2.msra.mxu0 0.0
      %3674 = vmatprep.subr.mxu0 0.0
      %3675 = vmatpush2.msra.mxu0 0.0
      %3676 = vmatprep.mubr.f32.mxu0 0.0
      %3677 = vmatmul.mubr.f32.gmra.mxu0 %v3583
      %v3678 = vpop.f32.mrf.mxu0
      %v3679 = vadd.f32 0.0, %v3678
      %v3680 = vpop.f32.mrf.mxu0
      %3681 = vmatprep.mubr.f32.mxu0 0.0
      %3682 = vmatmul.mubr.f32.gmra.mxu0 %v3586
      %v3683 = vpop.f32.mrf.mxu0
      %v3684 = vadd.f32 0.0, %v3683
      %v3685 = vpop.f32.mrf.mxu0
      %3686 = vmatprep.mubr.f32.mxu0 0.0
      %3687 = vmatmul.mubr.f32.gmra.mxu0 %v3589
      %v3688 = vpop.f32.mrf.mxu0
      %v3689 = vadd.f32 0.0, %v3688
      %v3690 = vpop.f32.mrf.mxu0
      %3691 = vmatprep.mubr.f32.mxu0 0.0
      %3692 = vmatmul.mubr.f32.gmra.mxu0 %v3592
      %v3693 = vpop.f32.mrf.mxu0
      %v3694 = vadd.f32 0.0, %v3693
      %v3695 = vpop.f32.mrf.mxu0
      %3696 = vmatprep.mubr.f32.mxu0 0.0
      %3697 = vmatmul.mubr.f32.gmra.mxu0 %v3595
      %v3698 = vpop.f32.mrf.mxu0
      %v3699 = vadd.f32 0.0, %v3698
      %v3700 = vpop.f32.mrf.mxu0
      %3701 = vmatprep.mubr.f32.mxu0 0.0
      %3702 = vmatmul.mubr.f32.gmra.mxu0 %v3598
      %v3703 = vpop.f32.mrf.mxu0
      %v3704 = vadd.f32 0.0, %v3703
      %v3705 = vpop.f32.mrf.mxu0
      %3706 = vmatprep.mubr.f32.mxu0 0.0
      %3707 = vmatmul.mubr.f32.gmra.mxu0 %v3601
      %v3708 = vpop.f32.mrf.mxu0
      %v3709 = vadd.f32 0.0, %v3708
      %v3710 = vpop.f32.mrf.mxu0
      %3711 = vmatprep.mubr.f32.mxu0 0.0
      %3712 = vmatmul.mubr.f32.gmra.mxu0 %v3604
      %v3713 = vpop.f32.mrf.mxu0
      %v3714 = vadd.f32 0.0, %v3713
      %v3715 = vpop.f32.mrf.mxu0
      %3716 = vmatprep.mubr.f32.mxu0 0.0
      %3717 = vmatmul.mubr.f32.gmra.mxu0 %v3607
      %v3718 = vpop.f32.mrf.mxu0
      %v3719 = vadd.f32 0.0, %v3718
      %v3720 = vpop.f32.mrf.mxu0
      %3721 = vmatprep.mubr.f32.mxu0 0.0
      %3722 = vmatmul.mubr.f32.gmra.mxu0 %v3610
      %v3723 = vpop.f32.mrf.mxu0
      %v3724 = vadd.f32 0.0, %v3723
      %v3725 = vpop.f32.mrf.mxu0
      %3726 = vdwg.mxu0
      %v3727 = vadd.f32 %v3082, %v3679
      %v3728 = vadd.f32 %v3083, %v3684
      %v3729 = vadd.f32 %v3084, %v3689
      %v3730 = vadd.f32 %v3085, %v3694
      %v3731 = vadd.f32 %v3086, %v3699
      %v3732 = vadd.f32 %v3087, %v3704
      %v3733 = vadd.f32 %v3088, %v3709
      %v3734 = vadd.f32 %v3089, %v3714
      %v3735 = vadd.f32 %v3090, %v3719
      %v3736 = vadd.f32 %v3091, %v3724
      %v3737 = vadd.f32 %v849, %v3727
      %v3738 = vadd.f32 %v850, %v3728
      %v3739 = vadd.f32 %v851, %v3729
      %v3740 = vadd.f32 %v852, %v3730
      %v3741 = vadd.f32 %v853, %v3731
      %v3742 = vadd.f32 %v854, %v3732
      %v3743 = vadd.f32 %v855, %v3733
      %v3744 = vadd.f32 %v856, %v3734
      %v3745 = vadd.f32 %v857, %v3735
      %v3746 = vadd.f32 %v858, %v3736
      %v3747 = vld [vmem:[%s9] sm:$0x1]
      %v3749 = vlaneseq
      %v3750 = vshrl.u32 %v3749, 7
      %v3751 = vsub.s32 0, %v3750
      %v3752 = vrot.slane %v3747, %v3751
      %v3754 = vadd.f32 %v3737, %v3752
      %v3755 = vadd.f32 %v3738, %v3752
      %v3756 = vadd.f32 %v3739, %v3752
      %v3757 = vadd.f32 %v3740, %v3752
      %v3758 = vadd.f32 %v3741, %v3752
      %v3759 = vadd.f32 %v3742, %v3752
      %v3760 = vadd.f32 %v3743, %v3752
      %v3761 = vadd.f32 %v3744, %v3752
      %v3762 = vadd.f32 %v3745, %v3752
      %v3763 = vadd.f32 %v3746, %v3752
      %v3764 = vld [vmem:[%s10] sm:$0x1]
      %v3765 = vld [vmem:[%s11] sm:$0x1]
      %v3766 = vsel %vm861, %v3754, 0.0
      %3767 = vadd.xlane.f32.xlu0 %v3766
      %v3768 = vpop.xlane.xlu0 %3767
      %v3769 = vsel %vm861, %v3755, 0.0
      %3770 = vadd.xlane.f32.xlu0 %v3769
      %v3771 = vpop.xlane.xlu0 %3770
      %v3772 = vsel %vm861, %v3756, 0.0
      %3773 = vadd.xlane.f32.xlu0 %v3772
      %v3774 = vpop.xlane.xlu0 %3773
      %v3775 = vsel %vm861, %v3757, 0.0
      %3776 = vadd.xlane.f32.xlu0 %v3775
      %v3777 = vpop.xlane.xlu0 %3776
      %v3778 = vsel %vm861, %v3758, 0.0
      %3779 = vadd.xlane.f32.xlu0 %v3778
      %v3780 = vpop.xlane.xlu0 %3779
      %v3781 = vsel %vm861, %v3759, 0.0
      %3782 = vadd.xlane.f32.xlu0 %v3781
      %v3783 = vpop.xlane.xlu0 %3782
      %v3784 = vsel %vm861, %v3760, 0.0
      %3785 = vadd.xlane.f32.xlu0 %v3784
      %v3786 = vpop.xlane.xlu0 %3785
      %v3787 = vsel %vm861, %v3761, 0.0
      %3788 = vadd.xlane.f32.xlu0 %v3787
      %v3789 = vpop.xlane.xlu0 %3788
      %v3790 = vsel %vm861, %v3762, 0.0
      %3791 = vadd.xlane.f32.xlu0 %v3790
      %v3792 = vpop.xlane.xlu0 %3791
      %v3793 = vsel %vm861, %v3763, 0.0
      %3794 = vadd.xlane.f32.xlu0 %v3793
      %v3795 = vpop.xlane.xlu0 %3794
      %v3796 = vmul.f32 %v3768, %v892
      %v3797 = vmul.f32 %v3771, %v892
      %v3798 = vmul.f32 %v3774, %v892
      %v3799 = vmul.f32 %v3777, %v892
      %v3800 = vmul.f32 %v3780, %v892
      %v3801 = vmul.f32 %v3783, %v892
      %v3802 = vmul.f32 %v3786, %v892
      %v3803 = vmul.f32 %v3789, %v892
      %v3804 = vmul.f32 %v3792, %v892
      %v3805 = vmul.f32 %v3795, %v892
      %v3806 = vsub.f32 %v3754, %v3796
      %v3807 = vsub.f32 %v3755, %v3797
      %v3808 = vsub.f32 %v3756, %v3798
      %v3809 = vsub.f32 %v3757, %v3799
      %v3810 = vsub.f32 %v3758, %v3800
      %v3811 = vsub.f32 %v3759, %v3801
      %v3812 = vsub.f32 %v3760, %v3802
      %v3813 = vsub.f32 %v3761, %v3803
      %v3814 = vsub.f32 %v3762, %v3804
      %v3815 = vsub.f32 %v3763, %v3805
      %v3816 = vmul.f32 %v3806, %v3806
      %v3817 = vmul.f32 %v3807, %v3807
      %v3818 = vmul.f32 %v3808, %v3808
      %v3819 = vmul.f32 %v3809, %v3809
      %v3820 = vmul.f32 %v3810, %v3810
      %v3821 = vmul.f32 %v3811, %v3811
      %v3822 = vmul.f32 %v3812, %v3812
      %v3823 = vmul.f32 %v3813, %v3813
      %v3824 = vmul.f32 %v3814, %v3814
      %v3825 = vmul.f32 %v3815, %v3815
      %v3826 = vsel %vm861, %v3816, 0.0
      %3827 = vadd.xlane.f32.xlu0 %v3826
      %v3828 = vpop.xlane.xlu0 %3827
      %v3829 = vsel %vm861, %v3817, 0.0
      %3830 = vadd.xlane.f32.xlu0 %v3829
      %v3831 = vpop.xlane.xlu0 %3830
      %v3832 = vsel %vm861, %v3818, 0.0
      %3833 = vadd.xlane.f32.xlu0 %v3832
      %v3834 = vpop.xlane.xlu0 %3833
      %v3835 = vsel %vm861, %v3819, 0.0
      %3836 = vadd.xlane.f32.xlu0 %v3835
      %v3837 = vpop.xlane.xlu0 %3836
      %v3838 = vsel %vm861, %v3820, 0.0
      %3839 = vadd.xlane.f32.xlu0 %v3838
      %v3840 = vpop.xlane.xlu0 %3839
      %v3841 = vsel %vm861, %v3821, 0.0
      %3842 = vadd.xlane.f32.xlu0 %v3841
      %v3843 = vpop.xlane.xlu0 %3842
      %v3844 = vsel %vm861, %v3822, 0.0
      %3845 = vadd.xlane.f32.xlu0 %v3844
      %v3846 = vpop.xlane.xlu0 %3845
      %v3847 = vsel %vm861, %v3823, 0.0
      %3848 = vadd.xlane.f32.xlu0 %v3847
      %v3849 = vpop.xlane.xlu0 %3848
      %v3850 = vsel %vm861, %v3824, 0.0
      %3851 = vadd.xlane.f32.xlu0 %v3850
      %v3852 = vpop.xlane.xlu0 %3851
      %v3853 = vsel %vm861, %v3825, 0.0
      %3854 = vadd.xlane.f32.xlu0 %v3853
      %v3855 = vpop.xlane.xlu0 %3854
      %v3856 = vmul.f32 %v3828, %v892
      %v3857 = vmul.f32 %v3831, %v892
      %v3858 = vmul.f32 %v3834, %v892
      %v3859 = vmul.f32 %v3837, %v892
      %v3860 = vmul.f32 %v3840, %v892
      %v3861 = vmul.f32 %v3843, %v892
      %v3862 = vmul.f32 %v3846, %v892
      %v3863 = vmul.f32 %v3849, %v892
      %v3864 = vmul.f32 %v3852, %v892
      %v3865 = vmul.f32 %v3855, %v892
      %v3866 = vadd.f32 %v3856, 1e-06
      %v3867 = vadd.f32 %v3857, 1e-06
      %v3868 = vadd.f32 %v3858, 1e-06
      %v3869 = vadd.f32 %v3859, 1e-06
      %v3870 = vadd.f32 %v3860, 1e-06
      %v3871 = vadd.f32 %v3861, 1e-06
      %v3872 = vadd.f32 %v3862, 1e-06
      %v3873 = vadd.f32 %v3863, 1e-06
      %v3874 = vadd.f32 %v3864, 1e-06
      %v3875 = vadd.f32 %v3865, 1e-06
      %v3876 = vrsqrt.pop %v3866
      %v3877 = vrsqrt.pop %v3867
      %v3878 = vrsqrt.pop %v3868
      %v3879 = vrsqrt.pop %v3869
      %v3880 = vrsqrt.pop %v3870
      %v3881 = vrsqrt.pop %v3871
      %v3882 = vrsqrt.pop %v3872
      %v3883 = vrsqrt.pop %v3873
      %v3884 = vrsqrt.pop %v3874
      %v3885 = vrsqrt.pop %v3875
      %v3886 = vmul.f32 %v3806, %v3876
      %v3887 = vmul.f32 %v3807, %v3877
      %v3888 = vmul.f32 %v3808, %v3878
      %v3889 = vmul.f32 %v3809, %v3879
      %v3890 = vmul.f32 %v3810, %v3880
      %v3891 = vmul.f32 %v3811, %v3881
      %v3892 = vmul.f32 %v3812, %v3882
      %v3893 = vmul.f32 %v3813, %v3883
      %v3894 = vmul.f32 %v3814, %v3884
      %v3895 = vmul.f32 %v3815, %v3885
      %v3897 = vlaneseq
      %v3898 = vshrl.u32 %v3897, 7
      %v3899 = vsub.s32 0, %v3898
      %v3900 = vrot.slane %v3764, %v3899
      %v3902 = vmul.f32 %v3886, %v3900
      %v3903 = vmul.f32 %v3887, %v3900
      %v3904 = vmul.f32 %v3888, %v3900
      %v3905 = vmul.f32 %v3889, %v3900
      %v3906 = vmul.f32 %v3890, %v3900
      %v3907 = vmul.f32 %v3891, %v3900
      %v3908 = vmul.f32 %v3892, %v3900
      %v3909 = vmul.f32 %v3893, %v3900
      %v3910 = vmul.f32 %v3894, %v3900
      %v3911 = vmul.f32 %v3895, %v3900
      %v3913 = vlaneseq
      %v3914 = vshrl.u32 %v3913, 7
      %v3915 = vsub.s32 0, %v3914
      %v3916 = vrot.slane %v3765, %v3915
      %v3918 = vadd.f32 %v3902, %v3916
      %v3919 = vadd.f32 %v3903, %v3916
      %v3920 = vadd.f32 %v3904, %v3916
      %v3921 = vadd.f32 %v3905, %v3916
      %v3922 = vadd.f32 %v3906, %v3916
      %v3923 = vadd.f32 %v3907, %v3916
      %v3924 = vadd.f32 %v3908, %v3916
      %v3925 = vadd.f32 %v3909, %v3916
      %v3926 = vadd.f32 %v3910, %v3916
      %v3927 = vadd.f32 %v3911, %v3916
      %v3928 = vld [vmem:[%s12] sm:$0xff]
      %v3929 = vld [vmem:[%s12 + $0x8] sm:$0xff]
      %v3930 = vld [vmem:[%s12 + $0x10] sm:$0xff]
      %v3931 = vld [vmem:[%s12 + $0x18] sm:$0xff]
      %v3932 = vld [vmem:[%s13] sm:$0x1]
      %v3934 = vlaneseq
      %v3935 = vshrl.u32 %v3934, 7
      %v3936 = vsub.s32 0, %v3935
      %v3937 = vrot.slane %v3932, %v3936
      %v3940 = vsel %vm861, %v3918, 0
      %v3943 = vsel %vm861, %v3919, 0
      %v3946 = vsel %vm861, %v3920, 0
      %v3949 = vsel %vm861, %v3921, 0
      %v3952 = vsel %vm861, %v3922, 0
      %v3955 = vsel %vm861, %v3923, 0
      %v3958 = vsel %vm861, %v3924, 0
      %v3961 = vsel %vm861, %v3925, 0
      %v3964 = vsel %vm861, %v3926, 0
      %v3967 = vsel %vm861, %v3927, 0
      %3969 = vmatprep.subr.mxu0 0.0
      %3970 = vmatpush1.msra.mxu0 0.0
      %3971 = vmatprep.subr.mxu0 0.0
      %3972 = vmatpush1.msra.mxu0 0.0
      %3973 = vmatprep.subr.mxu0 0.0
      %3974 = vmatpush1.msra.mxu0 0.0
      %3975 = vmatprep.subr.mxu0 0.0
      %3976 = vmatpush1.msra.mxu0 0.0
      %3977 = vmatprep.subr.mxu0 0.0
      %3978 = vmatpush1.msra.mxu0 0.0
      %3979 = vmatprep.subr.mxu0 0.0
      %3980 = vmatpush1.msra.mxu0 0.0
      %3981 = vmatprep.subr.mxu0 0.0
      %3982 = vmatpush1.msra.mxu0 0.0
      %3983 = vmatprep.subr.mxu0 0.0
      %3984 = vmatpush1.msra.mxu0 0.0
      %3985 = vmatprep.subr.mxu0 0.0
      %3986 = vmatpush1.msra.mxu0 0.0
      %3987 = vmatprep.subr.mxu0 0.0
      %3988 = vmatpush1.msra.mxu0 0.0
      %3989 = vmatprep.subr.mxu0 0.0
      %3990 = vmatpush1.msra.mxu0 0.0
      %3991 = vmatprep.subr.mxu0 0.0
      %3992 = vmatpush1.msra.mxu0 0.0
      %3993 = vmatprep.subr.mxu0 0.0
      %3994 = vmatpush1.msra.mxu0 %v3931
      %3995 = vmatprep.subr.mxu0 0.0
      %3996 = vmatpush1.msra.mxu0 %v3930
      %3997 = vmatprep.subr.mxu0 0.0
      %3998 = vmatpush1.msra.mxu0 %v3929
      %3999 = vmatprep.subr.mxu0 0.0
      %4000 = vmatpush1.msra.mxu0 %v3928
      %4001 = vmatprep.subr.mxu0 0.0
      %4002 = vmatpush2.msra.mxu0 0.0
      %4003 = vmatprep.subr.mxu0 0.0
      %4004 = vmatpush2.msra.mxu0 0.0
      %4005 = vmatprep.subr.mxu0 0.0
      %4006 = vmatpush2.msra.mxu0 0.0
      %4007 = vmatprep.subr.mxu0 0.0
      %4008 = vmatpush2.msra.mxu0 0.0
      %4009 = vmatprep.subr.mxu0 0.0
      %4010 = vmatpush2.msra.mxu0 0.0
      %4011 = vmatprep.subr.mxu0 0.0
      %4012 = vmatpush2.msra.mxu0 0.0
      %4013 = vmatprep.subr.mxu0 0.0
      %4014 = vmatpush2.msra.mxu0 0.0
      %4015 = vmatprep.subr.mxu0 0.0
      %4016 = vmatpush2.msra.mxu0 0.0
      %4017 = vmatprep.subr.mxu0 0.0
      %4018 = vmatpush2.msra.mxu0 0.0
      %4019 = vmatprep.subr.mxu0 0.0
      %4020 = vmatpush2.msra.mxu0 0.0
      %4021 = vmatprep.subr.mxu0 0.0
      %4022 = vmatpush2.msra.mxu0 0.0
      %4023 = vmatprep.subr.mxu0 0.0
      %4024 = vmatpush2.msra.mxu0 0.0
      %4025 = vmatprep.subr.mxu0 0.0
      %4026 = vmatpush2.msra.mxu0 0.0
      %4027 = vmatprep.subr.mxu0 0.0
      %4028 = vmatpush2.msra.mxu0 0.0
      %4029 = vmatprep.subr.mxu0 0.0
      %4030 = vmatpush2.msra.mxu0 0.0
      %4031 = vmatprep.subr.mxu0 0.0
      %4032 = vmatpush2.msra.mxu0 0.0
      %4033 = vmatprep.mubr.f32.mxu0 0.0
      %4034 = vmatmul.mubr.f32.gmra.mxu0 %v3940
      %v4035 = vpop.f32.mrf.mxu0
      %v4036 = vadd.f32 %v3937, %v4035
      %v4037 = vpop.f32.mrf.mxu0
      %4038 = vmatprep.mubr.f32.mxu0 0.0
      %4039 = vmatmul.mubr.f32.gmra.mxu0 %v3943
      %v4040 = vpop.f32.mrf.mxu0
      %v4041 = vadd.f32 %v3937, %v4040
      %v4042 = vpop.f32.mrf.mxu0
      %4043 = vmatprep.mubr.f32.mxu0 0.0
      %4044 = vmatmul.mubr.f32.gmra.mxu0 %v3946
      %v4045 = vpop.f32.mrf.mxu0
      %v4046 = vadd.f32 %v3937, %v4045
      %v4047 = vpop.f32.mrf.mxu0
      %4048 = vmatprep.mubr.f32.mxu0 0.0
      %4049 = vmatmul.mubr.f32.gmra.mxu0 %v3949
      %v4050 = vpop.f32.mrf.mxu0
      %v4051 = vadd.f32 %v3937, %v4050
      %v4052 = vpop.f32.mrf.mxu0
      %4053 = vmatprep.mubr.f32.mxu0 0.0
      %4054 = vmatmul.mubr.f32.gmra.mxu0 %v3952
      %v4055 = vpop.f32.mrf.mxu0
      %v4056 = vadd.f32 %v3937, %v4055
      %v4057 = vpop.f32.mrf.mxu0
      %4058 = vmatprep.mubr.f32.mxu0 0.0
      %4059 = vmatmul.mubr.f32.gmra.mxu0 %v3955
      %v4060 = vpop.f32.mrf.mxu0
      %v4061 = vadd.f32 %v3937, %v4060
      %v4062 = vpop.f32.mrf.mxu0
      %4063 = vmatprep.mubr.f32.mxu0 0.0
      %4064 = vmatmul.mubr.f32.gmra.mxu0 %v3958
      %v4065 = vpop.f32.mrf.mxu0
      %v4066 = vadd.f32 %v3937, %v4065
      %v4067 = vpop.f32.mrf.mxu0
      %4068 = vmatprep.mubr.f32.mxu0 0.0
      %4069 = vmatmul.mubr.f32.gmra.mxu0 %v3961
      %v4070 = vpop.f32.mrf.mxu0
      %v4071 = vadd.f32 %v3937, %v4070
      %v4072 = vpop.f32.mrf.mxu0
      %4073 = vmatprep.mubr.f32.mxu0 0.0
      %4074 = vmatmul.mubr.f32.gmra.mxu0 %v3964
      %v4075 = vpop.f32.mrf.mxu0
      %v4076 = vadd.f32 %v3937, %v4075
      %v4077 = vpop.f32.mrf.mxu0
      %4078 = vmatprep.mubr.f32.mxu0 0.0
      %4079 = vmatmul.mubr.f32.gmra.mxu0 %v3967
      %v4080 = vpop.f32.mrf.mxu0
      %v4081 = vadd.f32 %v3937, %v4080
      %v4082 = vpop.f32.mrf.mxu0
      %4083 = vdwg.mxu0
      %v4084 = vmul.f32 %v4036, %v4036
      %v4085 = vmul.f32 %v4041, %v4041
      %v4086 = vmul.f32 %v4046, %v4046
      %v4087 = vmul.f32 %v4051, %v4051
      %v4088 = vmul.f32 %v4056, %v4056
      %v4089 = vmul.f32 %v4061, %v4061
      %v4090 = vmul.f32 %v4066, %v4066
      %v4091 = vmul.f32 %v4071, %v4071
      %v4092 = vmul.f32 %v4076, %v4076
      %v4093 = vmul.f32 %v4081, %v4081
      %v4094 = vmul.f32 %v4036, %v4084
      %v4095 = vmul.f32 %v4041, %v4085
      %v4096 = vmul.f32 %v4046, %v4086
      %v4097 = vmul.f32 %v4051, %v4087
      %v4098 = vmul.f32 %v4056, %v4088
      %v4099 = vmul.f32 %v4061, %v4089
      %v4100 = vmul.f32 %v4066, %v4090
      %v4101 = vmul.f32 %v4071, %v4091
      %v4102 = vmul.f32 %v4076, %v4092
      %v4103 = vmul.f32 %v4081, %v4093
      %v4104 = vmul.f32 %v4094, 0.044715
      %v4105 = vmul.f32 %v4095, 0.044715
      %v4106 = vmul.f32 %v4096, 0.044715
      %v4107 = vmul.f32 %v4097, 0.044715
      %v4108 = vmul.f32 %v4098, 0.044715
      %v4109 = vmul.f32 %v4099, 0.044715
      %v4110 = vmul.f32 %v4100, 0.044715
      %v4111 = vmul.f32 %v4101, 0.044715
      %v4112 = vmul.f32 %v4102, 0.044715
      %v4113 = vmul.f32 %v4103, 0.044715
      %v4114 = vadd.f32 %v4036, %v4104
      %v4115 = vadd.f32 %v4041, %v4105
      %v4116 = vadd.f32 %v4046, %v4106
      %v4117 = vadd.f32 %v4051, %v4107
      %v4118 = vadd.f32 %v4056, %v4108
      %v4119 = vadd.f32 %v4061, %v4109
      %v4120 = vadd.f32 %v4066, %v4110
      %v4121 = vadd.f32 %v4071, %v4111
      %v4122 = vadd.f32 %v4076, %v4112
      %v4123 = vadd.f32 %v4081, %v4113
      %v4124 = vmul.f32 %v4114, 0.7978846
      %v4125 = vmul.f32 %v4115, 0.7978846
      %v4126 = vmul.f32 %v4116, 0.7978846
      %v4127 = vmul.f32 %v4117, 0.7978846
      %v4128 = vmul.f32 %v4118, 0.7978846
      %v4129 = vmul.f32 %v4119, 0.7978846
      %v4130 = vmul.f32 %v4120, 0.7978846
      %v4131 = vmul.f32 %v4121, 0.7978846
      %v4132 = vmul.f32 %v4122, 0.7978846
      %v4133 = vmul.f32 %v4123, 0.7978846
      %v4134 = vtanh.pop %v4124
      %v4135 = vtanh.pop %v4125
      %v4136 = vtanh.pop %v4126
      %v4137 = vtanh.pop %v4127
      %v4138 = vtanh.pop %v4128
      %v4139 = vtanh.pop %v4129
      %v4140 = vtanh.pop %v4130
      %v4141 = vtanh.pop %v4131
      %v4142 = vtanh.pop %v4132
      %v4143 = vtanh.pop %v4133
      %v4144 = vadd.f32 %v4134, 1.0
      %v4145 = vadd.f32 %v4135, 1.0
      %v4146 = vadd.f32 %v4136, 1.0
      %v4147 = vadd.f32 %v4137, 1.0
      %v4148 = vadd.f32 %v4138, 1.0
      %v4149 = vadd.f32 %v4139, 1.0
      %v4150 = vadd.f32 %v4140, 1.0
      %v4151 = vadd.f32 %v4141, 1.0
      %v4152 = vadd.f32 %v4142, 1.0
      %v4153 = vadd.f32 %v4143, 1.0
      %v4154 = vmul.f32 %v4144, 0.5
      %v4155 = vmul.f32 %v4145, 0.5
      %v4156 = vmul.f32 %v4146, 0.5
      %v4157 = vmul.f32 %v4147, 0.5
      %v4158 = vmul.f32 %v4148, 0.5
      %v4159 = vmul.f32 %v4149, 0.5
      %v4160 = vmul.f32 %v4150, 0.5
      %v4161 = vmul.f32 %v4151, 0.5
      %v4162 = vmul.f32 %v4152, 0.5
      %v4163 = vmul.f32 %v4153, 0.5
      %v4164 = vmul.f32 %v4036, %v4154
      %v4165 = vmul.f32 %v4041, %v4155
      %v4166 = vmul.f32 %v4046, %v4156
      %v4167 = vmul.f32 %v4051, %v4157
      %v4168 = vmul.f32 %v4056, %v4158
      %v4169 = vmul.f32 %v4061, %v4159
      %v4170 = vmul.f32 %v4066, %v4160
      %v4171 = vmul.f32 %v4071, %v4161
      %v4172 = vmul.f32 %v4076, %v4162
      %v4173 = vmul.f32 %v4081, %v4163
      %v4174 = vld [vmem:[%s14] sm:$0xff]
      %v4175 = vld [vmem:[%s14 + $0x8] sm:$0xff]
      %v4176 = vld [vmem:[%s14 + $0x10] sm:$0xff]
      %v4177 = vld [vmem:[%s14 + $0x18] sm:$0xff]
      %v4178 = vld [vmem:[%s14 + $0x20] sm:$0xff]
      %v4179 = vld [vmem:[%s14 + $0x28] sm:$0xff]
      %v4180 = vld [vmem:[%s14 + $0x30] sm:$0xff]
      %v4181 = vld [vmem:[%s14 + $0x38] sm:$0xff]
      %v4182 = vld [vmem:[%s15] sm:$0x1]
      %v4184 = vlaneseq
      %v4185 = vshrl.u32 %v4184, 7
      %v4186 = vsub.s32 0, %v4185
      %v4187 = vrot.slane %v4182, %v4186
      %vm4189 = vcmask 523264
      %v4191 = vsel %vm4189, %v4164, 0
      %v4194 = vsel %vm4189, %v4165, 0
      %v4197 = vsel %vm4189, %v4166, 0
      %v4200 = vsel %vm4189, %v4167, 0
      %v4203 = vsel %vm4189, %v4168, 0
      %v4206 = vsel %vm4189, %v4169, 0
      %v4209 = vsel %vm4189, %v4170, 0
      %v4212 = vsel %vm4189, %v4171, 0
      %v4215 = vsel %vm4189, %v4172, 0
      %v4218 = vsel %vm4189, %v4173, 0
      %4220 = vmatprep.subr.mxu0 0.0
      %4221 = vmatpush1.msra.mxu0 0.0
      %4222 = vmatprep.subr.mxu0 0.0
      %4223 = vmatpush1.msra.mxu0 0.0
      %4224 = vmatprep.subr.mxu0 0.0
      %4225 = vmatpush1.msra.mxu0 0.0
      %4226 = vmatprep.subr.mxu0 0.0
      %4227 = vmatpush1.msra.mxu0 0.0
      %4228 = vmatprep.subr.mxu0 0.0
      %4229 = vmatpush1.msra.mxu0 0.0
      %4230 = vmatprep.subr.mxu0 0.0
      %4231 = vmatpush1.msra.mxu0 0.0
      %4232 = vmatprep.subr.mxu0 0.0
      %4233 = vmatpush1.msra.mxu0 0.0
      %4234 = vmatprep.subr.mxu0 0.0
      %4235 = vmatpush1.msra.mxu0 0.0
      %4236 = vmatprep.subr.mxu0 0.0
      %4237 = vmatpush1.msra.mxu0 %v4181
      %4238 = vmatprep.subr.mxu0 0.0
      %4239 = vmatpush1.msra.mxu0 %v4180
      %4240 = vmatprep.subr.mxu0 0.0
      %4241 = vmatpush1.msra.mxu0 %v4179
      %4242 = vmatprep.subr.mxu0 0.0
      %4243 = vmatpush1.msra.mxu0 %v4178
      %4244 = vmatprep.subr.mxu0 0.0
      %4245 = vmatpush1.msra.mxu0 %v4177
      %4246 = vmatprep.subr.mxu0 0.0
      %4247 = vmatpush1.msra.mxu0 %v4176
      %4248 = vmatprep.subr.mxu0 0.0
      %4249 = vmatpush1.msra.mxu0 %v4175
      %4250 = vmatprep.subr.mxu0 0.0
      %4251 = vmatpush1.msra.mxu0 %v4174
      %4252 = vmatprep.subr.mxu0 0.0
      %4253 = vmatpush2.msra.mxu0 0.0
      %4254 = vmatprep.subr.mxu0 0.0
      %4255 = vmatpush2.msra.mxu0 0.0
      %4256 = vmatprep.subr.mxu0 0.0
      %4257 = vmatpush2.msra.mxu0 0.0
      %4258 = vmatprep.subr.mxu0 0.0
      %4259 = vmatpush2.msra.mxu0 0.0
      %4260 = vmatprep.subr.mxu0 0.0
      %4261 = vmatpush2.msra.mxu0 0.0
      %4262 = vmatprep.subr.mxu0 0.0
      %4263 = vmatpush2.msra.mxu0 0.0
      %4264 = vmatprep.subr.mxu0 0.0
      %4265 = vmatpush2.msra.mxu0 0.0
      %4266 = vmatprep.subr.mxu0 0.0
      %4267 = vmatpush2.msra.mxu0 0.0
      %4268 = vmatprep.subr.mxu0 0.0
      %4269 = vmatpush2.msra.mxu0 0.0
      %4270 = vmatprep.subr.mxu0 0.0
      %4271 = vmatpush2.msra.mxu0 0.0
      %4272 = vmatprep.subr.mxu0 0.0
      %4273 = vmatpush2.msra.mxu0 0.0
      %4274 = vmatprep.subr.mxu0 0.0
      %4275 = vmatpush2.msra.mxu0 0.0
      %4276 = vmatprep.subr.mxu0 0.0
      %4277 = vmatpush2.msra.mxu0 0.0
      %4278 = vmatprep.subr.mxu0 0.0
      %4279 = vmatpush2.msra.mxu0 0.0
      %4280 = vmatprep.subr.mxu0 0.0
      %4281 = vmatpush2.msra.mxu0 0.0
      %4282 = vmatprep.subr.mxu0 0.0
      %4283 = vmatpush2.msra.mxu0 0.0
      %4284 = vmatprep.mubr.f32.mxu0 0.0
      %4285 = vmatmul.mubr.f32.gmra.mxu0 %v4191
      %v4286 = vpop.f32.mrf.mxu0
      %v4287 = vadd.f32 %v4187, %v4286
      %v4288 = vpop.f32.mrf.mxu0
      %4289 = vmatprep.mubr.f32.mxu0 0.0
      %4290 = vmatmul.mubr.f32.gmra.mxu0 %v4194
      %v4291 = vpop.f32.mrf.mxu0
      %v4292 = vadd.f32 %v4187, %v4291
      %v4293 = vpop.f32.mrf.mxu0
      %4294 = vmatprep.mubr.f32.mxu0 0.0
      %4295 = vmatmul.mubr.f32.gmra.mxu0 %v4197
      %v4296 = vpop.f32.mrf.mxu0
      %v4297 = vadd.f32 %v4187, %v4296
      %v4298 = vpop.f32.mrf.mxu0
      %4299 = vmatprep.mubr.f32.mxu0 0.0
      %4300 = vmatmul.mubr.f32.gmra.mxu0 %v4200
      %v4301 = vpop.f32.mrf.mxu0
      %v4302 = vadd.f32 %v4187, %v4301
      %v4303 = vpop.f32.mrf.mxu0
      %4304 = vmatprep.mubr.f32.mxu0 0.0
      %4305 = vmatmul.mubr.f32.gmra.mxu0 %v4203
      %v4306 = vpop.f32.mrf.mxu0
      %v4307 = vadd.f32 %v4187, %v4306
      %v4308 = vpop.f32.mrf.mxu0
      %4309 = vmatprep.mubr.f32.mxu0 0.0
      %4310 = vmatmul.mubr.f32.gmra.mxu0 %v4206
      %v4311 = vpop.f32.mrf.mxu0
      %v4312 = vadd.f32 %v4187, %v4311
      %v4313 = vpop.f32.mrf.mxu0
      %4314 = vmatprep.mubr.f32.mxu0 0.0
      %4315 = vmatmul.mubr.f32.gmra.mxu0 %v4209
      %v4316 = vpop.f32.mrf.mxu0
      %v4317 = vadd.f32 %v4187, %v4316
      %v4318 = vpop.f32.mrf.mxu0
      %4319 = vmatprep.mubr.f32.mxu0 0.0
      %4320 = vmatmul.mubr.f32.gmra.mxu0 %v4212
      %v4321 = vpop.f32.mrf.mxu0
      %v4322 = vadd.f32 %v4187, %v4321
      %v4323 = vpop.f32.mrf.mxu0
      %4324 = vmatprep.mubr.f32.mxu0 0.0
      %4325 = vmatmul.mubr.f32.gmra.mxu0 %v4215
      %v4326 = vpop.f32.mrf.mxu0
      %v4327 = vadd.f32 %v4187, %v4326
      %v4328 = vpop.f32.mrf.mxu0
      %4329 = vmatprep.mubr.f32.mxu0 0.0
      %4330 = vmatmul.mubr.f32.gmra.mxu0 %v4218
      %v4331 = vpop.f32.mrf.mxu0
      %v4332 = vadd.f32 %v4187, %v4331
      %v4333 = vpop.f32.mrf.mxu0
      %4334 = vdwg.mxu0
      %v4335 = vadd.f32 %v3754, %v4287
      %v4336 = vadd.f32 %v3755, %v4292
      %v4337 = vadd.f32 %v3756, %v4297
      %v4338 = vadd.f32 %v3757, %v4302
      %v4339 = vadd.f32 %v3758, %v4307
      %v4340 = vadd.f32 %v3759, %v4312
      %v4341 = vadd.f32 %v3760, %v4317
      %v4342 = vadd.f32 %v3761, %v4322
      %v4343 = vadd.f32 %v3762, %v4327
      %v4344 = vadd.f32 %v3763, %v4332
      %4345 = vst.msk [vmem:[%s664] sm:$0xff] %vm861, %v4335
      %4346 = vst.msk [vmem:[%s664 + $0x8] sm:$0xff] %vm861, %v4336
      %4347 = vst.msk [vmem:[%s664 + $0x10] sm:$0xff] %vm861, %v4337
      %4348 = vst.msk [vmem:[%s664 + $0x18] sm:$0xff] %vm861, %v4338
      %4349 = vst.msk [vmem:[%s664 + $0x20] sm:$0xff] %vm861, %v4339
      %4350 = vst.msk [vmem:[%s664 + $0x28] sm:$0xff] %vm861, %v4340
      %4351 = vst.msk [vmem:[%s664 + $0x30] sm:$0xff] %vm861, %v4341
      %4352 = vst.msk [vmem:[%s664 + $0x38] sm:$0xff] %vm861, %v4342
      %4353 = vst.msk [vmem:[%s664 + $0x40] sm:$0xff] %vm861, %v4343
      %4354 = vst.msk [vmem:[%s664 + $0x48] sm:$0xff] %vm861, %v4344
      %v4355 = vld [vmem:[%s16] sm:$0xff]
      %v4356 = vld [vmem:[%s16 + $0x8] sm:$0xff]
      %v4357 = vld [vmem:[%s16 + $0x10] sm:$0xff]
      %v4358 = vld [vmem:[%s16 + $0x18] sm:$0xff]
      %v4359 = vld [vmem:[%s17] sm:$0x1]
      %v4361 = vlaneseq
      %v4362 = vshrl.u32 %v4361, 7
      %v4363 = vsub.s32 0, %v4362
      %v4364 = vrot.slane %v4359, %v4363
      %v4367 = vsel %vm861, %v4337, 0
      %v4370 = vsel %vm861, %v4338, 0
      %v4373 = vsel %vm861, %v4339, 0
      %v4376 = vsel %vm861, %v4340, 0
      %v4379 = vsel %vm861, %v4341, 0
      %v4382 = vsel %vm861, %v4342, 0
      %v4385 = vsel %vm861, %v4343, 0
      %v4388 = vsel %vm861, %v4344, 0
      %4390 = vmatprep.subr.mxu0 0.0
      %4391 = vmatpush1.msra.mxu0 0.0
      %4392 = vmatprep.subr.mxu0 0.0
      %4393 = vmatpush1.msra.mxu0 0.0
      %4394 = vmatprep.subr.mxu0 0.0
      %4395 = vmatpush1.msra.mxu0 0.0
      %4396 = vmatprep.subr.mxu0 0.0
      %4397 = vmatpush1.msra.mxu0 0.0
      %4398 = vmatprep.subr.mxu0 0.0
      %4399 = vmatpush1.msra.mxu0 0.0
      %4400 = vmatprep.subr.mxu0 0.0
      %4401 = vmatpush1.msra.mxu0 0.0
      %4402 = vmatprep.subr.mxu0 0.0
      %4403 = vmatpush1.msra.mxu0 0.0
      %4404 = vmatprep.subr.mxu0 0.0
      %4405 = vmatpush1.msra.mxu0 0.0
      %4406 = vmatprep.subr.mxu0 0.0
      %4407 = vmatpush1.msra.mxu0 0.0
      %4408 = vmatprep.subr.mxu0 0.0
      %4409 = vmatpush1.msra.mxu0 0.0
      %4410 = vmatprep.subr.mxu0 0.0
      %4411 = vmatpush1.msra.mxu0 0.0
      %4412 = vmatprep.subr.mxu0 0.0
      %4413 = vmatpush1.msra.mxu0 0.0
      %4414 = vmatprep.subr.mxu0 0.0
      %4415 = vmatpush1.msra.mxu0 %v4358
      %4416 = vmatprep.subr.mxu0 0.0
      %4417 = vmatpush1.msra.mxu0 %v4357
      %4418 = vmatprep.subr.mxu0 0.0
      %4419 = vmatpush1.msra.mxu0 %v4356
      %4420 = vmatprep.subr.mxu0 0.0
      %4421 = vmatpush1.msra.mxu0 %v4355
      %4422 = vmatprep.subr.mxu0 0.0
      %4423 = vmatpush2.msra.mxu0 0.0
      %4424 = vmatprep.subr.mxu0 0.0
      %4425 = vmatpush2.msra.mxu0 0.0
      %4426 = vmatprep.subr.mxu0 0.0
      %4427 = vmatpush2.msra.mxu0 0.0
      %4428 = vmatprep.subr.mxu0 0.0
      %4429 = vmatpush2.msra.mxu0 0.0
      %4430 = vmatprep.subr.mxu0 0.0
      %4431 = vmatpush2.msra.mxu0 0.0
      %4432 = vmatprep.subr.mxu0 0.0
      %4433 = vmatpush2.msra.mxu0 0.0
      %4434 = vmatprep.subr.mxu0 0.0
      %4435 = vmatpush2.msra.mxu0 0.0
      %4436 = vmatprep.subr.mxu0 0.0
      %4437 = vmatpush2.msra.mxu0 0.0
      %4438 = vmatprep.subr.mxu0 0.0
      %4439 = vmatpush2.msra.mxu0 0.0
      %4440 = vmatprep.subr.mxu0 0.0
      %4441 = vmatpush2.msra.mxu0 0.0
      %4442 = vmatprep.subr.mxu0 0.0
      %4443 = vmatpush2.msra.mxu0 0.0
      %4444 = vmatprep.subr.mxu0 0.0
      %4445 = vmatpush2.msra.mxu0 0.0
      %4446 = vmatprep.subr.mxu0 0.0
      %4447 = vmatpush2.msra.mxu0 0.0
      %4448 = vmatprep.subr.mxu0 0.0
      %4449 = vmatpush2.msra.mxu0 0.0
      %4450 = vmatprep.subr.mxu0 0.0
      %4451 = vmatpush2.msra.mxu0 0.0
      %4452 = vmatprep.subr.mxu0 0.0
      %4453 = vmatpush2.msra.mxu0 0.0
      %4454 = vmatprep.mubr.f32.mxu0 0.0
      %4455 = vmatmul.mubr.f32.gmra.mxu0 %v4367
      %v4456 = vpop.f32.mrf.mxu0
      %v4457 = vadd.f32 %v4364, %v4456
      %v4458 = vpop.f32.mrf.mxu0
      %4459 = vmatprep.mubr.f32.mxu0 0.0
      %4460 = vmatmul.mubr.f32.gmra.mxu0 %v4370
      %v4461 = vpop.f32.mrf.mxu0
      %v4462 = vadd.f32 %v4364, %v4461
      %v4463 = vpop.f32.mrf.mxu0
      %4464 = vmatprep.mubr.f32.mxu0 0.0
      %4465 = vmatmul.mubr.f32.gmra.mxu0 %v4373
      %v4466 = vpop.f32.mrf.mxu0
      %v4467 = vadd.f32 %v4364, %v4466
      %v4468 = vpop.f32.mrf.mxu0
      %4469 = vmatprep.mubr.f32.mxu0 0.0
      %4470 = vmatmul.mubr.f32.gmra.mxu0 %v4376
      %v4471 = vpop.f32.mrf.mxu0
      %v4472 = vadd.f32 %v4364, %v4471
      %v4473 = vpop.f32.mrf.mxu0
      %4474 = vmatprep.mubr.f32.mxu0 0.0
      %4475 = vmatmul.mubr.f32.gmra.mxu0 %v4379
      %v4476 = vpop.f32.mrf.mxu0
      %v4477 = vadd.f32 %v4364, %v4476
      %v4478 = vpop.f32.mrf.mxu0
      %4479 = vmatprep.mubr.f32.mxu0 0.0
      %4480 = vmatmul.mubr.f32.gmra.mxu0 %v4382
      %v4481 = vpop.f32.mrf.mxu0
      %v4482 = vadd.f32 %v4364, %v4481
      %v4483 = vpop.f32.mrf.mxu0
      %4484 = vmatprep.mubr.f32.mxu0 0.0
      %4485 = vmatmul.mubr.f32.gmra.mxu0 %v4385
      %v4486 = vpop.f32.mrf.mxu0
      %v4487 = vadd.f32 %v4364, %v4486
      %v4488 = vpop.f32.mrf.mxu0
      %4489 = vmatprep.mubr.f32.mxu0 0.0
      %4490 = vmatmul.mubr.f32.gmra.mxu0 %v4388
      %v4491 = vpop.f32.mrf.mxu0
      %v4492 = vadd.f32 %v4364, %v4491
      %v4493 = vpop.f32.mrf.mxu0
      %4494 = vdwg.mxu0
      %v4495 = vmax.f32 %v4457, 0.0
      %v4496 = vmax.f32 %v4462, 0.0
      %v4497 = vmax.f32 %v4467, 0.0
      %v4498 = vmax.f32 %v4472, 0.0
      %v4499 = vmax.f32 %v4477, 0.0
      %v4500 = vmax.f32 %v4482, 0.0
      %v4501 = vmax.f32 %v4487, 0.0
      %v4502 = vmax.f32 %v4492, 0.0
      %v4503 = vld [vmem:[%s18] sm:$0xff]
      %v4504 = vld [vmem:[%s18 + $0x8] sm:$0xff]
      %v4505 = vld [vmem:[%s18 + $0x10] sm:$0xff]
      %v4506 = vld [vmem:[%s18 + $0x18] sm:$0xff]
      %v4507 = vld [vmem:[%s18 + $0x20] sm:$0xff]
      %v4508 = vld [vmem:[%s18 + $0x28] sm:$0xff]
      %v4509 = vld [vmem:[%s19] sm:$0x1]
      %v4511 = vlaneseq
      %v4512 = vshrl.u32 %v4511, 7
      %v4513 = vsub.s32 0, %v4512
      %v4514 = vrot.slane %v4509, %v4513
      %v4517 = vsel %vm693, %v4495, 0
      %v4520 = vsel %vm693, %v4496, 0
      %v4523 = vsel %vm693, %v4497, 0
      %v4526 = vsel %vm693, %v4498, 0
      %v4529 = vsel %vm693, %v4499, 0
      %v4532 = vsel %vm693, %v4500, 0
      %v4535 = vsel %vm693, %v4501, 0
      %v4538 = vsel %vm693, %v4502, 0
      %4540 = vmatprep.subr.mxu0 0.0
      %4541 = vmatpush1.msra.mxu0 0.0
      %4542 = vmatprep.subr.mxu0 0.0
      %4543 = vmatpush1.msra.mxu0 0.0
      %4544 = vmatprep.subr.mxu0 0.0
      %4545 = vmatpush1.msra.mxu0 0.0
      %4546 = vmatprep.subr.mxu0 0.0
      %4547 = vmatpush1.msra.mxu0 0.0
      %4548 = vmatprep.subr.mxu0 0.0
      %4549 = vmatpush1.msra.mxu0 0.0
      %4550 = vmatprep.subr.mxu0 0.0
      %4551 = vmatpush1.msra.mxu0 0.0
      %4552 = vmatprep.subr.mxu0 0.0
      %4553 = vmatpush1.msra.mxu0 0.0
      %4554 = vmatprep.subr.mxu0 0.0
      %4555 = vmatpush1.msra.mxu0 0.0
      %4556 = vmatprep.subr.mxu0 0.0
      %4557 = vmatpush1.msra.mxu0 0.0
      %4558 = vmatprep.subr.mxu0 0.0
      %4559 = vmatpush1.msra.mxu0 0.0
      %4560 = vmatprep.subr.mxu0 0.0
      %4561 = vmatpush1.msra.mxu0 %v4508
      %4562 = vmatprep.subr.mxu0 0.0
      %4563 = vmatpush1.msra.mxu0 %v4507
      %4564 = vmatprep.subr.mxu0 0.0
      %4565 = vmatpush1.msra.mxu0 %v4506
      %4566 = vmatprep.subr.mxu0 0.0
      %4567 = vmatpush1.msra.mxu0 %v4505
      %4568 = vmatprep.subr.mxu0 0.0
      %4569 = vmatpush1.msra.mxu0 %v4504
      %4570 = vmatprep.subr.mxu0 0.0
      %4571 = vmatpush1.msra.mxu0 %v4503
      %4572 = vmatprep.subr.mxu0 0.0
      %4573 = vmatpush2.msra.mxu0 0.0
      %4574 = vmatprep.subr.mxu0 0.0
      %4575 = vmatpush2.msra.mxu0 0.0
      %4576 = vmatprep.subr.mxu0 0.0
      %4577 = vmatpush2.msra.mxu0 0.0
      %4578 = vmatprep.subr.mxu0 0.0
      %4579 = vmatpush2.msra.mxu0 0.0
      %4580 = vmatprep.subr.mxu0 0.0
      %4581 = vmatpush2.msra.mxu0 0.0
      %4582 = vmatprep.subr.mxu0 0.0
      %4583 = vmatpush2.msra.mxu0 0.0
      %4584 = vmatprep.subr.mxu0 0.0
      %4585 = vmatpush2.msra.mxu0 0.0
      %4586 = vmatprep.subr.mxu0 0.0
      %4587 = vmatpush2.msra.mxu0 0.0
      %4588 = vmatprep.subr.mxu0 0.0
      %4589 = vmatpush2.msra.mxu0 0.0
      %4590 = vmatprep.subr.mxu0 0.0
      %4591 = vmatpush2.msra.mxu0 0.0
      %4592 = vmatprep.subr.mxu0 0.0
      %4593 = vmatpush2.msra.mxu0 0.0
      %4594 = vmatprep.subr.mxu0 0.0
      %4595 = vmatpush2.msra.mxu0 0.0
      %4596 = vmatprep.subr.mxu0 0.0
      %4597 = vmatpush2.msra.mxu0 0.0
      %4598 = vmatprep.subr.mxu0 0.0
      %4599 = vmatpush2.msra.mxu0 0.0
      %4600 = vmatprep.subr.mxu0 0.0
      %4601 = vmatpush2.msra.mxu0 0.0
      %4602 = vmatprep.subr.mxu0 0.0
      %4603 = vmatpush2.msra.mxu0 0.0
      %4604 = vmatprep.mubr.f32.mxu0 0.0
      %4605 = vmatmul.mubr.f32.gmra.mxu0 %v4517
      %v4606 = vpop.f32.mrf.mxu0
      %v4607 = vadd.f32 %v4514, %v4606
      %v4608 = vpop.f32.mrf.mxu0
      %4609 = vmatprep.mubr.f32.mxu0 0.0
      %4610 = vmatmul.mubr.f32.gmra.mxu0 %v4520
      %v4611 = vpop.f32.mrf.mxu0
      %v4612 = vadd.f32 %v4514, %v4611
      %v4613 = vpop.f32.mrf.mxu0
      %4614 = vmatprep.mubr.f32.mxu0 0.0
      %4615 = vmatmul.mubr.f32.gmra.mxu0 %v4523
      %v4616 = vpop.f32.mrf.mxu0
      %v4617 = vadd.f32 %v4514, %v4616
      %v4618 = vpop.f32.mrf.mxu0
      %4619 = vmatprep.mubr.f32.mxu0 0.0
      %4620 = vmatmul.mubr.f32.gmra.mxu0 %v4526
      %v4621 = vpop.f32.mrf.mxu0
      %v4622 = vadd.f32 %v4514, %v4621
      %v4623 = vpop.f32.mrf.mxu0
      %4624 = vmatprep.mubr.f32.mxu0 0.0
      %4625 = vmatmul.mubr.f32.gmra.mxu0 %v4529
      %v4626 = vpop.f32.mrf.mxu0
      %v4627 = vadd.f32 %v4514, %v4626
      %v4628 = vpop.f32.mrf.mxu0
      %4629 = vmatprep.mubr.f32.mxu0 0.0
      %4630 = vmatmul.mubr.f32.gmra.mxu0 %v4532
      %v4631 = vpop.f32.mrf.mxu0
      %v4632 = vadd.f32 %v4514, %v4631
      %v4633 = vpop.f32.mrf.mxu0
      %4634 = vmatprep.mubr.f32.mxu0 0.0
      %4635 = vmatmul.mubr.f32.gmra.mxu0 %v4535
      %v4636 = vpop.f32.mrf.mxu0
      %v4637 = vadd.f32 %v4514, %v4636
      %v4638 = vpop.f32.mrf.mxu0
      %4639 = vmatprep.mubr.f32.mxu0 0.0
      %4640 = vmatmul.mubr.f32.gmra.mxu0 %v4538
      %v4641 = vpop.f32.mrf.mxu0
      %v4642 = vadd.f32 %v4514, %v4641
      %v4643 = vpop.f32.mrf.mxu0
      %4644 = vdwg.mxu0
      %v4645 = vlaneseq
      %v4646 = vand.u32 %v4645, 127
      %vm4647 = vcmp.lt.s32.totalorder %v4646, 3
      %v4648 = vxor.u32 %v4607, 2147483648
      %v4649 = vxor.u32 %v4612, 2147483648
      %v4650 = vxor.u32 %v4617, 2147483648
      %v4651 = vxor.u32 %v4622, 2147483648
      %v4652 = vxor.u32 %v4627, 2147483648
      %v4653 = vxor.u32 %v4632, 2147483648
      %v4654 = vxor.u32 %v4637, 2147483648
      %v4655 = vxor.u32 %v4642, 2147483648
      %v4656 = vmul.f32 %v4648, 1.442695
      %v4657 = vpow.pop %v4656
      %v4658 = vmul.f32 %v4649, 1.442695
      %v4659 = vpow.pop %v4658
      %v4660 = vmul.f32 %v4650, 1.442695
      %v4661 = vpow.pop %v4660
      %v4662 = vmul.f32 %v4651, 1.442695
      %v4663 = vpow.pop %v4662
      %v4664 = vmul.f32 %v4652, 1.442695
      %v4665 = vpow.pop %v4664
      %v4666 = vmul.f32 %v4653, 1.442695
      %v4667 = vpow.pop %v4666
      %v4668 = vmul.f32 %v4654, 1.442695
      %v4669 = vpow.pop %v4668
      %v4670 = vmul.f32 %v4655, 1.442695
      %v4671 = vpow.pop %v4670
      %v4672 = vadd.f32 %v4657, 1.0
      %v4673 = vadd.f32 %v4659, 1.0
      %v4674 = vadd.f32 %v4661, 1.0
      %v4675 = vadd.f32 %v4663, 1.0
      %v4676 = vadd.f32 %v4665, 1.0
      %v4677 = vadd.f32 %v4667, 1.0
      %v4678 = vadd.f32 %v4669, 1.0
      %v4679 = vadd.f32 %v4671, 1.0
      %v4680 = vrcp.pop %v4672
      %v4681 = vmul.f32 1.0, %v4680
      %v4682 = vrcp.pop %v4673
      %v4683 = vmul.f32 1.0, %v4682
      %v4684 = vrcp.pop %v4674
      %v4685 = vmul.f32 1.0, %v4684
      %v4686 = vrcp.pop %v4675
      %v4687 = vmul.f32 1.0, %v4686
      %v4688 = vrcp.pop %v4676
      %v4689 = vmul.f32 1.0, %v4688
      %v4690 = vrcp.pop %v4677
      %v4691 = vmul.f32 1.0, %v4690
      %v4692 = vrcp.pop %v4678
      %v4693 = vmul.f32 1.0, %v4692
      %v4694 = vrcp.pop %v4679
      %v4695 = vmul.f32 1.0, %v4694
      %v4696 = vsel %vm4647, %v4681, %v4607
      %v4697 = vsel %vm4647, %v4683, %v4612
      %v4698 = vsel %vm4647, %v4685, %v4617
      %v4699 = vsel %vm4647, %v4687, %v4622
      %v4700 = vsel %vm4647, %v4689, %v4627
      %v4701 = vsel %vm4647, %v4691, %v4632
      %v4702 = vsel %vm4647, %v4693, %v4637
      %v4703 = vsel %vm4647, %v4695, %v4642
      %vm4704 = vcmask 39936
      %4705 = vst.msk [vmem:[%s669] sm:$0xff] %vm4704, %v4696
      %4706 = vst.msk [vmem:[%s669 + $0x8] sm:$0xff] %vm4704, %v4697
      %4707 = vst.msk [vmem:[%s669 + $0x10] sm:$0xff] %vm4704, %v4698
      %4708 = vst.msk [vmem:[%s669 + $0x18] sm:$0xff] %vm4704, %v4699
      %4709 = vst.msk [vmem:[%s669 + $0x20] sm:$0xff] %vm4704, %v4700
      %4710 = vst.msk [vmem:[%s669 + $0x28] sm:$0xff] %vm4704, %v4701
      %4711 = vst.msk [vmem:[%s669 + $0x30] sm:$0xff] %vm4704, %v4702
      %4712 = vst.msk [vmem:[%s669 + $0x38] sm:$0xff] %vm4704, %v4703
      %p4713 = scmp.lt.s32.totalorder %s33, 1
      %s4714 = scalar_select %p4713, %s33, 1
      %s4715 = smul.addr %s4714, 10
      %s4716 = smul.addr %s4715, 8
      %s4717 = scalar_lea.vmem %s20, %s4716
      %p4718 = scmp.lt.s32.totalorder %s33, 1
      %s4719 = scalar_select %p4718, %s33, 1
      %s4720 = smul.addr %s4719, 8
      %s4721 = smul.addr %s4720, 8
      %s4722 = scalar_lea.vmem %s21, %s4721
      // Predicated region
      $region101: #{dgtrack_forward.1} parent=99 // pred_check
        %p4723 = pneg %p476
      $region102: #{dgtrack_forward.1} parent=99 // pred_check_branch
        %4725 = sbr.rel (%p4723) target = $region104
      $region103: #{dgtrack_forward.1} parent=99 // pred_region
        _
      $region104: #{dgtrack_forward.1} parent=99 // pred_fallthru
        _
      // Predicated region
      $region105: #{dgtrack_forward.1} parent=99 // pred_check
        %p4726 = pneg %p502
      $region106: #{dgtrack_forward.1} parent=99 // pred_check_branch
        %4728 = sbr.rel (%p4726) target = $region108
      $region107: #{dgtrack_forward.1} parent=99 // pred_region
        _
      $region108: #{dgtrack_forward.1} parent=99 // pred_fallthru
        _
    $region100: #{dgtrack_forward.1} parent=5 // pred_fallthru
      _
    %p4729 = scmp.le.s32.totalorder 2, %s28
    // Predicated region
    $region109: #{dgtrack_forward.1} parent=5 // pred_check
      %p4730 = pneg %p4729
    $region110: #{dgtrack_forward.1} parent=5 // pred_check_branch
      %4732 = sbr.rel (%p4730) target = $region112
    $region111: #{dgtrack_forward.1} parent=5 // pred_region
      %s4733 = ssub.s32 %s28, 2
      // Predicated region
      $region113: #{dgtrack_forward.1} parent=111 // pred_check
        %p4734 = pneg %p482
      $region114: #{dgtrack_forward.1} parent=111 // pred_check_branch
        %4736 = sbr.rel (%p4734) target = $region116
      $region115: #{dgtrack_forward.1} parent=111 // pred_region
        %p4737 = scmp.lt.s32.totalorder %s34, 1
        %s4738 = scalar_select %p4737, %s34, 1
        %s4739 = smul.addr %s4738, 10
        %s4740 = smul.addr %s4739, 8
        %s4741 = scalar_lea.vmem %s20, %s4740
      $region116: #{dgtrack_forward.1} parent=111 // pred_fallthru
        _
      // Predicated region
      $region117: #{dgtrack_forward.1} parent=111 // pred_check
        %p4742 = pneg %p508
      $region118: #{dgtrack_forward.1} parent=111 // pred_check_branch
        %4744 = sbr.rel (%p4742) target = $region120
      $region119: #{dgtrack_forward.1} parent=111 // pred_region
        %p4745 = scmp.lt.s32.totalorder %s34, 1
        %s4746 = scalar_select %p4745, %s34, 1
        %s4747 = smul.addr %s4746, 8
        %s4748 = smul.addr %s4747, 8
        %s4749 = scalar_lea.vmem %s21, %s4748
      $region120: #{dgtrack_forward.1} parent=111 // pred_fallthru
        _
    $region112: #{dgtrack_forward.1} parent=5 // pred_fallthru
      _
  $region6: #{dgtrack_forward.1} parent=0 // loop_footer
    %s32 = sadd.s32 1, %s28
  $region7: #{dgtrack_forward.1} parent=0 // loop_footer_branch
    %27 = sbr.rel target = $region3
  $region8: #{dgtrack_forward.1} parent=0 // loop_exit
    _

</llo_original>
